<compile_context>
chip_gen: v7x
topology: tpu7x:2x2x1
jax: 0.10.0
libtpu: 0.0.40
codegen_flags: <defaults>
</compile_context>

<pallas_src>
import functools
import math

import jax
import jax.numpy as jnp
from jax import lax
from jax.experimental import pallas as pl
from jax.experimental.pallas import tpu as pltpu

_VMEM_LIMIT = 32 * 1024 * 1024   # explicit scoped-VMEM budget for every kernel
_LN_EPS = 1e-12


# ----------------------------------------------------------------------------
# helpers
# ----------------------------------------------------------------------------
def _round_up(x, m):
    return ((x + m - 1) // m) * m


def _plan(dim, pref):
    """(padded_dim, block) for one axis.

    Small dims -> one full-extent block (exempt from the (8,128) rule, zero
    padding).  Large dims -> `pref`-sized tiles (pref is a multiple of 128 /
    16 so bf16 sublane packing and lane alignment hold)."""
    if dim <= pref:
        return dim, dim
    return _round_up(dim, pref), pref


def _pad2(x, r, c):
    R, C = x.shape
    if (R, C) == (r, c):
        return x
    return jnp.pad(x, ((0, r - R), (0, c - C)))


def _apply_act(y, act):
    if act == "tanh":
        return jnp.tanh(y)
    if act == "sigmoid":
        return jax.nn.sigmoid(y)
    if act == "gelu":
        # TODO(synk): HF BERT uses erf-GELU; tanh approximation (~1e-3 drift).
        return 0.5 * y * (1.0 + jnp.tanh(
            0.7978845608028654 * (y + 0.044715 * y * y * y)))
    return y


def _ln_math(x, g, b, eps):
    mu = jnp.mean(x, axis=-1, keepdims=True)
    var = jnp.mean((x - mu) * (x - mu), axis=-1, keepdims=True)
    return (x - mu) * lax.rsqrt(var + eps) * g + b


# ----------------------------------------------------------------------------
# kernels
# ----------------------------------------------------------------------------
def _linear_kernel(x_ref, w_ref, b_ref, o_ref, acc_ref, *, act):
    """Tiled y = act(x @ w + b)."""
    @pl.when(pl.program_id(2) == 0)
    def _():
        acc_ref[...] = jnp.zeros_like(acc_ref)

    acc_ref[...] += jnp.dot(x_ref[...], w_ref[...],
                            preferred_element_type=jnp.float32)

    @pl.when(pl.program_id(2) == pl.num_programs(2) - 1)
    def _():
        y = _apply_act(acc_ref[...] + b_ref[...], act)
        o_ref[...] = y.astype(o_ref.dtype)


def _linear_ln_kernel(x_ref, w_ref, b_ref, r_ref, g_ref, bb_ref, o_ref, acc_ref,
                      *, eps):
    """Tiled y = LayerNorm(x @ w + b + residual); single N block (full row)."""
    @pl.when(pl.program_id(2) == 0)
    def _():
        acc_ref[...] = jnp.zeros_like(acc_ref)

    acc_ref[...] += jnp.dot(x_ref[...], w_ref[...],
                            preferred_element_type=jnp.float32)

    @pl.when(pl.program_id(2) == pl.num_programs(2) - 1)
    def _():
        y = acc_ref[...] + b_ref[...] + r_ref[...].astype(jnp.float32)
        o_ref[...] = _ln_math(y, g_ref[...], bb_ref[...], eps).astype(o_ref.dtype)


def _layernorm_kernel(x_ref, g_ref, b_ref, o_ref, *, eps):
    x = x_ref[...].astype(jnp.float32)
    o_ref[...] = _ln_math(x, g_ref[...], b_ref[...], eps).astype(o_ref.dtype)


def _flash_attention_kernel(q_ref, k_ref, v_ref, mask_ref, o_ref,
                            m_sc, l_sc, acc_sc, *, nH, d, scale):
    """Online-softmax attention, all heads of one batch element, KV tiled.

    q_ref: [Sq, nH, d] bf16   k_ref/v_ref: [tkv, nH, d] bf16
    mask_ref: [1, tkv] f32 (1=keep, 0=pad)   o_ref: [Sq, nH*d] (lane-dense).
    """
    kv = pl.program_id(1)

    @pl.when(kv == 0)
    def _():
        m_sc[...] = jnp.full(m_sc.shape, -1e30, jnp.float32)
        l_sc[...] = jnp.zeros_like(l_sc)
        acc_sc[...] = jnp.zeros_like(acc_sc)

    bias = (1.0 - mask_ref[...].astype(jnp.float32)) * -1e9      # [1, tkv]

    for h in range(nH):                                          # static unroll
        q_h = q_ref[:, h, :]                                     # [Sq, d]
        k_h = k_ref[:, h, :]                                     # [tkv, d]
        v_h = v_ref[:, h, :]
        s = jnp.dot(q_h, k_h.T, preferred_element_type=jnp.float32) * scale
        s = s + bias                                             # [Sq, tkv]
        m_prev = m_sc[h]                                         # [Sq, 1]
        m_new = jnp.maximum(m_prev, jnp.max(s, axis=-1, keepdims=True))
        alpha = jnp.exp(m_prev - m_new)
        p = jnp.exp(s - m_new)
        l_sc[h] = alpha * l_sc[h] + jnp.sum(p, axis=-1, keepdims=True)
        acc_sc[h] = alpha * acc_sc[h] + jnp.dot(
            p.astype(v_h.dtype), v_h, preferred_element_type=jnp.float32)
        m_sc[h] = m_new

    @pl.when(kv == pl.num_programs(1) - 1)
    def _():
        for h in range(nH):
            ctx_h = acc_sc[h] * pl.reciprocal(l_sc[h], approx=True)  # [Sq, d]
            o_ref[:, h * d:(h + 1) * d] = ctx_h.astype(o_ref.dtype)


def _head_kernel(x_ref, wp_ref, bp_ref, wc_ref, bc_ref, o_ref):
    """Fused pooler + classifier: sigmoid(tanh(x@Wp+bp) @ Wc + bc)."""
    pooled = jnp.tanh(jnp.dot(x_ref[...], wp_ref[...],
                              preferred_element_type=jnp.float32) + bp_ref[...])
    logits = jnp.dot(pooled.astype(wc_ref.dtype), wc_ref[...],
                     preferred_element_type=jnp.float32) + bc_ref[...]
    o_ref[...] = jax.nn.sigmoid(logits).astype(o_ref.dtype)


# ----------------------------------------------------------------------------
# pallas_call wrappers
# ----------------------------------------------------------------------------
def pallas_linear(x, w, b, act="none", residual=None, ln_gamma=None, ln_beta=None,
                  out_dtype=jnp.bfloat16, tm=256, tn=256, tk=4096):
    """y = act(x @ w + b)  or  LayerNorm(x @ w + b + residual) when residual given.

    x:[M,K] bf16, w:[K,N] bf16 (pre-transposed at build time), b:[1,N] f32."""
    M, K = x.shape
    Kw, N = w.shape
    assert K == Kw
    fuse_ln = residual is not None

    Mp, bm = _plan(M, tm)
    Kp, bk = _plan(K, tk)          # full-K for all standard BERT dims
    if fuse_ln:
        Np, bn = N, N              # single N block -> full row resident for LN
    else:
        Np, bn = _plan(N, tn)

    # Padding below is a no-op for the demo and for standard BERT dims
    # (weights are built unpadded; per-forward pads only trigger for odd sizes).
    x = _pad2(x, Mp, Kp)
    w = _pad2(w, Kp, Np)
    b = _pad2(b, 1, Np)

    x_spec = pl.BlockSpec((bm, bk), lambda i, j, k: (i, k))
    w_spec = pl.BlockSpec((bk, bn), lambda i, j, k: (k, j))
    vec_spec = pl.BlockSpec((1, bn), lambda i, j, k: (0, j))
    o_spec = pl.BlockSpec((bm, bn), lambda i, j, k: (i, j))

    if fuse_ln:
        kernel = functools.partial(_linear_ln_kernel, eps=_LN_EPS)
        in_specs = [x_spec, w_spec, vec_spec,
                    pl.BlockSpec((bm, bn), lambda i, j, k: (i, j)),
                    vec_spec, vec_spec]
        args = (x, w, b, _pad2(residual, Mp, Np), ln_gamma, ln_beta)
    else:
        kernel = functools.partial(_linear_kernel, act=act)
        in_specs = [x_spec, w_spec, vec_spec]
        args = (x, w, b)

    out = pl.pallas_call(
        kernel,
        out_shape=jax.ShapeDtypeStruct((Mp, Np), out_dtype),
        grid=(Mp // bm, Np // bn, Kp // bk),
        in_specs=in_specs,
        out_specs=o_spec,
        scratch_shapes=[pltpu.VMEM((bm, bn), jnp.float32)],
        compiler_params=pltpu.CompilerParams(
            dimension_semantics=("parallel", "parallel", "arbitrary"),
            vmem_limit_bytes=_VMEM_LIMIT),
    )(*args)
    if (Mp, Np) != (M, N):
        out = out[:M, :N]
    return out


def pallas_layernorm(x, gamma, beta, tm=512):
    """Row-wise LayerNorm over [M, H] (used once, for the embeddings)."""
    M, H = x.shape
    Mp, bm = _plan(M, tm)
    x = _pad2(x, Mp, H)
    row_spec = pl.BlockSpec((bm, H), lambda i: (i, 0))
    vec_spec = pl.BlockSpec((1, H), lambda i: (0, 0))
    out = pl.pallas_call(
        functools.partial(_layernorm_kernel, eps=_LN_EPS),
        out_shape=jax.ShapeDtypeStruct((Mp, H), jnp.bfloat16),
        grid=(Mp // bm,),
        in_specs=[row_spec, vec_spec, vec_spec],
        out_specs=row_spec,
        compiler_params=pltpu.CompilerParams(
            dimension_semantics=("parallel",),
            vmem_limit_bytes=_VMEM_LIMIT),
    )(x, gamma, beta)
    return out[:M] if Mp != M else out


def pallas_attention(qkv, mask, nH, d, scale, tkv=256):
    """qkv: [B, S, 3, nH, d] bf16 (a free reshape of the QKV projection),
    mask: [B, 1, S] f32 (1=keep, 0=pad).  Returns context [B, S, nH*d] bf16,
    lane-dense and seq-major (no head-merge transpose needed afterwards)."""
    B, S = qkv.shape[0], qkv.shape[1]
    H = nH * d
    Sp, bkv = _plan(S, tkv)
    if Sp != S:
        qkv = jnp.pad(qkv, ((0, 0), (0, Sp - S), (0, 0), (0, 0), (0, 0)))
        mask = jnp.pad(mask, ((0, 0), (0, 0), (0, Sp - S)))   # padded keys masked out

    q_spec = pl.BlockSpec((None, Sp, None, nH, d), lambda b, kv: (b, 0, 0, 0, 0))
    k_spec = pl.BlockSpec((None, bkv, None, nH, d), lambda b, kv: (b, kv, 1, 0, 0))
    v_spec = pl.BlockSpec((None, bkv, None, nH, d), lambda b, kv: (b, kv, 2, 0, 0))
    m_spec = pl.BlockSpec((None, 1, bkv), lambda b, kv: (b, 0, kv))
    o_spec = pl.BlockSpec((None, Sp, H), lambda b, kv: (b, 0, 0))

    out = pl.pallas_call(
        functools.partial(_flash_attention_kernel, nH=nH, d=d, scale=scale),
        out_shape=jax.ShapeDtypeStruct((B, Sp, H), jnp.bfloat16),
        grid=(B, Sp // bkv),
        in_specs=[q_spec, k_spec, v_spec, m_spec],
        out_specs=o_spec,
        scratch_shapes=[pltpu.VMEM((nH, Sp, 1), jnp.float32),   # m
                        pltpu.VMEM((nH, Sp, 1), jnp.float32),   # l
                        pltpu.VMEM((nH, Sp, d), jnp.float32)],  # acc
        compiler_params=pltpu.CompilerParams(
            dimension_semantics=("parallel", "arbitrary"),
            vmem_limit_bytes=_VMEM_LIMIT),
    )(qkv, qkv, qkv, mask)
    return out if Sp == S else out[:, :S]


def pallas_head(x_cls, wp, bp, wc, bc, num_labels):
    """Fused pooler(tanh) + classifier(sigmoid); classifier pre-padded to 128 lanes."""
    B, H = x_cls.shape
    Lp = wc.shape[1]
    full = lambda r, c: pl.BlockSpec((r, c), lambda i: (0, 0))
    out = pl.pallas_call(
        _head_kernel,
        out_shape=jax.ShapeDtypeStruct((B, Lp), jnp.float32),
        grid=(1,),
        in_specs=[full(B, H), full(H, H), full(1, H), full(H, Lp), full(1, Lp)],
        out_specs=full(B, Lp),
        compiler_params=pltpu.CompilerParams(
            dimension_semantics=("arbitrary",),
            vmem_limit_bytes=_VMEM_LIMIT),
    )(x_cls, wp, bp, wc, bc)
    return out[:, :num_labels]


# ----------------------------------------------------------------------------
# Parameter construction (deterministic, synthetic — no checkpoint loading)
# ----------------------------------------------------------------------------
def _dense(key, fan_in, fan_out):
    # PyTorch Linear stores W as [out, in]; pre-transpose ONCE here to [in, out]
    # (bf16 for the MXU); bias stays f32 for the epilogue add.
    w = jax.random.normal(key, (fan_out, fan_in), jnp.float32) * 0.02
    return w.T.astype(jnp.bfloat16), jnp.zeros((1, fan_out), jnp.float32)


def make_params(key, cfg):
    H, I, L = cfg["hidden"], cfg["intermediate"], cfg["layers"]
    keys = jax.random.split(key, 5 + 6 * L)
    p = {
        "word_emb": (jax.random.normal(keys[0], (cfg["vocab"], H)) * 0.02).astype(jnp.bfloat16),
        "pos_emb": (jax.random.normal(keys[1], (cfg["max_pos"], H)) * 0.02).astype(jnp.bfloat16),
        "type_emb": (jax.random.normal(keys[2], (2, H)) * 0.02).astype(jnp.bfloat16),
        "emb_ln_g": jnp.ones((1, H), jnp.float32),
        "emb_ln_b": jnp.zeros((1, H), jnp.float32),
        "layers": [],
    }
    ki = 3
    for _ in range(L):
        lyr = {}
        wq, bq = _dense(keys[ki + 0], H, H)
        wk, bk = _dense(keys[ki + 1], H, H)
        wv, bv = _dense(keys[ki + 2], H, H)
        # fused QKV projection: one [H, 3H] weight -> h is read from HBM once
        lyr["w_qkv"] = jnp.concatenate([wq, wk, wv], axis=1)
        lyr["b_qkv"] = jnp.concatenate([bq, bk, bv], axis=1)
        lyr["wo"], lyr["bo"] = _dense(keys[ki + 3], H, H)
        lyr["ln1_g"], lyr["ln1_b"] = jnp.ones((1, H), jnp.float32), jnp.zeros((1, H), jnp.float32)
        lyr["w1"], lyr["b1"] = _dense(keys[ki + 4], H, I)
        lyr["w2"], lyr["b2"] = _dense(keys[ki + 5], I, H)
        lyr["ln2_g"], lyr["ln2_b"] = jnp.ones((1, H), jnp.float32), jnp.zeros((1, H), jnp.float32)
        p["layers"].append(lyr)
        ki += 6
    p["pool_w"], p["pool_b"] = _dense(keys[ki], H, H)
    # classifier head padded to a lane multiple ONCE, at build time (not per forward)
    fc1_w, fc1_b = _dense(keys[ki + 1], H, cfg["num_labels"])
    Lp = _round_up(cfg["num_labels"], 128)
    p["fc1_w"] = _pad2(fc1_w, H, Lp)
    p["fc1_b"] = _pad2(fc1_b, 1, Lp)
    return p


# ----------------------------------------------------------------------------
# Forward pass (eval mode: Dropout == identity)
# ----------------------------------------------------------------------------
def bert_forward(params, text_ids, attention_mask, cfg):
    B, S = text_ids.shape
    H, nH = cfg["hidden"], cfg["heads"]
    d = H // nH

    # --- embeddings (gather/broadcast adds are glue; LayerNorm is a Pallas kernel)
    # TODO(synk): token_type hard-coded to segment 0 (single-segment model).
    x = (jnp.take(params["word_emb"], text_ids, axis=0)
         + params["pos_emb"][:S][None, :, :]
         + params["type_emb"][0][None, None, :]).astype(jnp.bfloat16)   # [B,S,H]
    h = pallas_layernorm(x.reshape(B * S, H),
                         params["emb_ln_g"], params["emb_ln_b"])        # [B*S,H] bf16

    # [B,1,S] mask (1=keep, 0=pad); the -1e9 bias is built & broadcast in-kernel.
    mask = attention_mask.astype(jnp.float32).reshape(B, 1, S)

    for lyr in params["layers"]:
        # fused QKV projection; the split into (3, nH, d) is a FREE reshape
        qkv = pallas_linear(h, lyr["w_qkv"], lyr["b_qkv"])              # [B*S, 3H]
        qkv = qkv.reshape(B, S, 3, nH, d)
        ctx = pallas_attention(qkv, mask, nH=nH, d=d,
                               scale=1.0 / math.sqrt(d))                # [B, S, H]
        # output projection with fused residual-add + LayerNorm epilogue
        h = pallas_linear(ctx.reshape(B * S, H), lyr["wo"], lyr["bo"],
                          residual=h, ln_gamma=lyr["ln1_g"], ln_beta=lyr["ln1_b"])
        ffn = pallas_linear(h, lyr["w1"], lyr["b1"], act="gelu")
        h = pallas_linear(ffn, lyr["w2"], lyr["b2"],
                          residual=h, ln_gamma=lyr["ln2_g"], ln_beta=lyr["ln2_b"])

    h = h.reshape(B, S, H)

    # --- pooler + classifier head, fused: sigmoid(fc1(dropout(tanh(Wp @ h_cls))))
    # dropout is identity at eval time.
    logits = pallas_head(h[:, 0, :], params["pool_w"], params["pool_b"],
                         params["fc1_w"], params["fc1_b"],
                         num_labels=cfg["num_labels"])                  # [B, labels] f32
    return logits


# ----------------------------------------------------------------------------
if __name__ == "__main__":
    cfg = dict(vocab=100, max_pos=32, hidden=32, heads=4, intermediate=64,
               layers=2, num_labels=3)
    B, S = 2, 8

    key = jax.random.PRNGKey(0)
    k_params, k_ids = jax.random.split(key)
    params = make_params(k_params, cfg)

    text_ids = jax.random.randint(k_ids, (B, S), 0, cfg["vocab"], dtype=jnp.int32)
    attention_mask = jnp.ones((B, S), jnp.float32).at[:, -2:].set(0.0)  # pad last 2

    fwd = jax.jit(functools.partial(bert_forward, cfg=cfg))
    out = jax.block_until_ready(fwd(params, text_ids, attention_mask))

    assert out.shape == (B, cfg["num_labels"])
    assert bool(jnp.all((out >= 0.0) & (out <= 1.0)))  # sigmoid range
    print("KERNEL_OK")
</pallas_src>

<mosaic_0001>
module attributes {stable_mosaic.version = 11 : i64} {
  func.func @_layernorm_kernel(%arg0: i32, %arg1: memref<16x32xbf16, #tpu.memory_space<vmem>>, %arg2: memref<1x32xf32, #tpu.memory_space<vmem>>, %arg3: memref<1x32xf32, #tpu.memory_space<vmem>>, %arg4: memref<16x32xbf16, #tpu.memory_space<vmem>>) attributes {dimension_semantics = [#tpu.dimension_semantics<parallel>], iteration_bounds = array<i64: 1>, scalar_prefetch = 0 : i64, scratch_operands = 0 : i64, tpu.core_type = #tpu.core_type<tc>, window_params = [{transform_indices = @transform_0, window_bounds = array<i64: 16, 32>}, {pipeline_mode = #tpu.pipeline_mode<synchronous>, transform_indices = @transform_1, window_bounds = array<i64: 1, 32>}, {pipeline_mode = #tpu.pipeline_mode<synchronous>, transform_indices = @transform_2, window_bounds = array<i64: 1, 32>}, {transform_indices = @transform_3, window_bounds = array<i64: 16, 32>}]} {
    %c0 = arith.constant 0 : index
    %c0_0 = arith.constant 0 : index
    %0 = vector.load %arg1[%c0, %c0_0] : memref<16x32xbf16, #tpu.memory_space<vmem>>, vector<16x32xbf16>
    %1 = arith.extf %0 : vector<16x32xbf16> to vector<16x32xf32>
    %c0_1 = arith.constant 0 : index
    %c0_2 = arith.constant 0 : index
    %2 = vector.load %arg2[%c0_1, %c0_2] : memref<1x32xf32, #tpu.memory_space<vmem>>, vector<1x32xf32>
    %c0_3 = arith.constant 0 : index
    %c0_4 = arith.constant 0 : index
    %3 = vector.load %arg3[%c0_3, %c0_4] : memref<1x32xf32, #tpu.memory_space<vmem>>, vector<1x32xf32>
    %cst = arith.constant dense<0.000000e+00> : vector<16xf32>
    %4 = vector.multi_reduction <add>, %1, %cst [1] : vector<16x32xf32> to vector<16xf32>
    %5 = vector.shape_cast %4 : vector<16xf32> to vector<16x1xf32>
    %cst_5 = arith.constant 3.200000e+01 : f32
    %6 = vector.broadcast %cst_5 : f32 to vector<16x1xf32>
    %7 = arith.divf %5, %6 : vector<16x1xf32>
    %8 = vector.broadcast %7 : vector<16x1xf32> to vector<16x32xf32>
    %9 = arith.subf %1, %8 : vector<16x32xf32>
    %10 = vector.broadcast %7 : vector<16x1xf32> to vector<16x32xf32>
    %11 = arith.subf %1, %10 : vector<16x32xf32>
    %12 = arith.mulf %9, %11 : vector<16x32xf32>
    %cst_6 = arith.constant dense<0.000000e+00> : vector<16xf32>
    %13 = vector.multi_reduction <add>, %12, %cst_6 [1] : vector<16x32xf32> to vector<16xf32>
    %14 = vector.shape_cast %13 : vector<16xf32> to vector<16x1xf32>
    %cst_7 = arith.constant 3.200000e+01 : f32
    %15 = vector.broadcast %cst_7 : f32 to vector<16x1xf32>
    %16 = arith.divf %14, %15 : vector<16x1xf32>
    %17 = vector.broadcast %7 : vector<16x1xf32> to vector<16x32xf32>
    %18 = arith.subf %1, %17 : vector<16x32xf32>
    %cst_8 = arith.constant 9.99999996E-13 : f32
    %19 = vector.broadcast %cst_8 : f32 to vector<16x1xf32>
    %20 = arith.addf %16, %19 : vector<16x1xf32>
    %21 = math.rsqrt %20 : vector<16x1xf32>
    %22 = vector.broadcast %21 : vector<16x1xf32> to vector<16x32xf32>
    %23 = arith.mulf %18, %22 : vector<16x32xf32>
    %24 = vector.broadcast %2 : vector<1x32xf32> to vector<16x32xf32>
    %25 = arith.mulf %23, %24 : vector<16x32xf32>
    %26 = vector.broadcast %3 : vector<1x32xf32> to vector<16x32xf32>
    %27 = arith.addf %25, %26 : vector<16x32xf32>
    %28 = arith.truncf %27 : vector<16x32xf32> to vector<16x32xbf16>
    %c0_9 = arith.constant 0 : index
    %c0_10 = arith.constant 0 : index
    %29 = vector.load %arg4[%c0_9, %c0_10] : memref<16x32xbf16, #tpu.memory_space<vmem>>, vector<16x32xbf16>
    tpu.vector_store %arg4[%c0_9, %c0_10], %28 {strides = array<i32>} : memref<16x32xbf16, #tpu.memory_space<vmem>>, vector<16x32xbf16>,
    return
  }
  func.func @transform_0(%arg0: i32) -> (i32, i32) {
    %c0_i32 = arith.constant 0 : i32
    %c0_i32_0 = arith.constant 0 : i32
    return %arg0, %c0_i32 : i32, i32
  }
  func.func @transform_1(%arg0: i32) -> (i32, i32) {
    %c0_i32 = arith.constant 0 : i32
    %c0_i32_0 = arith.constant 0 : i32
    %c0_i32_1 = arith.constant 0 : i32
    return %c0_i32, %c0_i32_0 : i32, i32
  }
  func.func @transform_2(%arg0: i32) -> (i32, i32) {
    %c0_i32 = arith.constant 0 : i32
    %c0_i32_0 = arith.constant 0 : i32
    %c0_i32_1 = arith.constant 0 : i32
    return %c0_i32, %c0_i32_0 : i32, i32
  }
  func.func @transform_3(%arg0: i32) -> (i32, i32) {
    %c0_i32 = arith.constant 0 : i32
    %c0_i32_0 = arith.constant 0 : i32
    return %arg0, %c0_i32 : i32, i32
  }
}

module attributes {stable_mosaic.version = 11 : i64} {
  func.func @_linear_kernel(%arg0: i32, %arg1: i32, %arg2: i32, %arg3: memref<16x32xbf16, #tpu.memory_space<vmem>>, %arg4: memref<32x96xbf16, #tpu.memory_space<vmem>>, %arg5: memref<1x96xf32, #tpu.memory_space<vmem>>, %arg6: memref<16x96xbf16, #tpu.memory_space<vmem>>, %arg7: memref<16x96xf32, #tpu.memory_space<vmem>>) attributes {dimension_semantics = [#tpu.dimension_semantics<parallel>, #tpu.dimension_semantics<parallel>, #tpu.dimension_semantics<arbitrary>], iteration_bounds = array<i64: 1, 1, 1>, scalar_prefetch = 0 : i64, scratch_operands = 1 : i64, tpu.core_type = #tpu.core_type<tc>, window_params = [{transform_indices = @transform_0, window_bounds = array<i64: 16, 32>}, {transform_indices = @transform_1, window_bounds = array<i64: 32, 96>}, {transform_indices = @transform_2, window_bounds = array<i64: 1, 96>}, {transform_indices = @transform_3, window_bounds = array<i64: 16, 96>}]} {
    %c0_i32 = arith.constant 0 : i32
    %0 = arith.cmpi eq, %arg2, %c0_i32 : i32
    %1 = arith.extui %0 : i1 to i32
    %c0_i32_0 = arith.constant 0 : i32
    %2 = arith.cmpi ne, %1, %c0_i32_0 : i32
    scf.if %2 {
      %cst_10 = arith.constant 0.000000e+00 : f32
      %12 = vector.broadcast %cst_10 : f32 to vector<16x96xf32>
      %c0_11 = arith.constant 0 : index
      %c0_12 = arith.constant 0 : index
      %13 = vector.load %arg7[%c0_11, %c0_12] : memref<16x96xf32, #tpu.memory_space<vmem>>, vector<16x96xf32>
      tpu.vector_store %arg7[%c0_11, %c0_12], %12 {strides = array<i32>} : memref<16x96xf32, #tpu.memory_space<vmem>>, vector<16x96xf32>,
    } else {
    }
    %c0 = arith.constant 0 : index
    %c0_1 = arith.constant 0 : index
    %3 = vector.load %arg7[%c0, %c0_1] : memref<16x96xf32, #tpu.memory_space<vmem>>, vector<16x96xf32>
    %c0_2 = arith.constant 0 : index
    %c0_3 = arith.constant 0 : index
    %4 = vector.load %arg3[%c0_2, %c0_3] : memref<16x32xbf16, #tpu.memory_space<vmem>>, vector<16x32xbf16>
    %c0_4 = arith.constant 0 : index
    %c0_5 = arith.constant 0 : index
    %5 = vector.load %arg4[%c0_4, %c0_5] : memref<32x96xbf16, #tpu.memory_space<vmem>>, vector<32x96xbf16>
    %cst = arith.constant dense<0.000000e+00> : vector<16x96xf32>
    %6 = tpu.matmul %4, %5, %cst {dimension_numbers = #tpu.dot_dimension_numbers<[1], [0], [0], [1], [0, 0, 1, 1], [], []>} : vector<16x32xbf16>, vector<32x96xbf16>, vector<16x96xf32> -> vector<16x96xf32>
    %7 = arith.addf %3, %6 : vector<16x96xf32>
    %c0_6 = arith.constant 0 : index
    %c0_7 = arith.constant 0 : index
    %8 = vector.load %arg7[%c0_6, %c0_7] : memref<16x96xf32, #tpu.memory_space<vmem>>, vector<16x96xf32>
    tpu.vector_store %arg7[%c0_6, %c0_7], %7 {strides = array<i32>} : memref<16x96xf32, #tpu.memory_space<vmem>>, vector<16x96xf32>,
    %c0_i32_8 = arith.constant 0 : i32
    %9 = arith.cmpi eq, %arg2, %c0_i32_8 : i32
    %10 = arith.extui %9 : i1 to i32
    %c0_i32_9 = arith.constant 0 : i32
    %11 = arith.cmpi ne, %10, %c0_i32_9 : i32
    scf.if %11 {
      %c0_10 = arith.constant 0 : index
      %c0_11 = arith.constant 0 : index
      %12 = vector.load %arg7[%c0_10, %c0_11] : memref<16x96xf32, #tpu.memory_space<vmem>>, vector<16x96xf32>
      %c0_12 = arith.constant 0 : index
      %c0_13 = arith.constant 0 : index
      %13 = vector.load %arg5[%c0_12, %c0_13] : memref<1x96xf32, #tpu.memory_space<vmem>>, vector<1x96xf32>
      %14 = vector.broadcast %13 : vector<1x96xf32> to vector<16x96xf32>
      %15 = arith.addf %12, %14 : vector<16x96xf32>
      %16 = arith.truncf %15 : vector<16x96xf32> to vector<16x96xbf16>
      %c0_14 = arith.constant 0 : index
      %c0_15 = arith.constant 0 : index
      %17 = vector.load %arg6[%c0_14, %c0_15] : memref<16x96xbf16, #tpu.memory_space<vmem>>, vector<16x96xbf16>
      tpu.vector_store %arg6[%c0_14, %c0_15], %16 {strides = array<i32>} : memref<16x96xbf16, #tpu.memory_space<vmem>>, vector<16x96xbf16>,
    } else {
    }
    return
  }
  func.func @transform_0(%arg0: i32, %arg1: i32, %arg2: i32) -> (i32, i32) {
    %c0_i32 = arith.constant 0 : i32
    return %arg0, %arg2 : i32, i32
  }
  func.func @transform_1(%arg0: i32, %arg1: i32, %arg2: i32) -> (i32, i32) {
    %c0_i32 = arith.constant 0 : i32
    return %arg2, %arg1 : i32, i32
  }
  func.func @transform_2(%arg0: i32, %arg1: i32, %arg2: i32) -> (i32, i32) {
    %c0_i32 = arith.constant 0 : i32
    %c0_i32_0 = arith.constant 0 : i32
    return %c0_i32, %arg1 : i32, i32
  }
  func.func @transform_3(%arg0: i32, %arg1: i32, %arg2: i32) -> (i32, i32) {
    %c0_i32 = arith.constant 0 : i32
    return %arg0, %arg1 : i32, i32
  }
}

module attributes {stable_mosaic.version = 11 : i64} {
  func.func @_flash_attention_kernel(%arg0: i32, %arg1: i32, %arg2: memref<1x8x1x4x8xbf16, #tpu.memory_space<vmem>>, %arg3: memref<1x8x1x4x8xbf16, #tpu.memory_space<vmem>>, %arg4: memref<1x8x1x4x8xbf16, #tpu.memory_space<vmem>>, %arg5: memref<1x1x8xf32, #tpu.memory_space<vmem>>, %arg6: memref<1x8x32xbf16, #tpu.memory_space<vmem>>, %arg7: memref<4x8x1xf32, #tpu.memory_space<vmem>>, %arg8: memref<4x8x1xf32, #tpu.memory_space<vmem>>, %arg9: memref<4x8x8xf32, #tpu.memory_space<vmem>>) attributes {dimension_semantics = [#tpu.dimension_semantics<parallel>, #tpu.dimension_semantics<arbitrary>], iteration_bounds = array<i64: 2, 1>, scalar_prefetch = 0 : i64, scratch_operands = 3 : i64, tpu.core_type = #tpu.core_type<tc>, window_params = [{transform_indices = @transform_0, window_bounds = array<i64: 1, 8, 1, 4, 8>}, {transform_indices = @transform_1, window_bounds = array<i64: 1, 8, 1, 4, 8>}, {transform_indices = @transform_2, window_bounds = array<i64: 1, 8, 1, 4, 8>}, {transform_indices = @transform_3, window_bounds = array<i64: 1, 1, 8>}, {transform_indices = @transform_4, window_bounds = array<i64: 1, 8, 32>}]} {
    %c0_i32 = arith.constant 0 : i32
    %0 = arith.cmpi eq, %arg1, %c0_i32 : i32
    %1 = arith.extui %0 : i1 to i32
    %c0_i32_0 = arith.constant 0 : i32
    %2 = arith.cmpi ne, %1, %c0_i32_0 : i32
    scf.if %2 {
      %cst_155 = arith.constant -1.000000e+30 : f32
      %188 = vector.broadcast %cst_155 : f32 to vector<4x8x1xf32>
      %c0_156 = arith.constant 0 : index
      %c0_157 = arith.constant 0 : index
      %c0_158 = arith.constant 0 : index
      %189 = vector.load %arg7[%c0_156, %c0_157, %c0_158] : memref<4x8x1xf32, #tpu.memory_space<vmem>>, vector<4x8x1xf32>
      tpu.vector_store %arg7[%c0_156, %c0_157, %c0_158], %188 {strides = array<i32>} : memref<4x8x1xf32, #tpu.memory_space<vmem>>, vector<4x8x1xf32>,
      %cst_159 = arith.constant 0.000000e+00 : f32
      %190 = vector.broadcast %cst_159 : f32 to vector<4x8x1xf32>
      %c0_160 = arith.constant 0 : index
      %c0_161 = arith.constant 0 : index
      %c0_162 = arith.constant 0 : index
      %191 = vector.load %arg8[%c0_160, %c0_161, %c0_162] : memref<4x8x1xf32, #tpu.memory_space<vmem>>, vector<4x8x1xf32>
      tpu.vector_store %arg8[%c0_160, %c0_161, %c0_162], %190 {strides = array<i32>} : memref<4x8x1xf32, #tpu.memory_space<vmem>>, vector<4x8x1xf32>,
      %cst_163 = arith.constant 0.000000e+00 : f32
      %192 = vector.broadcast %cst_163 : f32 to vector<4x8x8xf32>
      %c0_164 = arith.constant 0 : index
      %c0_165 = arith.constant 0 : index
      %c0_166 = arith.constant 0 : index
      %193 = vector.load %arg9[%c0_164, %c0_165, %c0_166] : memref<4x8x8xf32, #tpu.memory_space<vmem>>, vector<4x8x8xf32>
      tpu.vector_store %arg9[%c0_164, %c0_165, %c0_166], %192 {strides = array<i32>} : memref<4x8x8xf32, #tpu.memory_space<vmem>>, vector<4x8x8xf32>,
    } else {
    }
    %c0 = arith.constant 0 : index
    %c0_1 = arith.constant 0 : index
    %c0_2 = arith.constant 0 : index
    %3 = vector.load %arg5[%c0, %c0_1, %c0_2] : memref<1x1x8xf32, #tpu.memory_space<vmem>>, vector<1x1x8xf32>
    %4 = vector.shape_cast %3 : vector<1x1x8xf32> to vector<1x8xf32>
    %cst = arith.constant 1.000000e+00 : f32
    %5 = vector.broadcast %cst : f32 to vector<1x8xf32>
    %6 = arith.subf %5, %4 : vector<1x8xf32>
    %cst_3 = arith.constant -1.000000e+09 : f32
    %7 = vector.broadcast %cst_3 : f32 to vector<1x8xf32>
    %8 = arith.mulf %6, %7 : vector<1x8xf32>
    %c0_4 = arith.constant 0 : index
    %c0_5 = arith.constant 0 : index
    %c0_6 = arith.constant 0 : index
    %c0_7 = arith.constant 0 : index
    %c0_8 = arith.constant 0 : index
    %9 = vector.load %arg2[%c0_4, %c0_5, %c0_6, %c0_7, %c0_8] : memref<1x8x1x4x8xbf16, #tpu.memory_space<vmem>>, vector<1x8x1x1x8xbf16>
    %10 = vector.shape_cast %9 : vector<1x8x1x1x8xbf16> to vector<8x8xbf16>
    %c0_9 = arith.constant 0 : index
    %c0_10 = arith.constant 0 : index
    %c0_11 = arith.constant 0 : index
    %c0_12 = arith.constant 0 : index
    %c0_13 = arith.constant 0 : index
    %11 = vector.load %arg3[%c0_9, %c0_10, %c0_11, %c0_12, %c0_13] : memref<1x8x1x4x8xbf16, #tpu.memory_space<vmem>>, vector<1x8x1x1x8xbf16>
    %12 = vector.shape_cast %11 : vector<1x8x1x1x8xbf16> to vector<8x8xbf16>
    %c0_14 = arith.constant 0 : index
    %c0_15 = arith.constant 0 : index
    %c0_16 = arith.constant 0 : index
    %c0_17 = arith.constant 0 : index
    %c0_18 = arith.constant 0 : index
    %13 = vector.load %arg4[%c0_14, %c0_15, %c0_16, %c0_17, %c0_18] : memref<1x8x1x4x8xbf16, #tpu.memory_space<vmem>>, vector<1x8x1x1x8xbf16>
    %14 = vector.shape_cast %13 : vector<1x8x1x1x8xbf16> to vector<8x8xbf16>
    %15 = tpu.transpose %12, [1, 0] : vector<8x8xbf16> -> vector<8x8xbf16>
    %cst_19 = arith.constant dense<0.000000e+00> : vector<8x8xf32>
    %16 = tpu.matmul %10, %15, %cst_19 {dimension_numbers = #tpu.dot_dimension_numbers<[1], [0], [0], [1], [0, 0, 1, 1], [], []>} : vector<8x8xbf16>, vector<8x8xbf16>, vector<8x8xf32> -> vector<8x8xf32>
    %cst_20 = arith.constant 0.353553385 : f32
    %17 = vector.broadcast %cst_20 : f32 to vector<8x8xf32>
    %18 = arith.mulf %16, %17 : vector<8x8xf32>
    %19 = vector.broadcast %8 : vector<1x8xf32> to vector<8x8xf32>
    %20 = arith.addf %18, %19 : vector<8x8xf32>
    %c0_21 = arith.constant 0 : index
    %c0_22 = arith.constant 0 : index
    %c0_23 = arith.constant 0 : index
    %21 = vector.load %arg7[%c0_21, %c0_22, %c0_23] : memref<4x8x1xf32, #tpu.memory_space<vmem>>, vector<1x8x1xf32>
    %22 = vector.shape_cast %21 : vector<1x8x1xf32> to vector<8x1xf32>
    %cst_24 = arith.constant dense<0xFF800000> : vector<8xf32>
    %23 = vector.multi_reduction <maximumf>, %20, %cst_24 [1] : vector<8x8xf32> to vector<8xf32>
    %24 = vector.shape_cast %23 : vector<8xf32> to vector<8x1xf32>
    %25 = arith.maximumf %22, %24 : vector<8x1xf32>
    %26 = arith.subf %22, %25 : vector<8x1xf32>
    %27 = math.exp %26 : vector<8x1xf32>
    %28 = vector.broadcast %25 : vector<8x1xf32> to vector<8x8xf32>
    %29 = arith.subf %20, %28 : vector<8x8xf32>
    %30 = math.exp %29 : vector<8x8xf32>
    %c0_25 = arith.constant 0 : index
    %c0_26 = arith.constant 0 : index
    %c0_27 = arith.constant 0 : index
    %31 = vector.load %arg8[%c0_25, %c0_26, %c0_27] : memref<4x8x1xf32, #tpu.memory_space<vmem>>, vector<1x8x1xf32>
    %32 = vector.shape_cast %31 : vector<1x8x1xf32> to vector<8x1xf32>
    %33 = arith.mulf %27, %32 : vector<8x1xf32>
    %cst_28 = arith.constant dense<0.000000e+00> : vector<8xf32>
    %34 = vector.multi_reduction <add>, %30, %cst_28 [1] : vector<8x8xf32> to vector<8xf32>
    %35 = vector.shape_cast %34 : vector<8xf32> to vector<8x1xf32>
    %36 = arith.addf %33, %35 : vector<8x1xf32>
    %c0_29 = arith.constant 0 : index
    %c0_30 = arith.constant 0 : index
    %c0_31 = arith.constant 0 : index
    %37 = vector.load %arg8[%c0_29, %c0_30, %c0_31] : memref<4x8x1xf32, #tpu.memory_space<vmem>>, vector<1x8x1xf32>
    %38 = vector.shape_cast %37 : vector<1x8x1xf32> to vector<8x1xf32>
    %39 = vector.shape_cast %36 : vector<8x1xf32> to vector<1x8x1xf32>
    tpu.vector_store %arg8[%c0_29, %c0_30, %c0_31], %39 {strides = array<i32>} : memref<4x8x1xf32, #tpu.memory_space<vmem>>, vector<1x8x1xf32>,
    %c0_32 = arith.constant 0 : index
    %c0_33 = arith.constant 0 : index
    %c0_34 = arith.constant 0 : index
    %40 = vector.load %arg9[%c0_32, %c0_33, %c0_34] : memref<4x8x8xf32, #tpu.memory_space<vmem>>, vector<1x8x8xf32>
    %41 = vector.shape_cast %40 : vector<1x8x8xf32> to vector<8x8xf32>
    %42 = vector.broadcast %27 : vector<8x1xf32> to vector<8x8xf32>
    %43 = arith.mulf %42, %41 : vector<8x8xf32>
    %44 = arith.truncf %30 : vector<8x8xf32> to vector<8x8xbf16>
    %cst_35 = arith.constant dense<0.000000e+00> : vector<8x8xf32>
    %45 = tpu.matmul %44, %14, %cst_35 {dimension_numbers = #tpu.dot_dimension_numbers<[1], [0], [0], [1], [0, 0, 1, 1], [], []>} : vector<8x8xbf16>, vector<8x8xbf16>, vector<8x8xf32> -> vector<8x8xf32>
    %46 = arith.addf %43, %45 : vector<8x8xf32>
    %c0_36 = arith.constant 0 : index
    %c0_37 = arith.constant 0 : index
    %c0_38 = arith.constant 0 : index
    %47 = vector.load %arg9[%c0_36, %c0_37, %c0_38] : memref<4x8x8xf32, #tpu.memory_space<vmem>>, vector<1x8x8xf32>
    %48 = vector.shape_cast %47 : vector<1x8x8xf32> to vector<8x8xf32>
    %49 = vector.shape_cast %46 : vector<8x8xf32> to vector<1x8x8xf32>
    tpu.vector_store %arg9[%c0_36, %c0_37, %c0_38], %49 {strides = array<i32>} : memref<4x8x8xf32, #tpu.memory_space<vmem>>, vector<1x8x8xf32>,
    %c0_39 = arith.constant 0 : index
    %c0_40 = arith.constant 0 : index
    %c0_41 = arith.constant 0 : index
    %50 = vector.load %arg7[%c0_39, %c0_40, %c0_41] : memref<4x8x1xf32, #tpu.memory_space<vmem>>, vector<1x8x1xf32>
    %51 = vector.shape_cast %50 : vector<1x8x1xf32> to vector<8x1xf32>
    %52 = vector.shape_cast %25 : vector<8x1xf32> to vector<1x8x1xf32>
    tpu.vector_store %arg7[%c0_39, %c0_40, %c0_41], %52 {strides = array<i32>} : memref<4x8x1xf32, #tpu.memory_space<vmem>>, vector<1x8x1xf32>,
    %c0_42 = arith.constant 0 : index
    %c0_43 = arith.constant 0 : index
    %c0_44 = arith.constant 0 : index
    %c1 = arith.constant 1 : index
    %c0_45 = arith.constant 0 : index
    %53 = vector.load %arg2[%c0_42, %c0_43, %c0_44, %c1, %c0_45] : memref<1x8x1x4x8xbf16, #tpu.memory_space<vmem>>, vector<1x8x1x1x8xbf16>
    %54 = vector.shape_cast %53 : vector<1x8x1x1x8xbf16> to vector<8x8xbf16>
    %c0_46 = arith.constant 0 : index
    %c0_47 = arith.constant 0 : index
    %c0_48 = arith.constant 0 : index
    %c1_49 = arith.constant 1 : index
    %c0_50 = arith.constant 0 : index
    %55 = vector.load %arg3[%c0_46, %c0_47, %c0_48, %c1_49, %c0_50] : memref<1x8x1x4x8xbf16, #tpu.memory_space<vmem>>, vector<1x8x1x1x8xbf16>
    %56 = vector.shape_cast %55 : vector<1x8x1x1x8xbf16> to vector<8x8xbf16>
    %c0_51 = arith.constant 0 : index
    %c0_52 = arith.constant 0 : index
    %c0_53 = arith.constant 0 : index
    %c1_54 = arith.constant 1 : index
    %c0_55 = arith.constant 0 : index
    %57 = vector.load %arg4[%c0_51, %c0_52, %c0_53, %c1_54, %c0_55] : memref<1x8x1x4x8xbf16, #tpu.memory_space<vmem>>, vector<1x8x1x1x8xbf16>
    %58 = vector.shape_cast %57 : vector<1x8x1x1x8xbf16> to vector<8x8xbf16>
    %59 = tpu.transpose %56, [1, 0] : vector<8x8xbf16> -> vector<8x8xbf16>
    %cst_56 = arith.constant dense<0.000000e+00> : vector<8x8xf32>
    %60 = tpu.matmul %54, %59, %cst_56 {dimension_numbers = #tpu.dot_dimension_numbers<[1], [0], [0], [1], [0, 0, 1, 1], [], []>} : vector<8x8xbf16>, vector<8x8xbf16>, vector<8x8xf32> -> vector<8x8xf32>
    %cst_57 = arith.constant 0.353553385 : f32
    %61 = vector.broadcast %cst_57 : f32 to vector<8x8xf32>
    %62 = arith.mulf %60, %61 : vector<8x8xf32>
    %63 = vector.broadcast %8 : vector<1x8xf32> to vector<8x8xf32>
    %64 = arith.addf %62, %63 : vector<8x8xf32>
    %c1_58 = arith.constant 1 : index
    %c0_59 = arith.constant 0 : index
    %c0_60 = arith.constant 0 : index
    %65 = vector.load %arg7[%c1_58, %c0_59, %c0_60] : memref<4x8x1xf32, #tpu.memory_space<vmem>>, vector<1x8x1xf32>
    %66 = vector.shape_cast %65 : vector<1x8x1xf32> to vector<8x1xf32>
    %cst_61 = arith.constant dense<0xFF800000> : vector<8xf32>
    %67 = vector.multi_reduction <maximumf>, %64, %cst_61 [1] : vector<8x8xf32> to vector<8xf32>
    %68 = vector.shape_cast %67 : vector<8xf32> to vector<8x1xf32>
    %69 = arith.maximumf %66, %68 : vector<8x1xf32>
    %70 = arith.subf %66, %69 : vector<8x1xf32>
    %71 = math.exp %70 : vector<8x1xf32>
    %72 = vector.broadcast %69 : vector<8x1xf32> to vector<8x8xf32>
    %73 = arith.subf %64, %72 : vector<8x8xf32>
    %74 = math.exp %73 : vector<8x8xf32>
    %c1_62 = arith.constant 1 : index
    %c0_63 = arith.constant 0 : index
    %c0_64 = arith.constant 0 : index
    %75 = vector.load %arg8[%c1_62, %c0_63, %c0_64] : memref<4x8x1xf32, #tpu.memory_space<vmem>>, vector<1x8x1xf32>
    %76 = vector.shape_cast %75 : vector<1x8x1xf32> to vector<8x1xf32>
    %77 = arith.mulf %71, %76 : vector<8x1xf32>
    %cst_65 = arith.constant dense<0.000000e+00> : vector<8xf32>
    %78 = vector.multi_reduction <add>, %74, %cst_65 [1] : vector<8x8xf32> to vector<8xf32>
    %79 = vector.shape_cast %78 : vector<8xf32> to vector<8x1xf32>
    %80 = arith.addf %77, %79 : vector<8x1xf32>
    %c1_66 = arith.constant 1 : index
    %c0_67 = arith.constant 0 : index
    %c0_68 = arith.constant 0 : index
    %81 = vector.load %arg8[%c1_66, %c0_67, %c0_68] : memref<4x8x1xf32, #tpu.memory_space<vmem>>, vector<1x8x1xf32>
    %82 = vector.shape_cast %81 : vector<1x8x1xf32> to vector<8x1xf32>
    %83 = vector.shape_cast %80 : vector<8x1xf32> to vector<1x8x1xf32>
    tpu.vector_store %arg8[%c1_66, %c0_67, %c0_68], %83 {strides = array<i32>} : memref<4x8x1xf32, #tpu.memory_space<vmem>>, vector<1x8x1xf32>,
    %c1_69 = arith.constant 1 : index
    %c0_70 = arith.constant 0 : index
    %c0_71 = arith.constant 0 : index
    %84 = vector.load %arg9[%c1_69, %c0_70, %c0_71] : memref<4x8x8xf32, #tpu.memory_space<vmem>>, vector<1x8x8xf32>
    %85 = vector.shape_cast %84 : vector<1x8x8xf32> to vector<8x8xf32>
    %86 = vector.broadcast %71 : vector<8x1xf32> to vector<8x8xf32>
    %87 = arith.mulf %86, %85 : vector<8x8xf32>
    %88 = arith.truncf %74 : vector<8x8xf32> to vector<8x8xbf16>
    %cst_72 = arith.constant dense<0.000000e+00> : vector<8x8xf32>
    %89 = tpu.matmul %88, %58, %cst_72 {dimension_numbers = #tpu.dot_dimension_numbers<[1], [0], [0], [1], [0, 0, 1, 1], [], []>} : vector<8x8xbf16>, vector<8x8xbf16>, vector<8x8xf32> -> vector<8x8xf32>
    %90 = arith.addf %87, %89 : vector<8x8xf32>
    %c1_73 = arith.constant 1 : index
    %c0_74 = arith.constant 0 : index
    %c0_75 = arith.constant 0 : index
    %91 = vector.load %arg9[%c1_73, %c0_74, %c0_75] : memref<4x8x8xf32, #tpu.memory_space<vmem>>, vector<1x8x8xf32>
    %92 = vector.shape_cast %91 : vector<1x8x8xf32> to vector<8x8xf32>
    %93 = vector.shape_cast %90 : vector<8x8xf32> to vector<1x8x8xf32>
    tpu.vector_store %arg9[%c1_73, %c0_74, %c0_75], %93 {strides = array<i32>} : memref<4x8x8xf32, #tpu.memory_space<vmem>>, vector<1x8x8xf32>,
    %c1_76 = arith.constant 1 : index
    %c0_77 = arith.constant 0 : index
    %c0_78 = arith.constant 0 : index
    %94 = vector.load %arg7[%c1_76, %c0_77, %c0_78] : memref<4x8x1xf32, #tpu.memory_space<vmem>>, vector<1x8x1xf32>
    %95 = vector.shape_cast %94 : vector<1x8x1xf32> to vector<8x1xf32>
    %96 = vector.shape_cast %69 : vector<8x1xf32> to vector<1x8x1xf32>
    tpu.vector_store %arg7[%c1_76, %c0_77, %c0_78], %96 {strides = array<i32>} : memref<4x8x1xf32, #tpu.memory_space<vmem>>, vector<1x8x1xf32>,
    %c0_79 = arith.constant 0 : index
    %c0_80 = arith.constant 0 : index
    %c0_81 = arith.constant 0 : index
    %c2 = arith.constant 2 : index
    %c0_82 = arith.constant 0 : index
    %97 = vector.load %arg2[%c0_79, %c0_80, %c0_81, %c2, %c0_82] : memref<1x8x1x4x8xbf16, #tpu.memory_space<vmem>>, vector<1x8x1x1x8xbf16>
    %98 = vector.shape_cast %97 : vector<1x8x1x1x8xbf16> to vector<8x8xbf16>
    %c0_83 = arith.constant 0 : index
    %c0_84 = arith.constant 0 : index
    %c0_85 = arith.constant 0 : index
    %c2_86 = arith.constant 2 : index
    %c0_87 = arith.constant 0 : index
    %99 = vector.load %arg3[%c0_83, %c0_84, %c0_85, %c2_86, %c0_87] : memref<1x8x1x4x8xbf16, #tpu.memory_space<vmem>>, vector<1x8x1x1x8xbf16>
    %100 = vector.shape_cast %99 : vector<1x8x1x1x8xbf16> to vector<8x8xbf16>
    %c0_88 = arith.constant 0 : index
    %c0_89 = arith.constant 0 : index
    %c0_90 = arith.constant 0 : index
    %c2_91 = arith.constant 2 : index
    %c0_92 = arith.constant 0 : index
    %101 = vector.load %arg4[%c0_88, %c0_89, %c0_90, %c2_91, %c0_92] : memref<1x8x1x4x8xbf16, #tpu.memory_space<vmem>>, vector<1x8x1x1x8xbf16>
    %102 = vector.shape_cast %101 : vector<1x8x1x1x8xbf16> to vector<8x8xbf16>
    %103 = tpu.transpose %100, [1, 0] : vector<8x8xbf16> -> vector<8x8xbf16>
    %cst_93 = arith.constant dense<0.000000e+00> : vector<8x8xf32>
    %104 = tpu.matmul %98, %103, %cst_93 {dimension_numbers = #tpu.dot_dimension_numbers<[1], [0], [0], [1], [0, 0, 1, 1], [], []>} : vector<8x8xbf16>, vector<8x8xbf16>, vector<8x8xf32> -> vector<8x8xf32>
    %cst_94 = arith.constant 0.353553385 : f32
    %105 = vector.broadcast %cst_94 : f32 to vector<8x8xf32>
    %106 = arith.mulf %104, %105 : vector<8x8xf32>
    %107 = vector.broadcast %8 : vector<1x8xf32> to vector<8x8xf32>
    %108 = arith.addf %106, %107 : vector<8x8xf32>
    %c2_95 = arith.constant 2 : index
    %c0_96 = arith.constant 0 : index
    %c0_97 = arith.constant 0 : index
    %109 = vector.load %arg7[%c2_95, %c0_96, %c0_97] : memref<4x8x1xf32, #tpu.memory_space<vmem>>, vector<1x8x1xf32>
    %110 = vector.shape_cast %109 : vector<1x8x1xf32> to vector<8x1xf32>
    %cst_98 = arith.constant dense<0xFF800000> : vector<8xf32>
    %111 = vector.multi_reduction <maximumf>, %108, %cst_98 [1] : vector<8x8xf32> to vector<8xf32>
    %112 = vector.shape_cast %111 : vector<8xf32> to vector<8x1xf32>
    %113 = arith.maximumf %110, %112 : vector<8x1xf32>
    %114 = arith.subf %110, %113 : vector<8x1xf32>
    %115 = math.exp %114 : vector<8x1xf32>
    %116 = vector.broadcast %113 : vector<8x1xf32> to vector<8x8xf32>
    %117 = arith.subf %108, %116 : vector<8x8xf32>
    %118 = math.exp %117 : vector<8x8xf32>
    %c2_99 = arith.constant 2 : index
    %c0_100 = arith.constant 0 : index
    %c0_101 = arith.constant 0 : index
    %119 = vector.load %arg8[%c2_99, %c0_100, %c0_101] : memref<4x8x1xf32, #tpu.memory_space<vmem>>, vector<1x8x1xf32>
    %120 = vector.shape_cast %119 : vector<1x8x1xf32> to vector<8x1xf32>
    %121 = arith.mulf %115, %120 : vector<8x1xf32>
    %cst_102 = arith.constant dense<0.000000e+00> : vector<8xf32>
    %122 = vector.multi_reduction <add>, %118, %cst_102 [1] : vector<8x8xf32> to vector<8xf32>
    %123 = vector.shape_cast %122 : vector<8xf32> to vector<8x1xf32>
    %124 = arith.addf %121, %123 : vector<8x1xf32>
    %c2_103 = arith.constant 2 : index
    %c0_104 = arith.constant 0 : index
    %c0_105 = arith.constant 0 : index
    %125 = vector.load %arg8[%c2_103, %c0_104, %c0_105] : memref<4x8x1xf32, #tpu.memory_space<vmem>>, vector<1x8x1xf32>
    %126 = vector.shape_cast %125 : vector<1x8x1xf32> to vector<8x1xf32>
    %127 = vector.shape_cast %124 : vector<8x1xf32> to vector<1x8x1xf32>
    tpu.vector_store %arg8[%c2_103, %c0_104, %c0_105], %127 {strides = array<i32>} : memref<4x8x1xf32, #tpu.memory_space<vmem>>, vector<1x8x1xf32>,
    %c2_106 = arith.constant 2 : index
    %c0_107 = arith.constant 0 : index
    %c0_108 = arith.constant 0 : index
    %128 = vector.load %arg9[%c2_106, %c0_107, %c0_108] : memref<4x8x8xf32, #tpu.memory_space<vmem>>, vector<1x8x8xf32>
    %129 = vector.shape_cast %128 : vector<1x8x8xf32> to vector<8x8xf32>
    %130 = vector.broadcast %115 : vector<8x1xf32> to vector<8x8xf32>
    %131 = arith.mulf %130, %129 : vector<8x8xf32>
    %132 = arith.truncf %118 : vector<8x8xf32> to vector<8x8xbf16>
    %cst_109 = arith.constant dense<0.000000e+00> : vector<8x8xf32>
    %133 = tpu.matmul %132, %102, %cst_109 {dimension_numbers = #tpu.dot_dimension_numbers<[1], [0], [0], [1], [0, 0, 1, 1], [], []>} : vector<8x8xbf16>, vector<8x8xbf16>, vector<8x8xf32> -> vector<8x8xf32>
    %134 = arith.addf %131, %133 : vector<8x8xf32>
    %c2_110 = arith.constant 2 : index
    %c0_111 = arith.constant 0 : index
    %c0_112 = arith.constant 0 : index
    %135 = vector.load %arg9[%c2_110, %c0_111, %c0_112] : memref<4x8x8xf32, #tpu.memory_space<vmem>>, vector<1x8x8xf32>
    %136 = vector.shape_cast %135 : vector<1x8x8xf32> to vector<8x8xf32>
    %137 = vector.shape_cast %134 : vector<8x8xf32> to vector<1x8x8xf32>
    tpu.vector_store %arg9[%c2_110, %c0_111, %c0_112], %137 {strides = array<i32>} : memref<4x8x8xf32, #tpu.memory_space<vmem>>, vector<1x8x8xf32>,
    %c2_113 = arith.constant 2 : index
    %c0_114 = arith.constant 0 : index
    %c0_115 = arith.constant 0 : index
    %138 = vector.load %arg7[%c2_113, %c0_114, %c0_115] : memref<4x8x1xf32, #tpu.memory_space<vmem>>, vector<1x8x1xf32>
    %139 = vector.shape_cast %138 : vector<1x8x1xf32> to vector<8x1xf32>
    %140 = vector.shape_cast %113 : vector<8x1xf32> to vector<1x8x1xf32>
    tpu.vector_store %arg7[%c2_113, %c0_114, %c0_115], %140 {strides = array<i32>} : memref<4x8x1xf32, #tpu.memory_space<vmem>>, vector<1x8x1xf32>,
    %c0_116 = arith.constant 0 : index
    %c0_117 = arith.constant 0 : index
    %c0_118 = arith.constant 0 : index
    %c3 = arith.constant 3 : index
    %c0_119 = arith.constant 0 : index
    %141 = vector.load %arg2[%c0_116, %c0_117, %c0_118, %c3, %c0_119] : memref<1x8x1x4x8xbf16, #tpu.memory_space<vmem>>, vector<1x8x1x1x8xbf16>
    %142 = vector.shape_cast %141 : vector<1x8x1x1x8xbf16> to vector<8x8xbf16>
    %c0_120 = arith.constant 0 : index
    %c0_121 = arith.constant 0 : index
    %c0_122 = arith.constant 0 : index
    %c3_123 = arith.constant 3 : index
    %c0_124 = arith.constant 0 : index
    %143 = vector.load %arg3[%c0_120, %c0_121, %c0_122, %c3_123, %c0_124] : memref<1x8x1x4x8xbf16, #tpu.memory_space<vmem>>, vector<1x8x1x1x8xbf16>
    %144 = vector.shape_cast %143 : vector<1x8x1x1x8xbf16> to vector<8x8xbf16>
    %c0_125 = arith.constant 0 : index
    %c0_126 = arith.constant 0 : index
    %c0_127 = arith.constant 0 : index
    %c3_128 = arith.constant 3 : index
    %c0_129 = arith.constant 0 : index
    %145 = vector.load %arg4[%c0_125, %c0_126, %c0_127, %c3_128, %c0_129] : memref<1x8x1x4x8xbf16, #tpu.memory_space<vmem>>, vector<1x8x1x1x8xbf16>
    %146 = vector.shape_cast %145 : vector<1x8x1x1x8xbf16> to vector<8x8xbf16>
    %147 = tpu.transpose %144, [1, 0] : vector<8x8xbf16> -> vector<8x8xbf16>
    %cst_130 = arith.constant dense<0.000000e+00> : vector<8x8xf32>
    %148 = tpu.matmul %142, %147, %cst_130 {dimension_numbers = #tpu.dot_dimension_numbers<[1], [0], [0], [1], [0, 0, 1, 1], [], []>} : vector<8x8xbf16>, vector<8x8xbf16>, vector<8x8xf32> -> vector<8x8xf32>
    %cst_131 = arith.constant 0.353553385 : f32
    %149 = vector.broadcast %cst_131 : f32 to vector<8x8xf32>
    %150 = arith.mulf %148, %149 : vector<8x8xf32>
    %151 = vector.broadcast %8 : vector<1x8xf32> to vector<8x8xf32>
    %152 = arith.addf %150, %151 : vector<8x8xf32>
    %c3_132 = arith.constant 3 : index
    %c0_133 = arith.constant 0 : index
    %c0_134 = arith.constant 0 : index
    %153 = vector.load %arg7[%c3_132, %c0_133, %c0_134] : memref<4x8x1xf32, #tpu.memory_space<vmem>>, vector<1x8x1xf32>
    %154 = vector.shape_cast %153 : vector<1x8x1xf32> to vector<8x1xf32>
    %cst_135 = arith.constant dense<0xFF800000> : vector<8xf32>
    %155 = vector.multi_reduction <maximumf>, %152, %cst_135 [1] : vector<8x8xf32> to vector<8xf32>
    %156 = vector.shape_cast %155 : vector<8xf32> to vector<8x1xf32>
    %157 = arith.maximumf %154, %156 : vector<8x1xf32>
    %158 = arith.subf %154, %157 : vector<8x1xf32>
    %159 = math.exp %158 : vector<8x1xf32>
    %160 = vector.broadcast %157 : vector<8x1xf32> to vector<8x8xf32>
    %161 = arith.subf %152, %160 : vector<8x8xf32>
    %162 = math.exp %161 : vector<8x8xf32>
    %c3_136 = arith.constant 3 : index
    %c0_137 = arith.constant 0 : index
    %c0_138 = arith.constant 0 : index
    %163 = vector.load %arg8[%c3_136, %c0_137, %c0_138] : memref<4x8x1xf32, #tpu.memory_space<vmem>>, vector<1x8x1xf32>
    %164 = vector.shape_cast %163 : vector<1x8x1xf32> to vector<8x1xf32>
    %165 = arith.mulf %159, %164 : vector<8x1xf32>
    %cst_139 = arith.constant dense<0.000000e+00> : vector<8xf32>
    %166 = vector.multi_reduction <add>, %162, %cst_139 [1] : vector<8x8xf32> to vector<8xf32>
    %167 = vector.shape_cast %166 : vector<8xf32> to vector<8x1xf32>
    %168 = arith.addf %165, %167 : vector<8x1xf32>
    %c3_140 = arith.constant 3 : index
    %c0_141 = arith.constant 0 : index
    %c0_142 = arith.constant 0 : index
    %169 = vector.load %arg8[%c3_140, %c0_141, %c0_142] : memref<4x8x1xf32, #tpu.memory_space<vmem>>, vector<1x8x1xf32>
    %170 = vector.shape_cast %169 : vector<1x8x1xf32> to vector<8x1xf32>
    %171 = vector.shape_cast %168 : vector<8x1xf32> to vector<1x8x1xf32>
    tpu.vector_store %arg8[%c3_140, %c0_141, %c0_142], %171 {strides = array<i32>} : memref<4x8x1xf32, #tpu.memory_space<vmem>>, vector<1x8x1xf32>,
    %c3_143 = arith.constant 3 : index
    %c0_144 = arith.constant 0 : index
    %c0_145 = arith.constant 0 : index
    %172 = vector.load %arg9[%c3_143, %c0_144, %c0_145] : memref<4x8x8xf32, #tpu.memory_space<vmem>>, vector<1x8x8xf32>
    %173 = vector.shape_cast %172 : vector<1x8x8xf32> to vector<8x8xf32>
    %174 = vector.broadcast %159 : vector<8x1xf32> to vector<8x8xf32>
    %175 = arith.mulf %174, %173 : vector<8x8xf32>
    %176 = arith.truncf %162 : vector<8x8xf32> to vector<8x8xbf16>
    %cst_146 = arith.constant dense<0.000000e+00> : vector<8x8xf32>
    %177 = tpu.matmul %176, %146, %cst_146 {dimension_numbers = #tpu.dot_dimension_numbers<[1], [0], [0], [1], [0, 0, 1, 1], [], []>} : vector<8x8xbf16>, vector<8x8xbf16>, vector<8x8xf32> -> vector<8x8xf32>
    %178 = arith.addf %175, %177 : vector<8x8xf32>
    %c3_147 = arith.constant 3 : index
    %c0_148 = arith.constant 0 : index
    %c0_149 = arith.constant 0 : index
    %179 = vector.load %arg9[%c3_147, %c0_148, %c0_149] : memref<4x8x8xf32, #tpu.memory_space<vmem>>, vector<1x8x8xf32>
    %180 = vector.shape_cast %179 : vector<1x8x8xf32> to vector<8x8xf32>
    %181 = vector.shape_cast %178 : vector<8x8xf32> to vector<1x8x8xf32>
    tpu.vector_store %arg9[%c3_147, %c0_148, %c0_149], %181 {strides = array<i32>} : memref<4x8x8xf32, #tpu.memory_space<vmem>>, vector<1x8x8xf32>,
    %c3_150 = arith.constant 3 : index
    %c0_151 = arith.constant 0 : index
    %c0_152 = arith.constant 0 : index
    %182 = vector.load %arg7[%c3_150, %c0_151, %c0_152] : memref<4x8x1xf32, #tpu.memory_space<vmem>>, vector<1x8x1xf32>
    %183 = vector.shape_cast %182 : vector<1x8x1xf32> to vector<8x1xf32>
    %184 = vector.shape_cast %157 : vector<8x1xf32> to vector<1x8x1xf32>
    tpu.vector_store %arg7[%c3_150, %c0_151, %c0_152], %184 {strides = array<i32>} : memref<4x8x1xf32, #tpu.memory_space<vmem>>, vector<1x8x1xf32>,
    %c0_i32_153 = arith.constant 0 : i32
    %185 = arith.cmpi eq, %arg1, %c0_i32_153 : i32
    %186 = arith.extui %185 : i1 to i32
    %c0_i32_154 = arith.constant 0 : i32
    %187 = arith.cmpi ne, %186, %c0_i32_154 : i32
    scf.if %187 {
      %c0_155 = arith.constant 0 : index
      %c0_156 = arith.constant 0 : index
      %c0_157 = arith.constant 0 : index
      %188 = vector.load %arg9[%c0_155, %c0_156, %c0_157] : memref<4x8x8xf32, #tpu.memory_space<vmem>>, vector<1x8x8xf32>
      %189 = vector.shape_cast %188 : vector<1x8x8xf32> to vector<8x8xf32>
      %c0_158 = arith.constant 0 : index
      %c0_159 = arith.constant 0 : index
      %c0_160 = arith.constant 0 : index
      %190 = vector.load %arg8[%c0_158, %c0_159, %c0_160] : memref<4x8x1xf32, #tpu.memory_space<vmem>>, vector<1x8x1xf32>
      %191 = vector.shape_cast %190 : vector<1x8x1xf32> to vector<8x1xf32>
      %192 = tpu.reciprocal %191 {approx = true} : vector<8x1xf32> -> vector<8x1xf32>
      %193 = vector.broadcast %192 : vector<8x1xf32> to vector<8x8xf32>
      %194 = arith.mulf %189, %193 : vector<8x8xf32>
      %195 = arith.truncf %194 : vector<8x8xf32> to vector<8x8xbf16>
      %c0_161 = arith.constant 0 : index
      %c0_162 = arith.constant 0 : index
      %c0_163 = arith.constant 0 : index
      %196 = vector.load %arg6[%c0_161, %c0_162, %c0_163] : memref<1x8x32xbf16, #tpu.memory_space<vmem>>, vector<1x8x8xbf16>
      %197 = vector.shape_cast %196 : vector<1x8x8xbf16> to vector<8x8xbf16>
      %198 = vector.shape_cast %195 : vector<8x8xbf16> to vector<1x8x8xbf16>
      tpu.vector_store %arg6[%c0_161, %c0_162, %c0_163], %198 {strides = array<i32>} : memref<1x8x32xbf16, #tpu.memory_space<vmem>>, vector<1x8x8xbf16>,
      %c1_164 = arith.constant 1 : index
      %c0_165 = arith.constant 0 : index
      %c0_166 = arith.constant 0 : index
      %199 = vector.load %arg9[%c1_164, %c0_165, %c0_166] : memref<4x8x8xf32, #tpu.memory_space<vmem>>, vector<1x8x8xf32>
      %200 = vector.shape_cast %199 : vector<1x8x8xf32> to vector<8x8xf32>
      %c1_167 = arith.constant 1 : index
      %c0_168 = arith.constant 0 : index
      %c0_169 = arith.constant 0 : index
      %201 = vector.load %arg8[%c1_167, %c0_168, %c0_169] : memref<4x8x1xf32, #tpu.memory_space<vmem>>, vector<1x8x1xf32>
      %202 = vector.shape_cast %201 : vector<1x8x1xf32> to vector<8x1xf32>
      %203 = tpu.reciprocal %202 {approx = true} : vector<8x1xf32> -> vector<8x1xf32>
      %204 = vector.broadcast %203 : vector<8x1xf32> to vector<8x8xf32>
      %205 = arith.mulf %200, %204 : vector<8x8xf32>
      %206 = arith.truncf %205 : vector<8x8xf32> to vector<8x8xbf16>
      %c0_170 = arith.constant 0 : index
      %c0_171 = arith.constant 0 : index
      %c8 = arith.constant 8 : index
      %207 = vector.load %arg6[%c0_170, %c0_171, %c8] : memref<1x8x32xbf16, #tpu.memory_space<vmem>>, vector<1x8x8xbf16>
      %208 = vector.shape_cast %207 : vector<1x8x8xbf16> to vector<8x8xbf16>
      %209 = vector.shape_cast %206 : vector<8x8xbf16> to vector<1x8x8xbf16>
      tpu.vector_store %arg6[%c0_170, %c0_171, %c8], %209 {strides = array<i32>} : memref<1x8x32xbf16, #tpu.memory_space<vmem>>, vector<1x8x8xbf16>,
      %c2_172 = arith.constant 2 : index
      %c0_173 = arith.constant 0 : index
      %c0_174 = arith.constant 0 : index
      %210 = vector.load %arg9[%c2_172, %c0_173, %c0_174] : memref<4x8x8xf32, #tpu.memory_space<vmem>>, vector<1x8x8xf32>
      %211 = vector.shape_cast %210 : vector<1x8x8xf32> to vector<8x8xf32>
      %c2_175 = arith.constant 2 : index
      %c0_176 = arith.constant 0 : index
      %c0_177 = arith.constant 0 : index
      %212 = vector.load %arg8[%c2_175, %c0_176, %c0_177] : memref<4x8x1xf32, #tpu.memory_space<vmem>>, vector<1x8x1xf32>
      %213 = vector.shape_cast %212 : vector<1x8x1xf32> to vector<8x1xf32>
      %214 = tpu.reciprocal %213 {approx = true} : vector<8x1xf32> -> vector<8x1xf32>
      %215 = vector.broadcast %214 : vector<8x1xf32> to vector<8x8xf32>
      %216 = arith.mulf %211, %215 : vector<8x8xf32>
      %217 = arith.truncf %216 : vector<8x8xf32> to vector<8x8xbf16>
      %c0_178 = arith.constant 0 : index
      %c0_179 = arith.constant 0 : index
      %c16 = arith.constant 16 : index
      %218 = vector.load %arg6[%c0_178, %c0_179, %c16] : memref<1x8x32xbf16, #tpu.memory_space<vmem>>, vector<1x8x8xbf16>
      %219 = vector.shape_cast %218 : vector<1x8x8xbf16> to vector<8x8xbf16>
      %220 = vector.shape_cast %217 : vector<8x8xbf16> to vector<1x8x8xbf16>
      tpu.vector_store %arg6[%c0_178, %c0_179, %c16], %220 {strides = array<i32>} : memref<1x8x32xbf16, #tpu.memory_space<vmem>>, vector<1x8x8xbf16>,
      %c3_180 = arith.constant 3 : index
      %c0_181 = arith.constant 0 : index
      %c0_182 = arith.constant 0 : index
      %221 = vector.load %arg9[%c3_180, %c0_181, %c0_182] : memref<4x8x8xf32, #tpu.memory_space<vmem>>, vector<1x8x8xf32>
      %222 = vector.shape_cast %221 : vector<1x8x8xf32> to vector<8x8xf32>
      %c3_183 = arith.constant 3 : index
      %c0_184 = arith.constant 0 : index
      %c0_185 = arith.constant 0 : index
      %223 = vector.load %arg8[%c3_183, %c0_184, %c0_185] : memref<4x8x1xf32, #tpu.memory_space<vmem>>, vector<1x8x1xf32>
      %224 = vector.shape_cast %223 : vector<1x8x1xf32> to vector<8x1xf32>
      %225 = tpu.reciprocal %224 {approx = true} : vector<8x1xf32> -> vector<8x1xf32>
      %226 = vector.broadcast %225 : vector<8x1xf32> to vector<8x8xf32>
      %227 = arith.mulf %222, %226 : vector<8x8xf32>
      %228 = arith.truncf %227 : vector<8x8xf32> to vector<8x8xbf16>
      %c0_186 = arith.constant 0 : index
      %c0_187 = arith.constant 0 : index
      %c24 = arith.constant 24 : index
      %229 = vector.load %arg6[%c0_186, %c0_187, %c24] : memref<1x8x32xbf16, #tpu.memory_space<vmem>>, vector<1x8x8xbf16>
      %230 = vector.shape_cast %229 : vector<1x8x8xbf16> to vector<8x8xbf16>
      %231 = vector.shape_cast %228 : vector<8x8xbf16> to vector<1x8x8xbf16>
      tpu.vector_store %arg6[%c0_186, %c0_187, %c24], %231 {strides = array<i32>} : memref<1x8x32xbf16, #tpu.memory_space<vmem>>, vector<1x8x8xbf16>,
    } else {
    }
    return
  }
  func.func @transform_0(%arg0: i32, %arg1: i32) -> (i32, i32, i32, i32, i32) {
    %c0_i32 = arith.constant 0 : i32
    %c0_i32_0 = arith.constant 0 : i32
    %c0_i32_1 = arith.constant 0 : i32
    %c0_i32_2 = arith.constant 0 : i32
    %c0_i32_3 = arith.constant 0 : i32
    return %arg0, %c0_i32, %c0_i32_0, %c0_i32_1, %c0_i32_2 : i32, i32, i32, i32, i32
  }
  func.func @transform_1(%arg0: i32, %arg1: i32) -> (i32, i32, i32, i32, i32) {
    %c1_i32 = arith.constant 1 : i32
    %c0_i32 = arith.constant 0 : i32
    %c0_i32_0 = arith.constant 0 : i32
    %c0_i32_1 = arith.constant 0 : i32
    return %arg0, %arg1, %c1_i32, %c0_i32, %c0_i32_0 : i32, i32, i32, i32, i32
  }
  func.func @transform_2(%arg0: i32, %arg1: i32) -> (i32, i32, i32, i32, i32) {
    %c2_i32 = arith.constant 2 : i32
    %c0_i32 = arith.constant 0 : i32
    %c0_i32_0 = arith.constant 0 : i32
    %c0_i32_1 = arith.constant 0 : i32
    return %arg0, %arg1, %c2_i32, %c0_i32, %c0_i32_0 : i32, i32, i32, i32, i32
  }
  func.func @transform_3(%arg0: i32, %arg1: i32) -> (i32, i32, i32) {
    %c0_i32 = arith.constant 0 : i32
    %c0_i32_0 = arith.constant 0 : i32
    return %arg0, %c0_i32, %arg1 : i32, i32, i32
  }
  func.func @transform_4(%arg0: i32, %arg1: i32) -> (i32, i32, i32) {
    %c0_i32 = arith.constant 0 : i32
    %c0_i32_0 = arith.constant 0 : i32
    %c0_i32_1 = arith.constant 0 : i32
    return %arg0, %c0_i32, %c0_i32_0 : i32, i32, i32
  }
}

module attributes {stable_mosaic.version = 11 : i64} {
  func.func @_linear_ln_kernel(%arg0: i32, %arg1: i32, %arg2: i32, %arg3: memref<16x32xbf16, #tpu.memory_space<vmem>>, %arg4: memref<32x32xbf16, #tpu.memory_space<vmem>>, %arg5: memref<1x32xf32, #tpu.memory_space<vmem>>, %arg6: memref<16x32xbf16, #tpu.memory_space<vmem>>, %arg7: memref<1x32xf32, #tpu.memory_space<vmem>>, %arg8: memref<1x32xf32, #tpu.memory_space<vmem>>, %arg9: memref<16x32xbf16, #tpu.memory_space<vmem>>, %arg10: memref<16x32xf32, #tpu.memory_space<vmem>>) attributes {dimension_semantics = [#tpu.dimension_semantics<parallel>, #tpu.dimension_semantics<parallel>, #tpu.dimension_semantics<arbitrary>], iteration_bounds = array<i64: 1, 1, 1>, scalar_prefetch = 0 : i64, scratch_operands = 1 : i64, tpu.core_type = #tpu.core_type<tc>, window_params = [{transform_indices = @transform_0, window_bounds = array<i64: 16, 32>}, {transform_indices = @transform_1, window_bounds = array<i64: 32, 32>}, {transform_indices = @transform_2, window_bounds = array<i64: 1, 32>}, {transform_indices = @transform_3, window_bounds = array<i64: 16, 32>}, {transform_indices = @transform_4, window_bounds = array<i64: 1, 32>}, {transform_indices = @transform_5, window_bounds = array<i64: 1, 32>}, {transform_indices = @transform_6, window_bounds = array<i64: 16, 32>}]} {
    %c0_i32 = arith.constant 0 : i32
    %0 = arith.cmpi eq, %arg2, %c0_i32 : i32
    %1 = arith.extui %0 : i1 to i32
    %c0_i32_0 = arith.constant 0 : i32
    %2 = arith.cmpi ne, %1, %c0_i32_0 : i32
    scf.if %2 {
      %cst_10 = arith.constant 0.000000e+00 : f32
      %12 = vector.broadcast %cst_10 : f32 to vector<16x32xf32>
      %c0_11 = arith.constant 0 : index
      %c0_12 = arith.constant 0 : index
      %13 = vector.load %arg10[%c0_11, %c0_12] : memref<16x32xf32, #tpu.memory_space<vmem>>, vector<16x32xf32>
      tpu.vector_store %arg10[%c0_11, %c0_12], %12 {strides = array<i32>} : memref<16x32xf32, #tpu.memory_space<vmem>>, vector<16x32xf32>,
    } else {
    }
    %c0 = arith.constant 0 : index
    %c0_1 = arith.constant 0 : index
    %3 = vector.load %arg10[%c0, %c0_1] : memref<16x32xf32, #tpu.memory_space<vmem>>, vector<16x32xf32>
    %c0_2 = arith.constant 0 : index
    %c0_3 = arith.constant 0 : index
    %4 = vector.load %arg3[%c0_2, %c0_3] : memref<16x32xbf16, #tpu.memory_space<vmem>>, vector<16x32xbf16>
    %c0_4 = arith.constant 0 : index
    %c0_5 = arith.constant 0 : index
    %5 = vector.load %arg4[%c0_4, %c0_5] : memref<32x32xbf16, #tpu.memory_space<vmem>>, vector<32x32xbf16>
    %cst = arith.constant dense<0.000000e+00> : vector<16x32xf32>
    %6 = tpu.matmul %4, %5, %cst {dimension_numbers = #tpu.dot_dimension_numbers<[1], [0], [0], [1], [0, 0, 1, 1], [], []>} : vector<16x32xbf16>, vector<32x32xbf16>, vector<16x32xf32> -> vector<16x32xf32>
    %7 = arith.addf %3, %6 : vector<16x32xf32>
    %c0_6 = arith.constant 0 : index
    %c0_7 = arith.constant 0 : index
    %8 = vector.load %arg10[%c0_6, %c0_7] : memref<16x32xf32, #tpu.memory_space<vmem>>, vector<16x32xf32>
    tpu.vector_store %arg10[%c0_6, %c0_7], %7 {strides = array<i32>} : memref<16x32xf32, #tpu.memory_space<vmem>>, vector<16x32xf32>,
    %c0_i32_8 = arith.constant 0 : i32
    %9 = arith.cmpi eq, %arg2, %c0_i32_8 : i32
    %10 = arith.extui %9 : i1 to i32
    %c0_i32_9 = arith.constant 0 : i32
    %11 = arith.cmpi ne, %10, %c0_i32_9 : i32
    scf.if %11 {
      %c0_10 = arith.constant 0 : index
      %c0_11 = arith.constant 0 : index
      %12 = vector.load %arg10[%c0_10, %c0_11] : memref<16x32xf32, #tpu.memory_space<vmem>>, vector<16x32xf32>
      %c0_12 = arith.constant 0 : index
      %c0_13 = arith.constant 0 : index
      %13 = vector.load %arg5[%c0_12, %c0_13] : memref<1x32xf32, #tpu.memory_space<vmem>>, vector<1x32xf32>
      %14 = vector.broadcast %13 : vector<1x32xf32> to vector<16x32xf32>
      %15 = arith.addf %12, %14 : vector<16x32xf32>
      %c0_14 = arith.constant 0 : index
      %c0_15 = arith.constant 0 : index
      %16 = vector.load %arg6[%c0_14, %c0_15] : memref<16x32xbf16, #tpu.memory_space<vmem>>, vector<16x32xbf16>
      %17 = arith.extf %16 : vector<16x32xbf16> to vector<16x32xf32>
      %18 = arith.addf %15, %17 : vector<16x32xf32>
      %c0_16 = arith.constant 0 : index
      %c0_17 = arith.constant 0 : index
      %19 = vector.load %arg7[%c0_16, %c0_17] : memref<1x32xf32, #tpu.memory_space<vmem>>, vector<1x32xf32>
      %c0_18 = arith.constant 0 : index
      %c0_19 = arith.constant 0 : index
      %20 = vector.load %arg8[%c0_18, %c0_19] : memref<1x32xf32, #tpu.memory_space<vmem>>, vector<1x32xf32>
      %cst_20 = arith.constant dense<0.000000e+00> : vector<16xf32>
      %21 = vector.multi_reduction <add>, %18, %cst_20 [1] : vector<16x32xf32> to vector<16xf32>
      %22 = vector.shape_cast %21 : vector<16xf32> to vector<16x1xf32>
      %cst_21 = arith.constant 3.200000e+01 : f32
      %23 = vector.broadcast %cst_21 : f32 to vector<16x1xf32>
      %24 = arith.divf %22, %23 : vector<16x1xf32>
      %25 = vector.broadcast %24 : vector<16x1xf32> to vector<16x32xf32>
      %26 = arith.subf %18, %25 : vector<16x32xf32>
      %27 = vector.broadcast %24 : vector<16x1xf32> to vector<16x32xf32>
      %28 = arith.subf %18, %27 : vector<16x32xf32>
      %29 = arith.mulf %26, %28 : vector<16x32xf32>
      %cst_22 = arith.constant dense<0.000000e+00> : vector<16xf32>
      %30 = vector.multi_reduction <add>, %29, %cst_22 [1] : vector<16x32xf32> to vector<16xf32>
      %31 = vector.shape_cast %30 : vector<16xf32> to vector<16x1xf32>
      %cst_23 = arith.constant 3.200000e+01 : f32
      %32 = vector.broadcast %cst_23 : f32 to vector<16x1xf32>
      %33 = arith.divf %31, %32 : vector<16x1xf32>
      %34 = vector.broadcast %24 : vector<16x1xf32> to vector<16x32xf32>
      %35 = arith.subf %18, %34 : vector<16x32xf32>
      %cst_24 = arith.constant 9.99999996E-13 : f32
      %36 = vector.broadcast %cst_24 : f32 to vector<16x1xf32>
      %37 = arith.addf %33, %36 : vector<16x1xf32>
      %38 = math.rsqrt %37 : vector<16x1xf32>
      %39 = vector.broadcast %38 : vector<16x1xf32> to vector<16x32xf32>
      %40 = arith.mulf %35, %39 : vector<16x32xf32>
      %41 = vector.broadcast %19 : vector<1x32xf32> to vector<16x32xf32>
      %42 = arith.mulf %40, %41 : vector<16x32xf32>
      %43 = vector.broadcast %20 : vector<1x32xf32> to vector<16x32xf32>
      %44 = arith.addf %42, %43 : vector<16x32xf32>
      %45 = arith.truncf %44 : vector<16x32xf32> to vector<16x32xbf16>
      %c0_25 = arith.constant 0 : index
      %c0_26 = arith.constant 0 : index
      %46 = vector.load %arg9[%c0_25, %c0_26] : memref<16x32xbf16, #tpu.memory_space<vmem>>, vector<16x32xbf16>
      tpu.vector_store %arg9[%c0_25, %c0_26], %45 {strides = array<i32>} : memref<16x32xbf16, #tpu.memory_space<vmem>>, vector<16x32xbf16>,
    } else {
    }
    return
  }
  func.func @transform_0(%arg0: i32, %arg1: i32, %arg2: i32) -> (i32, i32) {
    %c0_i32 = arith.constant 0 : i32
    return %arg0, %arg2 : i32, i32
  }
  func.func @transform_1(%arg0: i32, %arg1: i32, %arg2: i32) -> (i32, i32) {
    %c0_i32 = arith.constant 0 : i32
    return %arg2, %arg1 : i32, i32
  }
  func.func @transform_2(%arg0: i32, %arg1: i32, %arg2: i32) -> (i32, i32) {
    %c0_i32 = arith.constant 0 : i32
    %c0_i32_0 = arith.constant 0 : i32
    return %c0_i32, %arg1 : i32, i32
  }
  func.func @transform_3(%arg0: i32, %arg1: i32, %arg2: i32) -> (i32, i32) {
    %c0_i32 = arith.constant 0 : i32
    return %arg0, %arg1 : i32, i32
  }
  func.func @transform_4(%arg0: i32, %arg1: i32, %arg2: i32) -> (i32, i32) {
    %c0_i32 = arith.constant 0 : i32
    %c0_i32_0 = arith.constant 0 : i32
    return %c0_i32, %arg1 : i32, i32
  }
  func.func @transform_5(%arg0: i32, %arg1: i32, %arg2: i32) -> (i32, i32) {
    %c0_i32 = arith.constant 0 : i32
    %c0_i32_0 = arith.constant 0 : i32
    return %c0_i32, %arg1 : i32, i32
  }
  func.func @transform_6(%arg0: i32, %arg1: i32, %arg2: i32) -> (i32, i32) {
    %c0_i32 = arith.constant 0 : i32
    return %arg0, %arg1 : i32, i32
  }
}

module attributes {stable_mosaic.version = 11 : i64} {
  func.func @_linear_kernel(%arg0: i32, %arg1: i32, %arg2: i32, %arg3: memref<16x32xbf16, #tpu.memory_space<vmem>>, %arg4: memref<32x64xbf16, #tpu.memory_space<vmem>>, %arg5: memref<1x64xf32, #tpu.memory_space<vmem>>, %arg6: memref<16x64xbf16, #tpu.memory_space<vmem>>, %arg7: memref<16x64xf32, #tpu.memory_space<vmem>>) attributes {dimension_semantics = [#tpu.dimension_semantics<parallel>, #tpu.dimension_semantics<parallel>, #tpu.dimension_semantics<arbitrary>], iteration_bounds = array<i64: 1, 1, 1>, scalar_prefetch = 0 : i64, scratch_operands = 1 : i64, tpu.core_type = #tpu.core_type<tc>, window_params = [{transform_indices = @transform_0, window_bounds = array<i64: 16, 32>}, {transform_indices = @transform_1, window_bounds = array<i64: 32, 64>}, {transform_indices = @transform_2, window_bounds = array<i64: 1, 64>}, {transform_indices = @transform_3, window_bounds = array<i64: 16, 64>}]} {
    %c0_i32 = arith.constant 0 : i32
    %0 = arith.cmpi eq, %arg2, %c0_i32 : i32
    %1 = arith.extui %0 : i1 to i32
    %c0_i32_0 = arith.constant 0 : i32
    %2 = arith.cmpi ne, %1, %c0_i32_0 : i32
    scf.if %2 {
      %cst_10 = arith.constant 0.000000e+00 : f32
      %12 = vector.broadcast %cst_10 : f32 to vector<16x64xf32>
      %c0_11 = arith.constant 0 : index
      %c0_12 = arith.constant 0 : index
      %13 = vector.load %arg7[%c0_11, %c0_12] : memref<16x64xf32, #tpu.memory_space<vmem>>, vector<16x64xf32>
      tpu.vector_store %arg7[%c0_11, %c0_12], %12 {strides = array<i32>} : memref<16x64xf32, #tpu.memory_space<vmem>>, vector<16x64xf32>,
    } else {
    }
    %c0 = arith.constant 0 : index
    %c0_1 = arith.constant 0 : index
    %3 = vector.load %arg7[%c0, %c0_1] : memref<16x64xf32, #tpu.memory_space<vmem>>, vector<16x64xf32>
    %c0_2 = arith.constant 0 : index
    %c0_3 = arith.constant 0 : index
    %4 = vector.load %arg3[%c0_2, %c0_3] : memref<16x32xbf16, #tpu.memory_space<vmem>>, vector<16x32xbf16>
    %c0_4 = arith.constant 0 : index
    %c0_5 = arith.constant 0 : index
    %5 = vector.load %arg4[%c0_4, %c0_5] : memref<32x64xbf16, #tpu.memory_space<vmem>>, vector<32x64xbf16>
    %cst = arith.constant dense<0.000000e+00> : vector<16x64xf32>
    %6 = tpu.matmul %4, %5, %cst {dimension_numbers = #tpu.dot_dimension_numbers<[1], [0], [0], [1], [0, 0, 1, 1], [], []>} : vector<16x32xbf16>, vector<32x64xbf16>, vector<16x64xf32> -> vector<16x64xf32>
    %7 = arith.addf %3, %6 : vector<16x64xf32>
    %c0_6 = arith.constant 0 : index
    %c0_7 = arith.constant 0 : index
    %8 = vector.load %arg7[%c0_6, %c0_7] : memref<16x64xf32, #tpu.memory_space<vmem>>, vector<16x64xf32>
    tpu.vector_store %arg7[%c0_6, %c0_7], %7 {strides = array<i32>} : memref<16x64xf32, #tpu.memory_space<vmem>>, vector<16x64xf32>,
    %c0_i32_8 = arith.constant 0 : i32
    %9 = arith.cmpi eq, %arg2, %c0_i32_8 : i32
    %10 = arith.extui %9 : i1 to i32
    %c0_i32_9 = arith.constant 0 : i32
    %11 = arith.cmpi ne, %10, %c0_i32_9 : i32
    scf.if %11 {
      %c0_10 = arith.constant 0 : index
      %c0_11 = arith.constant 0 : index
      %12 = vector.load %arg7[%c0_10, %c0_11] : memref<16x64xf32, #tpu.memory_space<vmem>>, vector<16x64xf32>
      %c0_12 = arith.constant 0 : index
      %c0_13 = arith.constant 0 : index
      %13 = vector.load %arg5[%c0_12, %c0_13] : memref<1x64xf32, #tpu.memory_space<vmem>>, vector<1x64xf32>
      %14 = vector.broadcast %13 : vector<1x64xf32> to vector<16x64xf32>
      %15 = arith.addf %12, %14 : vector<16x64xf32>
      %cst_14 = arith.constant 5.000000e-01 : f32
      %16 = vector.broadcast %cst_14 : f32 to vector<16x64xf32>
      %17 = arith.mulf %16, %15 : vector<16x64xf32>
      %cst_15 = arith.constant 4.471500e-02 : f32
      %18 = vector.broadcast %cst_15 : f32 to vector<16x64xf32>
      %19 = arith.mulf %18, %15 : vector<16x64xf32>
      %20 = arith.mulf %19, %15 : vector<16x64xf32>
      %21 = arith.mulf %20, %15 : vector<16x64xf32>
      %22 = arith.addf %15, %21 : vector<16x64xf32>
      %cst_16 = arith.constant 0.797884583 : f32
      %23 = vector.broadcast %cst_16 : f32 to vector<16x64xf32>
      %24 = arith.mulf %23, %22 : vector<16x64xf32>
      %25 = math.tanh %24 : vector<16x64xf32>
      %cst_17 = arith.constant 1.000000e+00 : f32
      %26 = vector.broadcast %cst_17 : f32 to vector<16x64xf32>
      %27 = arith.addf %26, %25 : vector<16x64xf32>
      %28 = arith.mulf %17, %27 : vector<16x64xf32>
      %29 = arith.truncf %28 : vector<16x64xf32> to vector<16x64xbf16>
      %c0_18 = arith.constant 0 : index
      %c0_19 = arith.constant 0 : index
      %30 = vector.load %arg6[%c0_18, %c0_19] : memref<16x64xbf16, #tpu.memory_space<vmem>>, vector<16x64xbf16>
      tpu.vector_store %arg6[%c0_18, %c0_19], %29 {strides = array<i32>} : memref<16x64xbf16, #tpu.memory_space<vmem>>, vector<16x64xbf16>,
    } else {
    }
    return
  }
  func.func @transform_0(%arg0: i32, %arg1: i32, %arg2: i32) -> (i32, i32) {
    %c0_i32 = arith.constant 0 : i32
    return %arg0, %arg2 : i32, i32
  }
  func.func @transform_1(%arg0: i32, %arg1: i32, %arg2: i32) -> (i32, i32) {
    %c0_i32 = arith.constant 0 : i32
    return %arg2, %arg1 : i32, i32
  }
  func.func @transform_2(%arg0: i32, %arg1: i32, %arg2: i32) -> (i32, i32) {
    %c0_i32 = arith.constant 0 : i32
    %c0_i32_0 = arith.constant 0 : i32
    return %c0_i32, %arg1 : i32, i32
  }
  func.func @transform_3(%arg0: i32, %arg1: i32, %arg2: i32) -> (i32, i32) {
    %c0_i32 = arith.constant 0 : i32
    return %arg0, %arg1 : i32, i32
  }
}

module attributes {stable_mosaic.version = 11 : i64} {
  func.func @_linear_ln_kernel(%arg0: i32, %arg1: i32, %arg2: i32, %arg3: memref<16x64xbf16, #tpu.memory_space<vmem>>, %arg4: memref<64x32xbf16, #tpu.memory_space<vmem>>, %arg5: memref<1x32xf32, #tpu.memory_space<vmem>>, %arg6: memref<16x32xbf16, #tpu.memory_space<vmem>>, %arg7: memref<1x32xf32, #tpu.memory_space<vmem>>, %arg8: memref<1x32xf32, #tpu.memory_space<vmem>>, %arg9: memref<16x32xbf16, #tpu.memory_space<vmem>>, %arg10: memref<16x32xf32, #tpu.memory_space<vmem>>) attributes {dimension_semantics = [#tpu.dimension_semantics<parallel>, #tpu.dimension_semantics<parallel>, #tpu.dimension_semantics<arbitrary>], iteration_bounds = array<i64: 1, 1, 1>, scalar_prefetch = 0 : i64, scratch_operands = 1 : i64, tpu.core_type = #tpu.core_type<tc>, window_params = [{transform_indices = @transform_0, window_bounds = array<i64: 16, 64>}, {transform_indices = @transform_1, window_bounds = array<i64: 64, 32>}, {transform_indices = @transform_2, window_bounds = array<i64: 1, 32>}, {transform_indices = @transform_3, window_bounds = array<i64: 16, 32>}, {transform_indices = @transform_4, window_bounds = array<i64: 1, 32>}, {transform_indices = @transform_5, window_bounds = array<i64: 1, 32>}, {transform_indices = @transform_6, window_bounds = array<i64: 16, 32>}]} {
    %c0_i32 = arith.constant 0 : i32
    %0 = arith.cmpi eq, %arg2, %c0_i32 : i32
    %1 = arith.extui %0 : i1 to i32
    %c0_i32_0 = arith.constant 0 : i32
    %2 = arith.cmpi ne, %1, %c0_i32_0 : i32
    scf.if %2 {
      %cst_10 = arith.constant 0.000000e+00 : f32
      %12 = vector.broadcast %cst_10 : f32 to vector<16x32xf32>
      %c0_11 = arith.constant 0 : index
      %c0_12 = arith.constant 0 : index
      %13 = vector.load %arg10[%c0_11, %c0_12] : memref<16x32xf32, #tpu.memory_space<vmem>>, vector<16x32xf32>
      tpu.vector_store %arg10[%c0_11, %c0_12], %12 {strides = array<i32>} : memref<16x32xf32, #tpu.memory_space<vmem>>, vector<16x32xf32>,
    } else {
    }
    %c0 = arith.constant 0 : index
    %c0_1 = arith.constant 0 : index
    %3 = vector.load %arg10[%c0, %c0_1] : memref<16x32xf32, #tpu.memory_space<vmem>>, vector<16x32xf32>
    %c0_2 = arith.constant 0 : index
    %c0_3 = arith.constant 0 : index
    %4 = vector.load %arg3[%c0_2, %c0_3] : memref<16x64xbf16, #tpu.memory_space<vmem>>, vector<16x64xbf16>
    %c0_4 = arith.constant 0 : index
    %c0_5 = arith.constant 0 : index
    %5 = vector.load %arg4[%c0_4, %c0_5] : memref<64x32xbf16, #tpu.memory_space<vmem>>, vector<64x32xbf16>
    %cst = arith.constant dense<0.000000e+00> : vector<16x32xf32>
    %6 = tpu.matmul %4, %5, %cst {dimension_numbers = #tpu.dot_dimension_numbers<[1], [0], [0], [1], [0, 0, 1, 1], [], []>} : vector<16x64xbf16>, vector<64x32xbf16>, vector<16x32xf32> -> vector<16x32xf32>
    %7 = arith.addf %3, %6 : vector<16x32xf32>
    %c0_6 = arith.constant 0 : index
    %c0_7 = arith.constant 0 : index
    %8 = vector.load %arg10[%c0_6, %c0_7] : memref<16x32xf32, #tpu.memory_space<vmem>>, vector<16x32xf32>
    tpu.vector_store %arg10[%c0_6, %c0_7], %7 {strides = array<i32>} : memref<16x32xf32, #tpu.memory_space<vmem>>, vector<16x32xf32>,
    %c0_i32_8 = arith.constant 0 : i32
    %9 = arith.cmpi eq, %arg2, %c0_i32_8 : i32
    %10 = arith.extui %9 : i1 to i32
    %c0_i32_9 = arith.constant 0 : i32
    %11 = arith.cmpi ne, %10, %c0_i32_9 : i32
    scf.if %11 {
      %c0_10 = arith.constant 0 : index
      %c0_11 = arith.constant 0 : index
      %12 = vector.load %arg10[%c0_10, %c0_11] : memref<16x32xf32, #tpu.memory_space<vmem>>, vector<16x32xf32>
      %c0_12 = arith.constant 0 : index
      %c0_13 = arith.constant 0 : index
      %13 = vector.load %arg5[%c0_12, %c0_13] : memref<1x32xf32, #tpu.memory_space<vmem>>, vector<1x32xf32>
      %14 = vector.broadcast %13 : vector<1x32xf32> to vector<16x32xf32>
      %15 = arith.addf %12, %14 : vector<16x32xf32>
      %c0_14 = arith.constant 0 : index
      %c0_15 = arith.constant 0 : index
      %16 = vector.load %arg6[%c0_14, %c0_15] : memref<16x32xbf16, #tpu.memory_space<vmem>>, vector<16x32xbf16>
      %17 = arith.extf %16 : vector<16x32xbf16> to vector<16x32xf32>
      %18 = arith.addf %15, %17 : vector<16x32xf32>
      %c0_16 = arith.constant 0 : index
      %c0_17 = arith.constant 0 : index
      %19 = vector.load %arg7[%c0_16, %c0_17] : memref<1x32xf32, #tpu.memory_space<vmem>>, vector<1x32xf32>
      %c0_18 = arith.constant 0 : index
      %c0_19 = arith.constant 0 : index
      %20 = vector.load %arg8[%c0_18, %c0_19] : memref<1x32xf32, #tpu.memory_space<vmem>>, vector<1x32xf32>
      %cst_20 = arith.constant dense<0.000000e+00> : vector<16xf32>
      %21 = vector.multi_reduction <add>, %18, %cst_20 [1] : vector<16x32xf32> to vector<16xf32>
      %22 = vector.shape_cast %21 : vector<16xf32> to vector<16x1xf32>
      %cst_21 = arith.constant 3.200000e+01 : f32
      %23 = vector.broadcast %cst_21 : f32 to vector<16x1xf32>
      %24 = arith.divf %22, %23 : vector<16x1xf32>
      %25 = vector.broadcast %24 : vector<16x1xf32> to vector<16x32xf32>
      %26 = arith.subf %18, %25 : vector<16x32xf32>
      %27 = vector.broadcast %24 : vector<16x1xf32> to vector<16x32xf32>
      %28 = arith.subf %18, %27 : vector<16x32xf32>
      %29 = arith.mulf %26, %28 : vector<16x32xf32>
      %cst_22 = arith.constant dense<0.000000e+00> : vector<16xf32>
      %30 = vector.multi_reduction <add>, %29, %cst_22 [1] : vector<16x32xf32> to vector<16xf32>
      %31 = vector.shape_cast %30 : vector<16xf32> to vector<16x1xf32>
      %cst_23 = arith.constant 3.200000e+01 : f32
      %32 = vector.broadcast %cst_23 : f32 to vector<16x1xf32>
      %33 = arith.divf %31, %32 : vector<16x1xf32>
      %34 = vector.broadcast %24 : vector<16x1xf32> to vector<16x32xf32>
      %35 = arith.subf %18, %34 : vector<16x32xf32>
      %cst_24 = arith.constant 9.99999996E-13 : f32
      %36 = vector.broadcast %cst_24 : f32 to vector<16x1xf32>
      %37 = arith.addf %33, %36 : vector<16x1xf32>
      %38 = math.rsqrt %37 : vector<16x1xf32>
      %39 = vector.broadcast %38 : vector<16x1xf32> to vector<16x32xf32>
      %40 = arith.mulf %35, %39 : vector<16x32xf32>
      %41 = vector.broadcast %19 : vector<1x32xf32> to vector<16x32xf32>
      %42 = arith.mulf %40, %41 : vector<16x32xf32>
      %43 = vector.broadcast %20 : vector<1x32xf32> to vector<16x32xf32>
      %44 = arith.addf %42, %43 : vector<16x32xf32>
      %45 = arith.truncf %44 : vector<16x32xf32> to vector<16x32xbf16>
      %c0_25 = arith.constant 0 : index
      %c0_26 = arith.constant 0 : index
      %46 = vector.load %arg9[%c0_25, %c0_26] : memref<16x32xbf16, #tpu.memory_space<vmem>>, vector<16x32xbf16>
      tpu.vector_store %arg9[%c0_25, %c0_26], %45 {strides = array<i32>} : memref<16x32xbf16, #tpu.memory_space<vmem>>, vector<16x32xbf16>,
    } else {
    }
    return
  }
  func.func @transform_0(%arg0: i32, %arg1: i32, %arg2: i32) -> (i32, i32) {
    %c0_i32 = arith.constant 0 : i32
    return %arg0, %arg2 : i32, i32
  }
  func.func @transform_1(%arg0: i32, %arg1: i32, %arg2: i32) -> (i32, i32) {
    %c0_i32 = arith.constant 0 : i32
    return %arg2, %arg1 : i32, i32
  }
  func.func @transform_2(%arg0: i32, %arg1: i32, %arg2: i32) -> (i32, i32) {
    %c0_i32 = arith.constant 0 : i32
    %c0_i32_0 = arith.constant 0 : i32
    return %c0_i32, %arg1 : i32, i32
  }
  func.func @transform_3(%arg0: i32, %arg1: i32, %arg2: i32) -> (i32, i32) {
    %c0_i32 = arith.constant 0 : i32
    return %arg0, %arg1 : i32, i32
  }
  func.func @transform_4(%arg0: i32, %arg1: i32, %arg2: i32) -> (i32, i32) {
    %c0_i32 = arith.constant 0 : i32
    %c0_i32_0 = arith.constant 0 : i32
    return %c0_i32, %arg1 : i32, i32
  }
  func.func @transform_5(%arg0: i32, %arg1: i32, %arg2: i32) -> (i32, i32) {
    %c0_i32 = arith.constant 0 : i32
    %c0_i32_0 = arith.constant 0 : i32
    return %c0_i32, %arg1 : i32, i32
  }
  func.func @transform_6(%arg0: i32, %arg1: i32, %arg2: i32) -> (i32, i32) {
    %c0_i32 = arith.constant 0 : i32
    return %arg0, %arg1 : i32, i32
  }
}

module attributes {stable_mosaic.version = 11 : i64} {
  func.func @_head_kernel(%arg0: i32, %arg1: memref<2x32xbf16, #tpu.memory_space<vmem>>, %arg2: memref<32x32xbf16, #tpu.memory_space<vmem>>, %arg3: memref<1x32xf32, #tpu.memory_space<vmem>>, %arg4: memref<32x128xbf16, #tpu.memory_space<vmem>>, %arg5: memref<1x128xf32, #tpu.memory_space<vmem>>, %arg6: memref<2x128xf32, #tpu.memory_space<vmem>>) attributes {dimension_semantics = [#tpu.dimension_semantics<arbitrary>], iteration_bounds = array<i64: 1>, scalar_prefetch = 0 : i64, scratch_operands = 0 : i64, tpu.core_type = #tpu.core_type<tc>, window_params = [{pipeline_mode = #tpu.pipeline_mode<synchronous>, transform_indices = @transform_0, window_bounds = array<i64: 2, 32>}, {pipeline_mode = #tpu.pipeline_mode<synchronous>, transform_indices = @transform_1, window_bounds = array<i64: 32, 32>}, {pipeline_mode = #tpu.pipeline_mode<synchronous>, transform_indices = @transform_2, window_bounds = array<i64: 1, 32>}, {pipeline_mode = #tpu.pipeline_mode<synchronous>, transform_indices = @transform_3, window_bounds = array<i64: 32, 128>}, {pipeline_mode = #tpu.pipeline_mode<synchronous>, transform_indices = @transform_4, window_bounds = array<i64: 1, 128>}, {pipeline_mode = #tpu.pipeline_mode<synchronous>, transform_indices = @transform_5, window_bounds = array<i64: 2, 128>}]} {
    %c0 = arith.constant 0 : index
    %c0_0 = arith.constant 0 : index
    %0 = vector.load %arg1[%c0, %c0_0] : memref<2x32xbf16, #tpu.memory_space<vmem>>, vector<2x32xbf16>
    %c0_1 = arith.constant 0 : index
    %c0_2 = arith.constant 0 : index
    %1 = vector.load %arg2[%c0_1, %c0_2] : memref<32x32xbf16, #tpu.memory_space<vmem>>, vector<32x32xbf16>
    %cst = arith.constant dense<0.000000e+00> : vector<2x32xf32>
    %2 = tpu.matmul %0, %1, %cst {dimension_numbers = #tpu.dot_dimension_numbers<[1], [0], [0], [1], [0, 0, 1, 1], [], []>} : vector<2x32xbf16>, vector<32x32xbf16>, vector<2x32xf32> -> vector<2x32xf32>
    %c0_3 = arith.constant 0 : index
    %c0_4 = arith.constant 0 : index
    %3 = vector.load %arg3[%c0_3, %c0_4] : memref<1x32xf32, #tpu.memory_space<vmem>>, vector<1x32xf32>
    %4 = vector.broadcast %3 : vector<1x32xf32> to vector<2x32xf32>
    %5 = arith.addf %2, %4 : vector<2x32xf32>
    %6 = math.tanh %5 : vector<2x32xf32>
    %7 = arith.truncf %6 : vector<2x32xf32> to vector<2x32xbf16>
    %c0_5 = arith.constant 0 : index
    %c0_6 = arith.constant 0 : index
    %8 = vector.load %arg4[%c0_5, %c0_6] : memref<32x128xbf16, #tpu.memory_space<vmem>>, vector<32x128xbf16>
    %cst_7 = arith.constant dense<0.000000e+00> : vector<2x128xf32>
    %9 = tpu.matmul %7, %8, %cst_7 {dimension_numbers = #tpu.dot_dimension_numbers<[1], [0], [0], [1], [0, 0, 1, 1], [], []>} : vector<2x32xbf16>, vector<32x128xbf16>, vector<2x128xf32> -> vector<2x128xf32>
    %c0_8 = arith.constant 0 : index
    %c0_9 = arith.constant 0 : index
    %10 = vector.load %arg5[%c0_8, %c0_9] : memref<1x128xf32, #tpu.memory_space<vmem>>, vector<1x128xf32>
    %11 = vector.broadcast %10 : vector<1x128xf32> to vector<2x128xf32>
    %12 = arith.addf %9, %11 : vector<2x128xf32>
    %13 = arith.negf %12 : vector<2x128xf32>
    %14 = math.exp %13 : vector<2x128xf32>
    %cst_10 = arith.constant 1.000000e+00 : f32
    %15 = vector.broadcast %cst_10 : f32 to vector<2x128xf32>
    %16 = arith.addf %15, %14 : vector<2x128xf32>
    %17 = arith.divf %15, %16 : vector<2x128xf32>
    %c0_11 = arith.constant 0 : index
    %c0_12 = arith.constant 0 : index
    %18 = vector.load %arg6[%c0_11, %c0_12] : memref<2x128xf32, #tpu.memory_space<vmem>>, vector<2x128xf32>
    tpu.vector_store %arg6[%c0_11, %c0_12], %17 {strides = array<i32>} : memref<2x128xf32, #tpu.memory_space<vmem>>, vector<2x128xf32>,
    return
  }
  func.func @transform_0(%arg0: i32) -> (i32, i32) {
    %c0_i32 = arith.constant 0 : i32
    %c0_i32_0 = arith.constant 0 : i32
    %c0_i32_1 = arith.constant 0 : i32
    return %c0_i32, %c0_i32_0 : i32, i32
  }
  func.func @transform_1(%arg0: i32) -> (i32, i32) {
    %c0_i32 = arith.constant 0 : i32
    %c0_i32_0 = arith.constant 0 : i32
    %c0_i32_1 = arith.constant 0 : i32
    return %c0_i32, %c0_i32_0 : i32, i32
  }
  func.func @transform_2(%arg0: i32) -> (i32, i32) {
    %c0_i32 = arith.constant 0 : i32
    %c0_i32_0 = arith.constant 0 : i32
    %c0_i32_1 = arith.constant 0 : i32
    return %c0_i32, %c0_i32_0 : i32, i32
  }
  func.func @transform_3(%arg0: i32) -> (i32, i32) {
    %c0_i32 = arith.constant 0 : i32
    %c0_i32_0 = arith.constant 0 : i32
    %c0_i32_1 = arith.constant 0 : i32
    return %c0_i32, %c0_i32_0 : i32, i32
  }
  func.func @transform_4(%arg0: i32) -> (i32, i32) {
    %c0_i32 = arith.constant 0 : i32
    %c0_i32_0 = arith.constant 0 : i32
    %c0_i32_1 = arith.constant 0 : i32
    return %c0_i32, %c0_i32_0 : i32, i32
  }
  func.func @transform_5(%arg0: i32) -> (i32, i32) {
    %c0_i32 = arith.constant 0 : i32
    %c0_i32_0 = arith.constant 0 : i32
    %c0_i32_1 = arith.constant 0 : i32
    return %c0_i32, %c0_i32_0 : i32, i32
  }
}

</mosaic_0001>

<llo_original>
// kernel: bert_forward.12
$region0: #{bert_forward.12}
  #allocation0 [shape = 'u32[]', space=smem, size = 0x4, offset = 0x4, fixed_abs, tag = 'smem constant byte address 0x4 - core index']
  #allocation1 [shape = 'u32[144,128]{1,0:T(1,128)}', space=vmem, size = 0x12000, scoped, tag = 'internal scratch']
  %s0 = inlined_call_operand.vmem [shape: bf16[16,32], index: 0, kind: input, shape index: {}]
  %s1 = inlined_call_operand.vmem [shape: f32[1,32], index: 1, kind: input, shape index: {}]
  %s2 = inlined_call_operand.vmem [shape: f32[1,32], index: 2, kind: input, shape index: {}]
  %s3 = inlined_call_operand.vmem [shape: bf16[16,32], index: 3, kind: output, shape index: {}]
  %s4 = sld [smem:[#allocation0]]
  $region22: #{bert_forward.12} parent=0
    _
  %s6 = ssub.s32 1, %s4
  %s7 = scalar_select 0, %s6, %s4
  // Predicated region
  $region2: #{bert_forward.12} parent=0 // pred_check
    _
  $region3: #{bert_forward.12} parent=0 // pred_check_branch
    %9 = sbr.rel (0) target = $region5
  $region4: #{bert_forward.12} parent=0 // pred_region
    _
  $region5: #{bert_forward.12} parent=0 // pred_fallthru
    _
  // Predicated region
  $region6: #{bert_forward.12} parent=0 // pred_check
    _
  $region7: #{bert_forward.12} parent=0 // pred_check_branch
    %11 = sbr.rel (0) target = $region9
  $region8: #{bert_forward.12} parent=0 // pred_region
    _
  $region9: #{bert_forward.12} parent=0 // pred_fallthru
    _
  // Predicated region
  $region10: #{bert_forward.12} parent=0 // pred_check
    _
  $region11: #{bert_forward.12} parent=0 // pred_check_branch
    %13 = sbr.rel (0) target = $region13
  $region12: #{bert_forward.12} parent=0 // pred_region
    _
  $region13: #{bert_forward.12} parent=0 // pred_fallthru
    _
  %v14 = vld [vmem:[%s0] sm:$0xf]
  %v15 = vld [vmem:[%s0 + $0x4] sm:$0xf]
  %v16 = vunpack.c.l.bf16 %v14
  %v17 = vunpack.c.l.bf16 %v15
  %v18 = vld [vmem:[%s1] sm:$0x1]
  %v19 = vld [vmem:[%s2] sm:$0x1]
  %vm20 = vcmask 261120
  %v21 = vsel %vm20, %v16, 0.0
  %22 = vadd.xlane.f32.xlu0 %v21
  %v23 = vpop.xlane.xlu0 %22
  %v24 = vsel %vm20, %v17, 0.0
  %25 = vadd.xlane.f32.xlu0 %v24
  %v26 = vpop.xlane.xlu0 %25
  %v27 = vrcp.pop 32.0
  %v28 = vmul.f32 %v23, %v27
  %v29 = vmul.f32 %v26, %v27
  %v30 = vsub.f32 %v16, %v28
  %v31 = vsub.f32 %v17, %v29
  %v32 = vmul.f32 %v30, %v30
  %v33 = vmul.f32 %v31, %v31
  %v34 = vsel %vm20, %v32, 0.0
  %35 = vadd.xlane.f32.xlu0 %v34
  %v36 = vpop.xlane.xlu0 %35
  %v37 = vsel %vm20, %v33, 0.0
  %38 = vadd.xlane.f32.xlu0 %v37
  %v39 = vpop.xlane.xlu0 %38
  %v40 = vmul.f32 %v36, %v27
  %v41 = vmul.f32 %v39, %v27
  %v42 = vadd.f32 %v40, 1e-12
  %v43 = vadd.f32 %v41, 1e-12
  %v44 = vrsqrt.pop %v42
  %v45 = vrsqrt.pop %v43
  %v46 = vmul.f32 %v30, %v44
  %v47 = vmul.f32 %v31, %v45
  %v49 = vlaneseq
  %v50 = vshrl.u32 %v49, 7
  %v51 = vsub.s32 0, %v50
  %v52 = vrot.slane %v18, %v51
  %v54 = vmul.f32 %v46, %v52
  %v55 = vmul.f32 %v47, %v52
  %v57 = vlaneseq
  %v58 = vshrl.u32 %v57, 7
  %v59 = vsub.s32 0, %v58
  %v60 = vrot.slane %v19, %v59
  %v62 = vadd.f32 %v54, %v60
  %v63 = vadd.f32 %v55, %v60
  %v64 = vpack.c.bf16 %v63, %v62
  %v66 = vunpack.c.l.b16 %v64
  %v67 = vunpack.c.h.b16 %v64
  %v68 = vpack.c.b16 %v66, %v66
  %v69 = vpack.c.b16 %v67, %v67
  %vm72 = vcmask 257024
  %73 = vst.msk [vmem:[%s3] sm:$0xf] %vm72, %v68
  %74 = vst.msk [vmem:[%s3 + $0x4] sm:$0xf] %vm72, %v69
  // Predicated region
  $region14: #{bert_forward.12} parent=0 // pred_check
    _
  $region15: #{bert_forward.12} parent=0 // pred_check_branch
    %76 = sbr.rel (0) target = $region17
  $region16: #{bert_forward.12} parent=0 // pred_region
    _
  $region17: #{bert_forward.12} parent=0 // pred_fallthru
    _
  // Predicated region
  $region18: #{bert_forward.12} parent=0 // pred_check
    _
  $region19: #{bert_forward.12} parent=0 // pred_check_branch
    %78 = sbr.rel (0) target = $region21
  $region20: #{bert_forward.12} parent=0 // pred_region
    _
  $region21: #{bert_forward.12} parent=0 // pred_fallthru
    _

// kernel: bert_forward.13
$region0: #{bert_forward.13}
  #allocation0 [shape = 'u32[]', space=smem, size = 0x4, offset = 0x4, fixed_abs, tag = 'smem constant byte address 0x4 - core index']
  #allocation1 [shape = 'u32[144,128]{1,0:T(1,128)}', space=vmem, size = 0x12000, scoped, tag = 'internal scratch']
  #allocation2 [shape = 'f32[16,96]{1,0:T(8,128)}', space=vmem, size = 0x2000, scoped, tag = 'scratch operand']
  %s0 = inlined_call_operand.vmem [shape: bf16[16,32], index: 0, kind: input, shape index: {}]
  %s1 = inlined_call_operand.vmem [shape: bf16[32,96], index: 1, kind: input, shape index: {}]
  %s2 = inlined_call_operand.vmem [shape: f32[1,96], index: 2, kind: input, shape index: {}]
  %s3 = inlined_call_operand.vmem [shape: bf16[16,96], index: 3, kind: output, shape index: {}]
  %s4 = sld [smem:[#allocation0]]
  $region30: #{bert_forward.13} parent=0
    _
  %s6 = ssub.s32 1, %s4
  %s7 = scalar_select 0, %s6, %s4
  // Predicated region
  $region2: #{bert_forward.13} parent=0 // pred_check
    _
  $region3: #{bert_forward.13} parent=0 // pred_check_branch
    %9 = sbr.rel (0) target = $region5
  $region4: #{bert_forward.13} parent=0 // pred_region
    _
  $region5: #{bert_forward.13} parent=0 // pred_fallthru
    _
  // Predicated region
  $region6: #{bert_forward.13} parent=0 // pred_check
    _
  $region7: #{bert_forward.13} parent=0 // pred_check_branch
    %11 = sbr.rel (0) target = $region9
  $region8: #{bert_forward.13} parent=0 // pred_region
    _
  $region9: #{bert_forward.13} parent=0 // pred_fallthru
    _
  // Predicated region
  $region10: #{bert_forward.13} parent=0 // pred_check
    _
  $region11: #{bert_forward.13} parent=0 // pred_check_branch
    %13 = sbr.rel (0) target = $region13
  $region12: #{bert_forward.13} parent=0 // pred_region
    _
  $region13: #{bert_forward.13} parent=0 // pred_fallthru
    _
  %p15 = scmp.eq.s32.totalorder 0, 0
  // Predicated region
  $region14: #{bert_forward.13} parent=0 // pred_check
    %p16 = pneg %p15
  $region15: #{bert_forward.13} parent=0 // pred_check_branch
    %18 = sbr.rel (%p16) target = $region17
  $region16: #{bert_forward.13} parent=0 // pred_region
    %vm19 = vcmask 785408
    %20 = vst.msk [vmem:[#allocation2] sm:$0xff] %vm19, 0.0
    %21 = vst.msk [vmem:[#allocation2 + $0x8] sm:$0xff] %vm19, 0.0
  $region17: #{bert_forward.13} parent=0 // pred_fallthru
    _
  %v22 = vld [vmem:[#allocation2] sm:$0xff]
  %v23 = vld [vmem:[#allocation2 + $0x8] sm:$0xff]
  %v24 = vld [vmem:[%s0] sm:$0xf]
  %v25 = vld [vmem:[%s0 + $0x4] sm:$0xf]
  %v26 = vld [vmem:[%s1] sm:$0xf]
  %v27 = vld [vmem:[%s1 + $0x4] sm:$0xf]
  %v28 = vld [vmem:[%s1 + $0x8] sm:$0xf]
  %v29 = vld [vmem:[%s1 + $0xc] sm:$0xf]
  %v32 = vunpack.c.l.b16 %v24
  %v33 = vunpack.c.l.b16 %v25
  %v34 = vpack.c.b16 %v33, %v32
  %v39 = vunpack.c.l.b16 %v26
  %v40 = vunpack.c.l.b16 %v27
  %v41 = vunpack.c.l.b16 %v28
  %v42 = vunpack.c.l.b16 %v29
  %v43 = vpack.c.b16 %v40, %v39
  %v44 = vpack.c.b16 %v42, %v41
  %vm47 = vcmask 261120
  %v49 = vsel %vm47, %v34, 0
  %51 = vmatprep.subr.bf16.mxu0 0
  %52 = vmatpush1.bf16.msra.mxu0 %v43
  %53 = vmatprep.subr.bf16.mxu0 0
  %54 = vmatpush1.bf16.msra.mxu0 %v44
  %55 = vmatprep.subr.bf16.mxu0 0
  %56 = vmatpush1.bf16.msra.mxu0 0
  %57 = vmatprep.subr.bf16.mxu0 0
  %58 = vmatpush1.bf16.msra.mxu0 0
  %59 = vmatprep.subr.bf16.mxu0 0
  %60 = vmatpush1.bf16.msra.mxu0 0
  %61 = vmatprep.subr.bf16.mxu0 0
  %62 = vmatpush1.bf16.msra.mxu0 0
  %63 = vmatprep.subr.bf16.mxu0 0
  %64 = vmatpush1.bf16.msra.mxu0 0
  %65 = vmatprep.subr.bf16.mxu0 0
  %66 = vmatpush1.bf16.msra.mxu0 0
  %67 = vmatprep.subr.bf16.mxu0 0
  %68 = vmatpush1.bf16.msra.mxu0 0
  %69 = vmatprep.subr.bf16.mxu0 0
  %70 = vmatpush1.bf16.msra.mxu0 0
  %71 = vmatprep.subr.bf16.mxu0 0
  %72 = vmatpush1.bf16.msra.mxu0 0
  %73 = vmatprep.subr.bf16.mxu0 0
  %74 = vmatpush1.bf16.msra.mxu0 0
  %75 = vmatprep.subr.bf16.mxu0 0
  %76 = vmatpush1.bf16.msra.mxu0 0
  %77 = vmatprep.subr.bf16.mxu0 0
  %78 = vmatpush1.bf16.msra.mxu0 0
  %79 = vmatprep.subr.bf16.mxu0 0
  %80 = vmatpush1.bf16.msra.mxu0 0
  %81 = vmatprep.subr.bf16.mxu0 0
  %82 = vmatpush1.bf16.msra.mxu0 0
  %83 = vmatprep.mubr.bf16.mxu0 0
  %84 = vmatmul.mubr.bf16.gmra.mrb[0].mxu0 %v49
  %v85 = vpop.f32.mrb[0].mxu0
  %v86 = vadd.f32 0.0, %v85
  %v87 = vpop.f32.mrb[0].mxu0
  %v88 = vpop.f32.mrb[0].mxu0
  %v89 = vadd.f32 0.0, %v88
  %v90 = vpop.f32.mrb[0].mxu0
  %91 = vdwg.mxu0
  %v92 = vadd.f32 %v22, %v86
  %v93 = vadd.f32 %v23, %v89
  %vm94 = vcmask 785408
  %95 = vst.msk [vmem:[#allocation2] sm:$0xff] %vm94, %v92
  %96 = vst.msk [vmem:[#allocation2 + $0x8] sm:$0xff] %vm94, %v93
  // Predicated region
  $region18: #{bert_forward.13} parent=0 // pred_check
    %p97 = pneg %p15
  $region19: #{bert_forward.13} parent=0 // pred_check_branch
    %99 = sbr.rel (%p97) target = $region21
  $region20: #{bert_forward.13} parent=0 // pred_region
    %v100 = vld [vmem:[#allocation2] sm:$0xff]
    %v101 = vld [vmem:[#allocation2 + $0x8] sm:$0xff]
    %v102 = vld [vmem:[%s2] sm:$0x1]
    %v104 = vlaneseq
    %v105 = vshrl.u32 %v104, 7
    %v106 = vsub.s32 0, %v105
    %v107 = vrot.slane %v102, %v106
    %v109 = vadd.f32 %v100, %v107
    %v110 = vadd.f32 %v101, %v107
    %v111 = vpack.c.bf16 %v110, %v109
    %v113 = vunpack.c.l.b16 %v111
    %v114 = vunpack.c.h.b16 %v111
    %v115 = vpack.c.b16 %v113, %v113
    %v116 = vpack.c.b16 %v114, %v114
    %vm119 = vcmask 781312
    %120 = vst.msk [vmem:[%s3] sm:$0xf] %vm119, %v115
    %121 = vst.msk [vmem:[%s3 + $0x4] sm:$0xf] %vm119, %v116
  $region21: #{bert_forward.13} parent=0 // pred_fallthru
    _
  // Predicated region
  $region22: #{bert_forward.13} parent=0 // pred_check
    _
  $region23: #{bert_forward.13} parent=0 // pred_check_branch
    %123 = sbr.rel (0) target = $region25
  $region24: #{bert_forward.13} parent=0 // pred_region
    _
  $region25: #{bert_forward.13} parent=0 // pred_fallthru
    _
  // Predicated region
  $region26: #{bert_forward.13} parent=0 // pred_check
    _
  $region27: #{bert_forward.13} parent=0 // pred_check_branch
    %125 = sbr.rel (0) target = $region29
  $region28: #{bert_forward.13} parent=0 // pred_region
    _
  $region29: #{bert_forward.13} parent=0 // pred_fallthru
    _

// kernel: bert_forward.15
$region0: #{bert_forward.15}
  #allocation0 [shape = 'u32[]', space=smem, size = 0x4, offset = 0x4, fixed_abs, tag = 'smem constant byte address 0x4 - core index']
  #allocation1 [shape = 'u32[144,128]{1,0:T(1,128)}', space=vmem, size = 0x12000, scoped, tag = 'internal scratch']
  #allocation2 [shape = 'f32[16,32]{1,0:T(8,128)}', space=vmem, size = 0x2000, scoped, tag = 'scratch operand']
  %s0 = inlined_call_operand.vmem [shape: bf16[16,32], index: 0, kind: input, shape index: {}]
  %s1 = inlined_call_operand.vmem [shape: bf16[32,32], index: 1, kind: input, shape index: {}]
  %s2 = inlined_call_operand.vmem [shape: f32[1,32], index: 2, kind: input, shape index: {}]
  %s3 = inlined_call_operand.vmem [shape: bf16[16,32], index: 3, kind: input, shape index: {}]
  %s4 = inlined_call_operand.vmem [shape: f32[1,32], index: 4, kind: input, shape index: {}]
  %s5 = inlined_call_operand.vmem [shape: f32[1,32], index: 5, kind: input, shape index: {}]
  %s6 = inlined_call_operand.vmem [shape: bf16[16,32], index: 6, kind: output, shape index: {}]
  %s7 = sld [smem:[#allocation0]]
  $region42: #{bert_forward.15} parent=0
    _
  %s9 = ssub.s32 1, %s7
  %s10 = scalar_select 0, %s9, %s7
  // Predicated region
  $region2: #{bert_forward.15} parent=0 // pred_check
    _
  $region3: #{bert_forward.15} parent=0 // pred_check_branch
    %12 = sbr.rel (0) target = $region5
  $region4: #{bert_forward.15} parent=0 // pred_region
    _
  $region5: #{bert_forward.15} parent=0 // pred_fallthru
    _
  // Predicated region
  $region6: #{bert_forward.15} parent=0 // pred_check
    _
  $region7: #{bert_forward.15} parent=0 // pred_check_branch
    %14 = sbr.rel (0) target = $region9
  $region8: #{bert_forward.15} parent=0 // pred_region
    _
  $region9: #{bert_forward.15} parent=0 // pred_fallthru
    _
  // Predicated region
  $region10: #{bert_forward.15} parent=0 // pred_check
    _
  $region11: #{bert_forward.15} parent=0 // pred_check_branch
    %16 = sbr.rel (0) target = $region13
  $region12: #{bert_forward.15} parent=0 // pred_region
    _
  $region13: #{bert_forward.15} parent=0 // pred_fallthru
    _
  // Predicated region
  $region14: #{bert_forward.15} parent=0 // pred_check
    _
  $region15: #{bert_forward.15} parent=0 // pred_check_branch
    %18 = sbr.rel (0) target = $region17
  $region16: #{bert_forward.15} parent=0 // pred_region
    _
  $region17: #{bert_forward.15} parent=0 // pred_fallthru
    _
  // Predicated region
  $region18: #{bert_forward.15} parent=0 // pred_check
    _
  $region19: #{bert_forward.15} parent=0 // pred_check_branch
    %20 = sbr.rel (0) target = $region21
  $region20: #{bert_forward.15} parent=0 // pred_region
    _
  $region21: #{bert_forward.15} parent=0 // pred_fallthru
    _
  // Predicated region
  $region22: #{bert_forward.15} parent=0 // pred_check
    _
  $region23: #{bert_forward.15} parent=0 // pred_check_branch
    %22 = sbr.rel (0) target = $region25
  $region24: #{bert_forward.15} parent=0 // pred_region
    _
  $region25: #{bert_forward.15} parent=0 // pred_fallthru
    _
  %p24 = scmp.eq.s32.totalorder 0, 0
  // Predicated region
  $region26: #{bert_forward.15} parent=0 // pred_check
    %p25 = pneg %p24
  $region27: #{bert_forward.15} parent=0 // pred_check_branch
    %27 = sbr.rel (%p25) target = $region29
  $region28: #{bert_forward.15} parent=0 // pred_region
    %vm28 = vcmask 261120
    %29 = vst.msk [vmem:[#allocation2] sm:$0xff] %vm28, 0.0
    %30 = vst.msk [vmem:[#allocation2 + $0x8] sm:$0xff] %vm28, 0.0
  $region29: #{bert_forward.15} parent=0 // pred_fallthru
    _
  %v31 = vld [vmem:[#allocation2] sm:$0xff]
  %v32 = vld [vmem:[#allocation2 + $0x8] sm:$0xff]
  %v33 = vld [vmem:[%s0] sm:$0xf]
  %v34 = vld [vmem:[%s0 + $0x4] sm:$0xf]
  %v35 = vld [vmem:[%s1] sm:$0xf]
  %v36 = vld [vmem:[%s1 + $0x4] sm:$0xf]
  %v37 = vld [vmem:[%s1 + $0x8] sm:$0xf]
  %v38 = vld [vmem:[%s1 + $0xc] sm:$0xf]
  %v41 = vunpack.c.l.b16 %v33
  %v42 = vunpack.c.l.b16 %v34
  %v43 = vpack.c.b16 %v42, %v41
  %v48 = vunpack.c.l.b16 %v35
  %v49 = vunpack.c.l.b16 %v36
  %v50 = vunpack.c.l.b16 %v37
  %v51 = vunpack.c.l.b16 %v38
  %v52 = vpack.c.b16 %v49, %v48
  %v53 = vpack.c.b16 %v51, %v50
  %vm56 = vcmask 261120
  %v58 = vsel %vm56, %v43, 0
  %60 = vmatprep.subr.bf16.mxu0 0
  %61 = vmatpush1.bf16.msra.mxu0 %v52
  %62 = vmatprep.subr.bf16.mxu0 0
  %63 = vmatpush1.bf16.msra.mxu0 %v53
  %64 = vmatprep.subr.bf16.mxu0 0
  %65 = vmatpush1.bf16.msra.mxu0 0
  %66 = vmatprep.subr.bf16.mxu0 0
  %67 = vmatpush1.bf16.msra.mxu0 0
  %68 = vmatprep.subr.bf16.mxu0 0
  %69 = vmatpush1.bf16.msra.mxu0 0
  %70 = vmatprep.subr.bf16.mxu0 0
  %71 = vmatpush1.bf16.msra.mxu0 0
  %72 = vmatprep.subr.bf16.mxu0 0
  %73 = vmatpush1.bf16.msra.mxu0 0
  %74 = vmatprep.subr.bf16.mxu0 0
  %75 = vmatpush1.bf16.msra.mxu0 0
  %76 = vmatprep.subr.bf16.mxu0 0
  %77 = vmatpush1.bf16.msra.mxu0 0
  %78 = vmatprep.subr.bf16.mxu0 0
  %79 = vmatpush1.bf16.msra.mxu0 0
  %80 = vmatprep.subr.bf16.mxu0 0
  %81 = vmatpush1.bf16.msra.mxu0 0
  %82 = vmatprep.subr.bf16.mxu0 0
  %83 = vmatpush1.bf16.msra.mxu0 0
  %84 = vmatprep.subr.bf16.mxu0 0
  %85 = vmatpush1.bf16.msra.mxu0 0
  %86 = vmatprep.subr.bf16.mxu0 0
  %87 = vmatpush1.bf16.msra.mxu0 0
  %88 = vmatprep.subr.bf16.mxu0 0
  %89 = vmatpush1.bf16.msra.mxu0 0
  %90 = vmatprep.subr.bf16.mxu0 0
  %91 = vmatpush1.bf16.msra.mxu0 0
  %92 = vmatprep.mubr.bf16.mxu0 0
  %93 = vmatmul.mubr.bf16.gmra.mrb[0].mxu0 %v58
  %v94 = vpop.f32.mrb[0].mxu0
  %v95 = vadd.f32 0.0, %v94
  %v96 = vpop.f32.mrb[0].mxu0
  %v97 = vpop.f32.mrb[0].mxu0
  %v98 = vadd.f32 0.0, %v97
  %v99 = vpop.f32.mrb[0].mxu0
  %100 = vdwg.mxu0
  %v101 = vadd.f32 %v31, %v95
  %v102 = vadd.f32 %v32, %v98
  %103 = vst.msk [vmem:[#allocation2] sm:$0xff] %vm56, %v101
  %104 = vst.msk [vmem:[#allocation2 + $0x8] sm:$0xff] %vm56, %v102
  // Predicated region
  $region30: #{bert_forward.15} parent=0 // pred_check
    %p105 = pneg %p24
  $region31: #{bert_forward.15} parent=0 // pred_check_branch
    %107 = sbr.rel (%p105) target = $region33
  $region32: #{bert_forward.15} parent=0 // pred_region
    %v108 = vld [vmem:[#allocation2] sm:$0xff]
    %v109 = vld [vmem:[#allocation2 + $0x8] sm:$0xff]
    %v110 = vld [vmem:[%s2] sm:$0x1]
    %v112 = vlaneseq
    %v113 = vshrl.u32 %v112, 7
    %v114 = vsub.s32 0, %v113
    %v115 = vrot.slane %v110, %v114
    %v117 = vadd.f32 %v108, %v115
    %v118 = vadd.f32 %v109, %v115
    %v119 = vld [vmem:[%s3] sm:$0xf]
    %v120 = vld [vmem:[%s3 + $0x4] sm:$0xf]
    %v121 = vunpack.c.l.bf16 %v119
    %v122 = vunpack.c.l.bf16 %v120
    %v123 = vadd.f32 %v117, %v121
    %v124 = vadd.f32 %v118, %v122
    %v125 = vld [vmem:[%s4] sm:$0x1]
    %v126 = vld [vmem:[%s5] sm:$0x1]
    %v127 = vsel %vm56, %v123, 0.0
    %128 = vadd.xlane.f32.xlu0 %v127
    %v129 = vpop.xlane.xlu0 %128
    %v130 = vsel %vm56, %v124, 0.0
    %131 = vadd.xlane.f32.xlu0 %v130
    %v132 = vpop.xlane.xlu0 %131
    %v133 = vrcp.pop 32.0
    %v134 = vmul.f32 %v129, %v133
    %v135 = vmul.f32 %v132, %v133
    %v136 = vsub.f32 %v123, %v134
    %v137 = vsub.f32 %v124, %v135
    %v138 = vmul.f32 %v136, %v136
    %v139 = vmul.f32 %v137, %v137
    %v140 = vsel %vm56, %v138, 0.0
    %141 = vadd.xlane.f32.xlu0 %v140
    %v142 = vpop.xlane.xlu0 %141
    %v143 = vsel %vm56, %v139, 0.0
    %144 = vadd.xlane.f32.xlu0 %v143
    %v145 = vpop.xlane.xlu0 %144
    %v146 = vmul.f32 %v142, %v133
    %v147 = vmul.f32 %v145, %v133
    %v148 = vadd.f32 %v146, 1e-12
    %v149 = vadd.f32 %v147, 1e-12
    %v150 = vrsqrt.pop %v148
    %v151 = vrsqrt.pop %v149
    %v152 = vmul.f32 %v136, %v150
    %v153 = vmul.f32 %v137, %v151
    %v155 = vlaneseq
    %v156 = vshrl.u32 %v155, 7
    %v157 = vsub.s32 0, %v156
    %v158 = vrot.slane %v125, %v157
    %v160 = vmul.f32 %v152, %v158
    %v161 = vmul.f32 %v153, %v158
    %v163 = vlaneseq
    %v164 = vshrl.u32 %v163, 7
    %v165 = vsub.s32 0, %v164
    %v166 = vrot.slane %v126, %v165
    %v168 = vadd.f32 %v160, %v166
    %v169 = vadd.f32 %v161, %v166
    %v170 = vpack.c.bf16 %v169, %v168
    %v172 = vunpack.c.l.b16 %v170
    %v173 = vunpack.c.h.b16 %v170
    %v174 = vpack.c.b16 %v172, %v172
    %v175 = vpack.c.b16 %v173, %v173
    %vm178 = vcmask 257024
    %179 = vst.msk [vmem:[%s6] sm:$0xf] %vm178, %v174
    %180 = vst.msk [vmem:[%s6 + $0x4] sm:$0xf] %vm178, %v175
  $region33: #{bert_forward.15} parent=0 // pred_fallthru
    _
  // Predicated region
  $region34: #{bert_forward.15} parent=0 // pred_check
    _
  $region35: #{bert_forward.15} parent=0 // pred_check_branch
    %182 = sbr.rel (0) target = $region37
  $region36: #{bert_forward.15} parent=0 // pred_region
    _
  $region37: #{bert_forward.15} parent=0 // pred_fallthru
    _
  // Predicated region
  $region38: #{bert_forward.15} parent=0 // pred_check
    _
  $region39: #{bert_forward.15} parent=0 // pred_check_branch
    %184 = sbr.rel (0) target = $region41
  $region40: #{bert_forward.15} parent=0 // pred_region
    _
  $region41: #{bert_forward.15} parent=0 // pred_fallthru
    _

// kernel: bert_forward.16
$region0: #{bert_forward.16}
  #allocation0 [shape = 'u32[]', space=smem, size = 0x4, offset = 0x4, fixed_abs, tag = 'smem constant byte address 0x4 - core index']
  #allocation1 [shape = 'u32[144,128]{1,0:T(1,128)}', space=vmem, size = 0x12000, scoped, tag = 'internal scratch']
  #allocation2 [shape = 'f32[16,64]{1,0:T(8,128)}', space=vmem, size = 0x2000, scoped, tag = 'scratch operand']
  %s0 = inlined_call_operand.vmem [shape: bf16[16,32], index: 0, kind: input, shape index: {}]
  %s1 = inlined_call_operand.vmem [shape: bf16[32,64], index: 1, kind: input, shape index: {}]
  %s2 = inlined_call_operand.vmem [shape: f32[1,64], index: 2, kind: input, shape index: {}]
  %s3 = inlined_call_operand.vmem [shape: bf16[16,64], index: 3, kind: output, shape index: {}]
  %s4 = sld [smem:[#allocation0]]
  $region30: #{bert_forward.16} parent=0
    _
  %s6 = ssub.s32 1, %s4
  %s7 = scalar_select 0, %s6, %s4
  // Predicated region
  $region2: #{bert_forward.16} parent=0 // pred_check
    _
  $region3: #{bert_forward.16} parent=0 // pred_check_branch
    %9 = sbr.rel (0) target = $region5
  $region4: #{bert_forward.16} parent=0 // pred_region
    _
  $region5: #{bert_forward.16} parent=0 // pred_fallthru
    _
  // Predicated region
  $region6: #{bert_forward.16} parent=0 // pred_check
    _
  $region7: #{bert_forward.16} parent=0 // pred_check_branch
    %11 = sbr.rel (0) target = $region9
  $region8: #{bert_forward.16} parent=0 // pred_region
    _
  $region9: #{bert_forward.16} parent=0 // pred_fallthru
    _
  // Predicated region
  $region10: #{bert_forward.16} parent=0 // pred_check
    _
  $region11: #{bert_forward.16} parent=0 // pred_check_branch
    %13 = sbr.rel (0) target = $region13
  $region12: #{bert_forward.16} parent=0 // pred_region
    _
  $region13: #{bert_forward.16} parent=0 // pred_fallthru
    _
  %p15 = scmp.eq.s32.totalorder 0, 0
  // Predicated region
  $region14: #{bert_forward.16} parent=0 // pred_check
    %p16 = pneg %p15
  $region15: #{bert_forward.16} parent=0 // pred_check_branch
    %18 = sbr.rel (%p16) target = $region17
  $region16: #{bert_forward.16} parent=0 // pred_region
    %vm19 = vcmask 523264
    %20 = vst.msk [vmem:[#allocation2] sm:$0xff] %vm19, 0.0
    %21 = vst.msk [vmem:[#allocation2 + $0x8] sm:$0xff] %vm19, 0.0
  $region17: #{bert_forward.16} parent=0 // pred_fallthru
    _
  %v22 = vld [vmem:[#allocation2] sm:$0xff]
  %v23 = vld [vmem:[#allocation2 + $0x8] sm:$0xff]
  %v24 = vld [vmem:[%s0] sm:$0xf]
  %v25 = vld [vmem:[%s0 + $0x4] sm:$0xf]
  %v26 = vld [vmem:[%s1] sm:$0xf]
  %v27 = vld [vmem:[%s1 + $0x4] sm:$0xf]
  %v28 = vld [vmem:[%s1 + $0x8] sm:$0xf]
  %v29 = vld [vmem:[%s1 + $0xc] sm:$0xf]
  %v32 = vunpack.c.l.b16 %v24
  %v33 = vunpack.c.l.b16 %v25
  %v34 = vpack.c.b16 %v33, %v32
  %v39 = vunpack.c.l.b16 %v26
  %v40 = vunpack.c.l.b16 %v27
  %v41 = vunpack.c.l.b16 %v28
  %v42 = vunpack.c.l.b16 %v29
  %v43 = vpack.c.b16 %v40, %v39
  %v44 = vpack.c.b16 %v42, %v41
  %vm47 = vcmask 261120
  %v49 = vsel %vm47, %v34, 0
  %51 = vmatprep.subr.bf16.mxu0 0
  %52 = vmatpush1.bf16.msra.mxu0 %v43
  %53 = vmatprep.subr.bf16.mxu0 0
  %54 = vmatpush1.bf16.msra.mxu0 %v44
  %55 = vmatprep.subr.bf16.mxu0 0
  %56 = vmatpush1.bf16.msra.mxu0 0
  %57 = vmatprep.subr.bf16.mxu0 0
  %58 = vmatpush1.bf16.msra.mxu0 0
  %59 = vmatprep.subr.bf16.mxu0 0
  %60 = vmatpush1.bf16.msra.mxu0 0
  %61 = vmatprep.subr.bf16.mxu0 0
  %62 = vmatpush1.bf16.msra.mxu0 0
  %63 = vmatprep.subr.bf16.mxu0 0
  %64 = vmatpush1.bf16.msra.mxu0 0
  %65 = vmatprep.subr.bf16.mxu0 0
  %66 = vmatpush1.bf16.msra.mxu0 0
  %67 = vmatprep.subr.bf16.mxu0 0
  %68 = vmatpush1.bf16.msra.mxu0 0
  %69 = vmatprep.subr.bf16.mxu0 0
  %70 = vmatpush1.bf16.msra.mxu0 0
  %71 = vmatprep.subr.bf16.mxu0 0
  %72 = vmatpush1.bf16.msra.mxu0 0
  %73 = vmatprep.subr.bf16.mxu0 0
  %74 = vmatpush1.bf16.msra.mxu0 0
  %75 = vmatprep.subr.bf16.mxu0 0
  %76 = vmatpush1.bf16.msra.mxu0 0
  %77 = vmatprep.subr.bf16.mxu0 0
  %78 = vmatpush1.bf16.msra.mxu0 0
  %79 = vmatprep.subr.bf16.mxu0 0
  %80 = vmatpush1.bf16.msra.mxu0 0
  %81 = vmatprep.subr.bf16.mxu0 0
  %82 = vmatpush1.bf16.msra.mxu0 0
  %83 = vmatprep.mubr.bf16.mxu0 0
  %84 = vmatmul.mubr.bf16.gmra.mrb[0].mxu0 %v49
  %v85 = vpop.f32.mrb[0].mxu0
  %v86 = vadd.f32 0.0, %v85
  %v87 = vpop.f32.mrb[0].mxu0
  %v88 = vpop.f32.mrb[0].mxu0
  %v89 = vadd.f32 0.0, %v88
  %v90 = vpop.f32.mrb[0].mxu0
  %91 = vdwg.mxu0
  %v92 = vadd.f32 %v22, %v86
  %v93 = vadd.f32 %v23, %v89
  %vm94 = vcmask 523264
  %95 = vst.msk [vmem:[#allocation2] sm:$0xff] %vm94, %v92
  %96 = vst.msk [vmem:[#allocation2 + $0x8] sm:$0xff] %vm94, %v93
  // Predicated region
  $region18: #{bert_forward.16} parent=0 // pred_check
    %p97 = pneg %p15
  $region19: #{bert_forward.16} parent=0 // pred_check_branch
    %99 = sbr.rel (%p97) target = $region21
  $region20: #{bert_forward.16} parent=0 // pred_region
    %v100 = vld [vmem:[#allocation2] sm:$0xff]
    %v101 = vld [vmem:[#allocation2 + $0x8] sm:$0xff]
    %v102 = vld [vmem:[%s2] sm:$0x1]
    %v104 = vlaneseq
    %v105 = vshrl.u32 %v104, 7
    %v106 = vsub.s32 0, %v105
    %v107 = vrot.slane %v102, %v106
    %v109 = vadd.f32 %v100, %v107
    %v110 = vadd.f32 %v101, %v107
    %v111 = vmul.f32 %v109, 0.5
    %v112 = vmul.f32 %v110, 0.5
    %v113 = vmul.f32 %v109, 0.044715
    %v114 = vmul.f32 %v110, 0.044715
    %v115 = vmul.f32 %v113, %v109
    %v116 = vmul.f32 %v114, %v110
    %v117 = vmul.f32 %v115, %v109
    %v118 = vmul.f32 %v116, %v110
    %v119 = vadd.f32 %v109, %v117
    %v120 = vadd.f32 %v110, %v118
    %v121 = vmul.f32 %v119, 0.7978846
    %v122 = vmul.f32 %v120, 0.7978846
    %v123 = vtanh.pop %v121
    %v124 = vtanh.pop %v122
    %v125 = vadd.f32 %v123, 1.0
    %v126 = vadd.f32 %v124, 1.0
    %v127 = vmul.f32 %v111, %v125
    %v128 = vmul.f32 %v112, %v126
    %v129 = vpack.c.bf16 %v128, %v127
    %v131 = vunpack.c.l.b16 %v129
    %v132 = vunpack.c.h.b16 %v129
    %v133 = vpack.c.b16 %v131, %v131
    %v134 = vpack.c.b16 %v132, %v132
    %vm137 = vcmask 519168
    %138 = vst.msk [vmem:[%s3] sm:$0xf] %vm137, %v133
    %139 = vst.msk [vmem:[%s3 + $0x4] sm:$0xf] %vm137, %v134
  $region21: #{bert_forward.16} parent=0 // pred_fallthru
    _
  // Predicated region
  $region22: #{bert_forward.16} parent=0 // pred_check
    _
  $region23: #{bert_forward.16} parent=0 // pred_check_branch
    %141 = sbr.rel (0) target = $region25
  $region24: #{bert_forward.16} parent=0 // pred_region
    _
  $region25: #{bert_forward.16} parent=0 // pred_fallthru
    _
  // Predicated region
  $region26: #{bert_forward.16} parent=0 // pred_check
    _
  $region27: #{bert_forward.16} parent=0 // pred_check_branch
    %143 = sbr.rel (0) target = $region29
  $region28: #{bert_forward.16} parent=0 // pred_region
    _
  $region29: #{bert_forward.16} parent=0 // pred_fallthru
    _

// kernel: bert_forward.17
$region0: #{bert_forward.17}
  #allocation0 [shape = 'u32[]', space=smem, size = 0x4, offset = 0x4, fixed_abs, tag = 'smem constant byte address 0x4 - core index']
  #allocation1 [shape = 'u32[144,128]{1,0:T(1,128)}', space=vmem, size = 0x12000, scoped, tag = 'internal scratch']
  #allocation2 [shape = 'f32[16,32]{1,0:T(8,128)}', space=vmem, size = 0x2000, scoped, tag = 'scratch operand']
  %s0 = inlined_call_operand.vmem [shape: bf16[16,64], index: 0, kind: input, shape index: {}]
  %s1 = inlined_call_operand.vmem [shape: bf16[64,32], index: 1, kind: input, shape index: {}]
  %s2 = inlined_call_operand.vmem [shape: f32[1,32], index: 2, kind: input, shape index: {}]
  %s3 = inlined_call_operand.vmem [shape: bf16[16,32], index: 3, kind: input, shape index: {}]
  %s4 = inlined_call_operand.vmem [shape: f32[1,32], index: 4, kind: input, shape index: {}]
  %s5 = inlined_call_operand.vmem [shape: f32[1,32], index: 5, kind: input, shape index: {}]
  %s6 = inlined_call_operand.vmem [shape: bf16[16,32], index: 6, kind: output, shape index: {}]
  %s7 = sld [smem:[#allocation0]]
  $region42: #{bert_forward.17} parent=0
    _
  %s9 = ssub.s32 1, %s7
  %s10 = scalar_select 0, %s9, %s7
  // Predicated region
  $region2: #{bert_forward.17} parent=0 // pred_check
    _
  $region3: #{bert_forward.17} parent=0 // pred_check_branch
    %12 = sbr.rel (0) target = $region5
  $region4: #{bert_forward.17} parent=0 // pred_region
    _
  $region5: #{bert_forward.17} parent=0 // pred_fallthru
    _
  // Predicated region
  $region6: #{bert_forward.17} parent=0 // pred_check
    _
  $region7: #{bert_forward.17} parent=0 // pred_check_branch
    %14 = sbr.rel (0) target = $region9
  $region8: #{bert_forward.17} parent=0 // pred_region
    _
  $region9: #{bert_forward.17} parent=0 // pred_fallthru
    _
  // Predicated region
  $region10: #{bert_forward.17} parent=0 // pred_check
    _
  $region11: #{bert_forward.17} parent=0 // pred_check_branch
    %16 = sbr.rel (0) target = $region13
  $region12: #{bert_forward.17} parent=0 // pred_region
    _
  $region13: #{bert_forward.17} parent=0 // pred_fallthru
    _
  // Predicated region
  $region14: #{bert_forward.17} parent=0 // pred_check
    _
  $region15: #{bert_forward.17} parent=0 // pred_check_branch
    %18 = sbr.rel (0) target = $region17
  $region16: #{bert_forward.17} parent=0 // pred_region
    _
  $region17: #{bert_forward.17} parent=0 // pred_fallthru
    _
  // Predicated region
  $region18: #{bert_forward.17} parent=0 // pred_check
    _
  $region19: #{bert_forward.17} parent=0 // pred_check_branch
    %20 = sbr.rel (0) target = $region21
  $region20: #{bert_forward.17} parent=0 // pred_region
    _
  $region21: #{bert_forward.17} parent=0 // pred_fallthru
    _
  // Predicated region
  $region22: #{bert_forward.17} parent=0 // pred_check
    _
  $region23: #{bert_forward.17} parent=0 // pred_check_branch
    %22 = sbr.rel (0) target = $region25
  $region24: #{bert_forward.17} parent=0 // pred_region
    _
  $region25: #{bert_forward.17} parent=0 // pred_fallthru
    _
  %p24 = scmp.eq.s32.totalorder 0, 0
  // Predicated region
  $region26: #{bert_forward.17} parent=0 // pred_check
    %p25 = pneg %p24
  $region27: #{bert_forward.17} parent=0 // pred_check_branch
    %27 = sbr.rel (%p25) target = $region29
  $region28: #{bert_forward.17} parent=0 // pred_region
    %vm28 = vcmask 261120
    %29 = vst.msk [vmem:[#allocation2] sm:$0xff] %vm28, 0.0
    %30 = vst.msk [vmem:[#allocation2 + $0x8] sm:$0xff] %vm28, 0.0
  $region29: #{bert_forward.17} parent=0 // pred_fallthru
    _
  %v31 = vld [vmem:[#allocation2] sm:$0xff]
  %v32 = vld [vmem:[#allocation2 + $0x8] sm:$0xff]
  %v33 = vld [vmem:[%s0] sm:$0xf]
  %v34 = vld [vmem:[%s0 + $0x4] sm:$0xf]
  %v35 = vld [vmem:[%s1] sm:$0xf]
  %v36 = vld [vmem:[%s1 + $0x4] sm:$0xf]
  %v37 = vld [vmem:[%s1 + $0x8] sm:$0xf]
  %v38 = vld [vmem:[%s1 + $0xc] sm:$0xf]
  %v39 = vld [vmem:[%s1 + $0x10] sm:$0xf]
  %v40 = vld [vmem:[%s1 + $0x14] sm:$0xf]
  %v41 = vld [vmem:[%s1 + $0x18] sm:$0xf]
  %v42 = vld [vmem:[%s1 + $0x1c] sm:$0xf]
  %v45 = vunpack.c.l.b16 %v33
  %v46 = vunpack.c.l.b16 %v34
  %v47 = vpack.c.b16 %v46, %v45
  %v56 = vunpack.c.l.b16 %v35
  %v57 = vunpack.c.l.b16 %v36
  %v58 = vunpack.c.l.b16 %v37
  %v59 = vunpack.c.l.b16 %v38
  %v60 = vunpack.c.l.b16 %v39
  %v61 = vunpack.c.l.b16 %v40
  %v62 = vunpack.c.l.b16 %v41
  %v63 = vunpack.c.l.b16 %v42
  %v64 = vpack.c.b16 %v57, %v56
  %v65 = vpack.c.b16 %v59, %v58
  %v66 = vpack.c.b16 %v61, %v60
  %v67 = vpack.c.b16 %v63, %v62
  %vm72 = vcmask 523264
  %v74 = vsel %vm72, %v47, 0
  %76 = vmatprep.subr.bf16.mxu0 0
  %77 = vmatpush1.bf16.msra.mxu0 %v64
  %78 = vmatprep.subr.bf16.mxu0 0
  %79 = vmatpush1.bf16.msra.mxu0 %v65
  %80 = vmatprep.subr.bf16.mxu0 0
  %81 = vmatpush1.bf16.msra.mxu0 %v66
  %82 = vmatprep.subr.bf16.mxu0 0
  %83 = vmatpush1.bf16.msra.mxu0 %v67
  %84 = vmatprep.subr.bf16.mxu0 0
  %85 = vmatpush1.bf16.msra.mxu0 0
  %86 = vmatprep.subr.bf16.mxu0 0
  %87 = vmatpush1.bf16.msra.mxu0 0
  %88 = vmatprep.subr.bf16.mxu0 0
  %89 = vmatpush1.bf16.msra.mxu0 0
  %90 = vmatprep.subr.bf16.mxu0 0
  %91 = vmatpush1.bf16.msra.mxu0 0
  %92 = vmatprep.subr.bf16.mxu0 0
  %93 = vmatpush1.bf16.msra.mxu0 0
  %94 = vmatprep.subr.bf16.mxu0 0
  %95 = vmatpush1.bf16.msra.mxu0 0
  %96 = vmatprep.subr.bf16.mxu0 0
  %97 = vmatpush1.bf16.msra.mxu0 0
  %98 = vmatprep.subr.bf16.mxu0 0
  %99 = vmatpush1.bf16.msra.mxu0 0
  %100 = vmatprep.subr.bf16.mxu0 0
  %101 = vmatpush1.bf16.msra.mxu0 0
  %102 = vmatprep.subr.bf16.mxu0 0
  %103 = vmatpush1.bf16.msra.mxu0 0
  %104 = vmatprep.subr.bf16.mxu0 0
  %105 = vmatpush1.bf16.msra.mxu0 0
  %106 = vmatprep.subr.bf16.mxu0 0
  %107 = vmatpush1.bf16.msra.mxu0 0
  %108 = vmatprep.mubr.bf16.mxu0 0
  %109 = vmatmul.mubr.bf16.gmra.mrb[0].mxu0 %v74
  %v110 = vpop.f32.mrb[0].mxu0
  %v111 = vadd.f32 0.0, %v110
  %v112 = vpop.f32.mrb[0].mxu0
  %v113 = vpop.f32.mrb[0].mxu0
  %v114 = vadd.f32 0.0, %v113
  %v115 = vpop.f32.mrb[0].mxu0
  %116 = vdwg.mxu0
  %v117 = vadd.f32 %v31, %v111
  %v118 = vadd.f32 %v32, %v114
  %vm119 = vcmask 261120
  %120 = vst.msk [vmem:[#allocation2] sm:$0xff] %vm119, %v117
  %121 = vst.msk [vmem:[#allocation2 + $0x8] sm:$0xff] %vm119, %v118
  // Predicated region
  $region30: #{bert_forward.17} parent=0 // pred_check
    %p122 = pneg %p24
  $region31: #{bert_forward.17} parent=0 // pred_check_branch
    %124 = sbr.rel (%p122) target = $region33
  $region32: #{bert_forward.17} parent=0 // pred_region
    %v125 = vld [vmem:[#allocation2] sm:$0xff]
    %v126 = vld [vmem:[#allocation2 + $0x8] sm:$0xff]
    %v127 = vld [vmem:[%s2] sm:$0x1]
    %v129 = vlaneseq
    %v130 = vshrl.u32 %v129, 7
    %v131 = vsub.s32 0, %v130
    %v132 = vrot.slane %v127, %v131
    %v134 = vadd.f32 %v125, %v132
    %v135 = vadd.f32 %v126, %v132
    %v136 = vld [vmem:[%s3] sm:$0xf]
    %v137 = vld [vmem:[%s3 + $0x4] sm:$0xf]
    %v138 = vunpack.c.l.bf16 %v136
    %v139 = vunpack.c.l.bf16 %v137
    %v140 = vadd.f32 %v134, %v138
    %v141 = vadd.f32 %v135, %v139
    %v142 = vld [vmem:[%s4] sm:$0x1]
    %v143 = vld [vmem:[%s5] sm:$0x1]
    %v144 = vsel %vm119, %v140, 0.0
    %145 = vadd.xlane.f32.xlu0 %v144
    %v146 = vpop.xlane.xlu0 %145
    %v147 = vsel %vm119, %v141, 0.0
    %148 = vadd.xlane.f32.xlu0 %v147
    %v149 = vpop.xlane.xlu0 %148
    %v150 = vrcp.pop 32.0
    %v151 = vmul.f32 %v146, %v150
    %v152 = vmul.f32 %v149, %v150
    %v153 = vsub.f32 %v140, %v151
    %v154 = vsub.f32 %v141, %v152
    %v155 = vmul.f32 %v153, %v153
    %v156 = vmul.f32 %v154, %v154
    %v157 = vsel %vm119, %v155, 0.0
    %158 = vadd.xlane.f32.xlu0 %v157
    %v159 = vpop.xlane.xlu0 %158
    %v160 = vsel %vm119, %v156, 0.0
    %161 = vadd.xlane.f32.xlu0 %v160
    %v162 = vpop.xlane.xlu0 %161
    %v163 = vmul.f32 %v159, %v150
    %v164 = vmul.f32 %v162, %v150
    %v165 = vadd.f32 %v163, 1e-12
    %v166 = vadd.f32 %v164, 1e-12
    %v167 = vrsqrt.pop %v165
    %v168 = vrsqrt.pop %v166
    %v169 = vmul.f32 %v153, %v167
    %v170 = vmul.f32 %v154, %v168
    %v172 = vlaneseq
    %v173 = vshrl.u32 %v172, 7
    %v174 = vsub.s32 0, %v173
    %v175 = vrot.slane %v142, %v174
    %v177 = vmul.f32 %v169, %v175
    %v178 = vmul.f32 %v170, %v175
    %v180 = vlaneseq
    %v181 = vshrl.u32 %v180, 7
    %v182 = vsub.s32 0, %v181
    %v183 = vrot.slane %v143, %v182
    %v185 = vadd.f32 %v177, %v183
    %v186 = vadd.f32 %v178, %v183
    %v187 = vpack.c.bf16 %v186, %v185
    %v189 = vunpack.c.l.b16 %v187
    %v190 = vunpack.c.h.b16 %v187
    %v191 = vpack.c.b16 %v189, %v189
    %v192 = vpack.c.b16 %v190, %v190
    %vm195 = vcmask 257024
    %196 = vst.msk [vmem:[%s6] sm:$0xf] %vm195, %v191
    %197 = vst.msk [vmem:[%s6 + $0x4] sm:$0xf] %vm195, %v192
  $region33: #{bert_forward.17} parent=0 // pred_fallthru
    _
  // Predicated region
  $region34: #{bert_forward.17} parent=0 // pred_check
    _
  $region35: #{bert_forward.17} parent=0 // pred_check_branch
    %199 = sbr.rel (0) target = $region37
  $region36: #{bert_forward.17} parent=0 // pred_region
    _
  $region37: #{bert_forward.17} parent=0 // pred_fallthru
    _
  // Predicated region
  $region38: #{bert_forward.17} parent=0 // pred_check
    _
  $region39: #{bert_forward.17} parent=0 // pred_check_branch
    %201 = sbr.rel (0) target = $region41
  $region40: #{bert_forward.17} parent=0 // pred_region
    _
  $region41: #{bert_forward.17} parent=0 // pred_fallthru
    _

// kernel: bert_forward.23
$region0: #{bert_forward.23}
  #allocation0 [shape = 'u32[]', space=smem, size = 0x4, offset = 0x4, fixed_abs, tag = 'smem constant byte address 0x4 - core index']
  #allocation1 [shape = 'u32[144,128]{1,0:T(1,128)}', space=vmem, size = 0x12000, scoped, tag = 'internal scratch']
  %s0 = inlined_call_operand.vmem [shape: bf16[2,32], index: 0, kind: input, shape index: {}]
  %s1 = inlined_call_operand.vmem [shape: bf16[32,32], index: 1, kind: input, shape index: {}]
  %s2 = inlined_call_operand.vmem [shape: f32[1,32], index: 2, kind: input, shape index: {}]
  %s3 = inlined_call_operand.vmem [shape: bf16[32,128], index: 3, kind: input, shape index: {}]
  %s4 = inlined_call_operand.vmem [shape: f32[1,128], index: 4, kind: input, shape index: {}]
  %s5 = inlined_call_operand.hbm [shape: f32[2,128], index: 5, kind: output, shape index: {}]
  %s6 = sld [smem:[#allocation0]]
  $region30: #{bert_forward.23} parent=0
    _
  %s8 = ssub.s32 1, %s6
  %s9 = scalar_select 0, %s8, %s6
  $region1: #{bert_forward.23} parent=0
    #allocation2 [shape = 'u8[1024]{0}', space=vmem, size = 0x400, scoped, tag = 'output window, operand 0, single buffered']
    #allocation3 [shape = 's32[1]{0}', space=sflag, size = 0x4, scoped, tag = 'scoped memory for bert_forward.23']
    %10 = vsyncpa [#allocation3], 0
    // Predicated region
    $region2: #{bert_forward.23} parent=1 // pred_check
      _
    $region3: #{bert_forward.23} parent=1 // pred_check_branch
      %12 = sbr.rel (0) target = $region5
    $region4: #{bert_forward.23} parent=1 // pred_region
      _
    $region5: #{bert_forward.23} parent=1 // pred_fallthru
      _
    // Predicated region
    $region6: #{bert_forward.23} parent=1 // pred_check
      _
    $region7: #{bert_forward.23} parent=1 // pred_check_branch
      %14 = sbr.rel (0) target = $region9
    $region8: #{bert_forward.23} parent=1 // pred_region
      _
    $region9: #{bert_forward.23} parent=1 // pred_fallthru
      _
    // Predicated region
    $region10: #{bert_forward.23} parent=1 // pred_check
      _
    $region11: #{bert_forward.23} parent=1 // pred_check_branch
      %16 = sbr.rel (0) target = $region13
    $region12: #{bert_forward.23} parent=1 // pred_region
      _
    $region13: #{bert_forward.23} parent=1 // pred_fallthru
      _
    // Predicated region
    $region14: #{bert_forward.23} parent=1 // pred_check
      _
    $region15: #{bert_forward.23} parent=1 // pred_check_branch
      %18 = sbr.rel (0) target = $region17
    $region16: #{bert_forward.23} parent=1 // pred_region
      _
    $region17: #{bert_forward.23} parent=1 // pred_fallthru
      _
    // Predicated region
    $region18: #{bert_forward.23} parent=1 // pred_check
      _
    $region19: #{bert_forward.23} parent=1 // pred_check_branch
      %20 = sbr.rel (0) target = $region21
    $region20: #{bert_forward.23} parent=1 // pred_region
      _
    $region21: #{bert_forward.23} parent=1 // pred_fallthru
      _
    %v22 = vld [vmem:[%s0] sm:$0x1]
    %v23 = vld [vmem:[%s1] sm:$0xf]
    %v24 = vld [vmem:[%s1 + $0x4] sm:$0xf]
    %v25 = vld [vmem:[%s1 + $0x8] sm:$0xf]
    %v26 = vld [vmem:[%s1 + $0xc] sm:$0xf]
    %v27 = vld [vmem:[%s2] sm:$0x1]
    %v29 = vlaneseq
    %v30 = vshrl.u32 %v29, 7
    %v31 = vsub.s32 0, %v30
    %v32 = vrot.slane %v27, %v31
    %v38 = vunpack.c.l.b16 %v23
    %v39 = vunpack.c.l.b16 %v24
    %v40 = vunpack.c.l.b16 %v25
    %v41 = vunpack.c.l.b16 %v26
    %v42 = vpack.c.b16 %v39, %v38
    %v43 = vpack.c.b16 %v41, %v40
    %vm46 = vcmask 261120
    %v48 = vsel %vm46, %v22, 0
    %50 = vmatprep.subr.bf16.mxu0 0
    %51 = vmatpush1.bf16.msra.mxu0 %v42
    %52 = vmatprep.subr.bf16.mxu0 0
    %53 = vmatpush1.bf16.msra.mxu0 %v43
    %54 = vmatprep.subr.bf16.mxu0 0
    %55 = vmatpush1.bf16.msra.mxu0 0
    %56 = vmatprep.subr.bf16.mxu0 0
    %57 = vmatpush1.bf16.msra.mxu0 0
    %58 = vmatprep.subr.bf16.mxu0 0
    %59 = vmatpush1.bf16.msra.mxu0 0
    %60 = vmatprep.subr.bf16.mxu0 0
    %61 = vmatpush1.bf16.msra.mxu0 0
    %62 = vmatprep.subr.bf16.mxu0 0
    %63 = vmatpush1.bf16.msra.mxu0 0
    %64 = vmatprep.subr.bf16.mxu0 0
    %65 = vmatpush1.bf16.msra.mxu0 0
    %66 = vmatprep.subr.bf16.mxu0 0
    %67 = vmatpush1.bf16.msra.mxu0 0
    %68 = vmatprep.subr.bf16.mxu0 0
    %69 = vmatpush1.bf16.msra.mxu0 0
    %70 = vmatprep.subr.bf16.mxu0 0
    %71 = vmatpush1.bf16.msra.mxu0 0
    %72 = vmatprep.subr.bf16.mxu0 0
    %73 = vmatpush1.bf16.msra.mxu0 0
    %74 = vmatprep.subr.bf16.mxu0 0
    %75 = vmatpush1.bf16.msra.mxu0 0
    %76 = vmatprep.subr.bf16.mxu0 0
    %77 = vmatpush1.bf16.msra.mxu0 0
    %78 = vmatprep.subr.bf16.mxu0 0
    %79 = vmatpush1.bf16.msra.mxu0 0
    %80 = vmatprep.subr.bf16.mxu0 0
    %81 = vmatpush1.bf16.msra.mxu0 0
    %82 = vmatprep.mubr.bf16.mxu0 0
    %83 = vmatmul.mubr.bf16.gmra.mrb[0].mxu0 %v48
    %v84 = vpop.f32.mrb[0].mxu0
    %v85 = vadd.f32 %v32, %v84
    %v86 = vpop.f32.mrb[0].mxu0
    %v87 = vpop.f32.mrb[0].mxu0
    %v88 = vpop.f32.mrb[0].mxu0
    %89 = vdwg.mxu0
    %v90 = vtanh.pop %v85
    %v91 = vpack.c.bf16 %v90, %v90
    %v92 = vld [vmem:[%s3] sm:$0xf]
    %v93 = vld [vmem:[%s3 + $0x4] sm:$0xf]
    %v94 = vld [vmem:[%s3 + $0x8] sm:$0xf]
    %v95 = vld [vmem:[%s3 + $0xc] sm:$0xf]
    %v96 = vld [vmem:[%s4] sm:$0x1]
    %v98 = vlaneseq
    %v99 = vshrl.u32 %v98, 7
    %v100 = vsub.s32 0, %v99
    %v101 = vrot.slane %v96, %v100
    %v107 = vunpack.c.l.b16 %v92
    %v108 = vunpack.c.l.b16 %v93
    %v109 = vunpack.c.l.b16 %v94
    %v110 = vunpack.c.l.b16 %v95
    %v111 = vpack.c.b16 %v108, %v107
    %v112 = vpack.c.b16 %v110, %v109
    %v116 = vsel %vm46, %v91, 0
    %118 = vmatprep.subr.bf16.mxu0 0
    %119 = vmatpush1.bf16.msra.mxu0 %v111
    %120 = vmatprep.subr.bf16.mxu0 0
    %121 = vmatpush1.bf16.msra.mxu0 %v112
    %122 = vmatprep.subr.bf16.mxu0 0
    %123 = vmatpush1.bf16.msra.mxu0 0
    %124 = vmatprep.subr.bf16.mxu0 0
    %125 = vmatpush1.bf16.msra.mxu0 0
    %126 = vmatprep.subr.bf16.mxu0 0
    %127 = vmatpush1.bf16.msra.mxu0 0
    %128 = vmatprep.subr.bf16.mxu0 0
    %129 = vmatpush1.bf16.msra.mxu0 0
    %130 = vmatprep.subr.bf16.mxu0 0
    %131 = vmatpush1.bf16.msra.mxu0 0
    %132 = vmatprep.subr.bf16.mxu0 0
    %133 = vmatpush1.bf16.msra.mxu0 0
    %134 = vmatprep.subr.bf16.mxu0 0
    %135 = vmatpush1.bf16.msra.mxu0 0
    %136 = vmatprep.subr.bf16.mxu0 0
    %137 = vmatpush1.bf16.msra.mxu0 0
    %138 = vmatprep.subr.bf16.mxu0 0
    %139 = vmatpush1.bf16.msra.mxu0 0
    %140 = vmatprep.subr.bf16.mxu0 0
    %141 = vmatpush1.bf16.msra.mxu0 0
    %142 = vmatprep.subr.bf16.mxu0 0
    %143 = vmatpush1.bf16.msra.mxu0 0
    %144 = vmatprep.subr.bf16.mxu0 0
    %145 = vmatpush1.bf16.msra.mxu0 0
    %146 = vmatprep.subr.bf16.mxu0 0
    %147 = vmatpush1.bf16.msra.mxu0 0
    %148 = vmatprep.subr.bf16.mxu0 0
    %149 = vmatpush1.bf16.msra.mxu0 0
    %150 = vmatprep.mubr.bf16.mxu0 0
    %151 = vmatmul.mubr.bf16.gmra.mrb[0].mxu0 %v116
    %v152 = vpop.f32.mrb[0].mxu0
    %v153 = vadd.f32 %v101, %v152
    %v154 = vpop.f32.mrb[0].mxu0
    %v155 = vpop.f32.mrb[0].mxu0
    %v156 = vpop.f32.mrb[0].mxu0
    %157 = vdwg.mxu0
    %v158 = vxor.u32 %v153, 2147483648
    %v159 = vmul.f32 %v158, 1.442695
    %v160 = vpow.pop %v159
    %v161 = vadd.f32 %v160, 1.0
    %v162 = vrcp.pop %v161
    %v163 = vmul.f32 1.0, %v162
    %164 = vst [vmem:[#allocation2] sm:$0x3] %v163
    // Predicated region
    $region22: #{bert_forward.23} parent=1 // pred_check
      _
    $region23: #{bert_forward.23} parent=1 // pred_check_branch
      %166 = sbr.rel (0) target = $region25
    $region24: #{bert_forward.23} parent=1 // pred_region
      %s168 = ssub.s32 32, 32
      %169 = vsyncadd [#allocation3], %s168
      %s171 = sshll.u32 [#allocation2], 4
      %s172 = int_to_ptr.vmem [resolvable:$true] %s171
      %174 = dma.vmem_to_hbm [thread:$0]  %s172, 32, %s5, [#allocation3]
    $region25: #{bert_forward.23} parent=1 // pred_fallthru
      _
    // Predicated region
    $region26: #{bert_forward.23} parent=1 // pred_check
      _
    $region27: #{bert_forward.23} parent=1 // pred_check_branch
      %176 = sbr.rel (0) target = $region29
    $region28: #{bert_forward.23} parent=1 // pred_region
      %177 = dma.done [#allocation3], 32
    $region29: #{bert_forward.23} parent=1 // pred_fallthru
      _
    %178 = vsyncpa [#allocation3], 1

// kernel: bert_forward.14
$region0: #{bert_forward.14}
  #allocation0 [shape = 'u32[]', space=smem, size = 0x4, offset = 0x4, fixed_abs, tag = 'smem constant byte address 0x4 - core index']
  #allocation1 [shape = 'u32[144,128]{1,0:T(1,128)}', space=vmem, size = 0x12000, scoped, tag = 'internal scratch']
  #allocation2 [shape = 'f32[4,8,1]{2,1,0:T(8,128)}', space=vmem, size = 0x4000, scoped, tag = 'scratch operand']
  #allocation3 [shape = 'f32[4,8,1]{2,1,0:T(8,128)}', space=vmem, size = 0x4000, scoped, tag = 'scratch operand']
  #allocation4 [shape = 'f32[4,8,8]{2,1,0:T(8,128)}', space=vmem, size = 0x4000, scoped, tag = 'scratch operand']
  %s0 = inlined_call_operand.vmem [shape: bf16[2,8,3,4,8], index: 0, kind: input, shape index: {}, may-alias: {0,1,2}]
  %s1 = inlined_call_operand.vmem [shape: bf16[2,8,3,4,8], index: 1, kind: input, shape index: {}, may-alias: {0,1,2}]
  %s2 = inlined_call_operand.vmem [shape: bf16[2,8,3,4,8], index: 2, kind: input, shape index: {}, may-alias: {0,1,2}]
  %s3 = inlined_call_operand.vmem [shape: f32[2,1,8], index: 3, kind: input, shape index: {}]
  %s4 = inlined_call_operand.vmem [shape: bf16[2,8,32], index: 4, kind: output, shape index: {}]
  %s5 = sld [smem:[#allocation0]]
  $region180: #{bert_forward.14} parent=0
    _
  %s7 = ssub.s32 1, %s5
  %s8 = scalar_select 0, %s7, %s5
  $region1: #{bert_forward.14} parent=0
    #allocation5 [shape = 'u8[16384]{0}', space=vmem, size = 0x4000, scoped, tag = 'input window, operand 0']
    #allocation6 [shape = 'u8[16384]{0}', space=vmem, size = 0x4000, scoped, tag = 'input window, operand 1']
    #allocation7 [shape = 'u8[16384]{0}', space=vmem, size = 0x4000, scoped, tag = 'input window, operand 2']
    loop: start=0, step=1, limit=4
    $region2: #{bert_forward.14} parent=1 // loop_pre_header
      _
    $region3: #{bert_forward.14} parent=1 // loop_header
      %s10 = sphi 0, %s14
      %p11 = scmp.ge.s32.totalorder %s10, 4
      %s17 = sphi 0, %s29
      %s18 = sphi 0, %s25
      %s19 = sphi 0, %s17
      %s20 = sphi 0, %s18
      %s21 = sphi 0, %s19
      %s22 = sphi 0, %s20
      %s32 = sphi 0, %s34
      %s35 = sphi 0, %s32
      %s36 = sphi 0, %s35
      %s52 = sphi 0, %s36
      %s60 = sphi 0, %s62
      %s63 = sphi 0, %s60
      %s64 = sphi 0, %s63
      %s80 = sphi 0, %s64
      %s88 = sphi 0, %s90
      %s91 = sphi 0, %s88
      %s92 = sphi 0, %s91
      %s108 = sphi 0, %s92
      %s116 = sphi 0, %s118
      %s119 = sphi 0, %s116
      %s120 = sphi 0, %s119
      %s136 = sphi 0, %s120
      %s142 = sphi 0, %s144
      %s145 = sphi 0, %s142
      %s146 = sphi 0, %s145
      %s162 = sphi 0, %s146
    $region4: #{bert_forward.14} parent=1 // loop_header_branch
      %13 = sbr.rel (%p11) target = $region8
    $region5: #{bert_forward.14} parent=1 // loop_body
      %s15 = ssub.s32 %s10, 1
      %s16 = ssub.s32 %s10, 2
      %s23 = sadd.s32 1, %s18
      %p24 = scmp.ge.s32.totalorder %s23, 1
      %s25 = scalar_select %p24, 0, %s23
      %s26 = sadd.s32 1, %s17
      %s27 = scalar_select %p24, %s26, %s17
      %p28 = scmp.ge.s32.totalorder %s27, 2
      %s29 = scalar_select %p28, 0, %s27
      %s30 = ssub.s32 %s17, %s29
      %p31 = scmp.eq.s32.totalorder %s30, 0
      %s33 = sadd.s32 %s32, 1
      %s34 = scalar_select %p31, %s32, %s33
      %p37 = pneg %p31
      %p38 = scmp.eq.s32.totalorder %s10, 1
      %p39 = por %p37, %p38
      %p40 = scmp.ne.s32.totalorder %s32, %s35
      %p41 = scmp.eq.s32.totalorder %s10, 0
      %p42 = por %p40, %p41
      %p43 = scmp.ne.s32.totalorder %s32, %s35
      %p44 = scmp.eq.s32.totalorder %s15, 1
      %p45 = por %p43, %p44
      %p46 = scmp.ne.s32.totalorder %s35, %s36
      %p47 = scmp.eq.s32.totalorder %s15, 0
      %p48 = por %p46, %p47
      %p49 = scmp.ne.s32.totalorder %s35, %s36
      %p50 = scmp.eq.s32.totalorder %s16, 1
      %p51 = por %p49, %p50
      %p53 = scmp.ne.s32.totalorder %s36, %s52
      %p54 = scmp.eq.s32.totalorder %s16, 0
      %p55 = por %p53, %p54
      %s56 = ssub.s32 %s17, %s29
      %s57 = ssub.s32 %s18, %s25
      %s58 = sor.u32 %s56, %s57
      %p59 = scmp.eq.s32.totalorder %s58, 0
      %s61 = sadd.s32 %s60, 1
      %s62 = scalar_select %p59, %s60, %s61
      %p65 = pneg %p59
      %p66 = scmp.eq.s32.totalorder %s10, 1
      %p67 = por %p65, %p66
      %p68 = scmp.ne.s32.totalorder %s60, %s63
      %p69 = scmp.eq.s32.totalorder %s10, 0
      %p70 = por %p68, %p69
      %p71 = scmp.ne.s32.totalorder %s60, %s63
      %p72 = scmp.eq.s32.totalorder %s15, 1
      %p73 = por %p71, %p72
      %p74 = scmp.ne.s32.totalorder %s63, %s64
      %p75 = scmp.eq.s32.totalorder %s15, 0
      %p76 = por %p74, %p75
      %p77 = scmp.ne.s32.totalorder %s63, %s64
      %p78 = scmp.eq.s32.totalorder %s16, 1
      %p79 = por %p77, %p78
      %p81 = scmp.ne.s32.totalorder %s64, %s80
      %p82 = scmp.eq.s32.totalorder %s16, 0
      %p83 = por %p81, %p82
      %s84 = ssub.s32 %s17, %s29
      %s85 = ssub.s32 %s18, %s25
      %s86 = sor.u32 %s84, %s85
      %p87 = scmp.eq.s32.totalorder %s86, 0
      %s89 = sadd.s32 %s88, 1
      %s90 = scalar_select %p87, %s88, %s89
      %p93 = pneg %p87
      %p94 = scmp.eq.s32.totalorder %s10, 1
      %p95 = por %p93, %p94
      %p96 = scmp.ne.s32.totalorder %s88, %s91
      %p97 = scmp.eq.s32.totalorder %s10, 0
      %p98 = por %p96, %p97
      %p99 = scmp.ne.s32.totalorder %s88, %s91
      %p100 = scmp.eq.s32.totalorder %s15, 1
      %p101 = por %p99, %p100
      %p102 = scmp.ne.s32.totalorder %s91, %s92
      %p103 = scmp.eq.s32.totalorder %s15, 0
      %p104 = por %p102, %p103
      %p105 = scmp.ne.s32.totalorder %s91, %s92
      %p106 = scmp.eq.s32.totalorder %s16, 1
      %p107 = por %p105, %p106
      %p109 = scmp.ne.s32.totalorder %s92, %s108
      %p110 = scmp.eq.s32.totalorder %s16, 0
      %p111 = por %p109, %p110
      %s112 = ssub.s32 %s17, %s29
      %s113 = ssub.s32 %s18, %s25
      %s114 = sor.u32 %s112, %s113
      %p115 = scmp.eq.s32.totalorder %s114, 0
      %s117 = sadd.s32 %s116, 1
      %s118 = scalar_select %p115, %s116, %s117
      %p121 = pneg %p115
      %p122 = scmp.eq.s32.totalorder %s10, 1
      %p123 = por %p121, %p122
      %p124 = scmp.ne.s32.totalorder %s116, %s119
      %p125 = scmp.eq.s32.totalorder %s10, 0
      %p126 = por %p124, %p125
      %p127 = scmp.ne.s32.totalorder %s116, %s119
      %p128 = scmp.eq.s32.totalorder %s15, 1
      %p129 = por %p127, %p128
      %p130 = scmp.ne.s32.totalorder %s119, %s120
      %p131 = scmp.eq.s32.totalorder %s15, 0
      %p132 = por %p130, %p131
      %p133 = scmp.ne.s32.totalorder %s119, %s120
      %p134 = scmp.eq.s32.totalorder %s16, 1
      %p135 = por %p133, %p134
      %p137 = scmp.ne.s32.totalorder %s120, %s136
      %p138 = scmp.eq.s32.totalorder %s16, 0
      %p139 = por %p137, %p138
      %s140 = ssub.s32 %s17, %s29
      %p141 = scmp.eq.s32.totalorder %s140, 0
      %s143 = sadd.s32 %s142, 1
      %s144 = scalar_select %p141, %s142, %s143
      %p147 = pneg %p141
      %p148 = scmp.eq.s32.totalorder %s10, 1
      %p149 = por %p147, %p148
      %p150 = scmp.ne.s32.totalorder %s142, %s145
      %p151 = scmp.eq.s32.totalorder %s10, 0
      %p152 = por %p150, %p151
      %p153 = scmp.ne.s32.totalorder %s142, %s145
      %p154 = scmp.eq.s32.totalorder %s15, 1
      %p155 = por %p153, %p154
      %p156 = scmp.ne.s32.totalorder %s145, %s146
      %p157 = scmp.eq.s32.totalorder %s15, 0
      %p158 = por %p156, %p157
      %p159 = scmp.ne.s32.totalorder %s145, %s146
      %p160 = scmp.eq.s32.totalorder %s16, 1
      %p161 = por %p159, %p160
      %p163 = scmp.ne.s32.totalorder %s146, %s162
      %p164 = scmp.eq.s32.totalorder %s16, 0
      %p165 = por %p163, %p164
      %p166 = scmp.le.s32.totalorder 1, %s10
      %p167 = scmp.lt.s32.totalorder %s10, 3
      %p168 = pnand %p166, %p167
      %p169 = pneg %p168
      // Predicated region
      $region9: #{bert_forward.14} parent=5 // pred_check
        _
      $region10: #{bert_forward.14} parent=5 // pred_check_branch
        %171 = sbr.rel (%p168) target = $region12
      $region11: #{bert_forward.14} parent=5 // pred_region
        %s172 = ssub.s32 %s10, 1
      $region12: #{bert_forward.14} parent=5 // pred_fallthru
        _
      %p173 = scmp.lt.s32.totalorder %s10, 2
      // Predicated region
      $region13: #{bert_forward.14} parent=5 // pred_check
        %p174 = pneg %p173
      $region14: #{bert_forward.14} parent=5 // pred_check_branch
        %176 = sbr.rel (%p174) target = $region16
      $region15: #{bert_forward.14} parent=5 // pred_region
        // Predicated region
        $region17: #{bert_forward.14} parent=15 // pred_check
          %p177 = pneg %p42
        $region18: #{bert_forward.14} parent=15 // pred_check_branch
          %179 = sbr.rel (%p177) target = $region20
        $region19: #{bert_forward.14} parent=15 // pred_region
          %s180 = sand.u32 %s32, 1
          %s181 = sand.u32 %s32, 1
          %s182 = smul.addr %s181, 16
          %s183 = scalar_lea.vmem [#allocation5], %s182
          %s184 = smul.addr %s17, 24
          %s185 = smul.addr %s184, 2
          %s186 = scalar_lea.vmem %s0, %s185
          // Predicated region
          $region21: #{bert_forward.14} parent=19 // pred_check
            _
          $region22: #{bert_forward.14} parent=19 // pred_check_branch
            %188 = sbr.rel (0) target = $region24
          $region23: #{bert_forward.14} parent=19 // pred_region
            // Predicated region
            $region25: #{bert_forward.14} parent=23 // pred_check
              _
            $region26: #{bert_forward.14} parent=23 // pred_check_branch
              %190 = sbr.rel target = $region28
            $region27: #{bert_forward.14} parent=23 // pred_region
              // Predicated region
              $region40: #{bert_forward.14} parent=27 // pred_check
                _
              $region41: #{bert_forward.14} parent=27 // pred_check_branch
                %219 = sbr.rel (0) target = $region43
              $region42: #{bert_forward.14} parent=27 // pred_region
                loop: start=0, step=1, limit=1
                $region44: #{bert_forward.14} parent=42 // loop_pre_header
                  _
                $region45: #{bert_forward.14} parent=42 // loop_header
                  %s221 = sphi 0, %s225
                  %p222 = scmp.ge.s32.totalorder %s221, 1
                  %s226 = sphi %s186, %s186
                  %s227 = sphi %s183, %s183
                $region46: #{bert_forward.14} parent=42 // loop_header_branch
                  %224 = sbr.rel (%p222) target = $region50
                $region47: #{bert_forward.14} parent=42 // loop_body
                  _
                $region48: #{bert_forward.14} parent=42 // loop_footer
                  %s225 = sadd.s32 1, %s221
                $region49: #{bert_forward.14} parent=42 // loop_footer_branch
                  %220 = sbr.rel target = $region45
                $region50: #{bert_forward.14} parent=42 // loop_exit
                  _
                loop: start=0, step=1, limit=1
                $region51: #{bert_forward.14} parent=42 // loop_pre_header
                  _
                $region52: #{bert_forward.14} parent=42 // loop_header
                  %s230 = sphi 0, %s234
                  %p231 = scmp.ge.s32.totalorder %s230, 1
                  %s235 = sphi %s186, %s186
                  %s236 = sphi %s183, %s183
                $region53: #{bert_forward.14} parent=42 // loop_header_branch
                  %233 = sbr.rel (%p231) target = $region57
                $region54: #{bert_forward.14} parent=42 // loop_body
                  %v237 = vld [vmem:[%s235] sm:$0x3]
                  %238 = vst [vmem:[%s236] sm:$0x3] %v237
                  %v239 = vld [vmem:[%s235 + $0x6] sm:$0x3]
                  %240 = vst [vmem:[%s236 + $0x2] sm:$0x3] %v239
                  %v241 = vld [vmem:[%s235 + $0xc] sm:$0x3]
                  %242 = vst [vmem:[%s236 + $0x4] sm:$0x3] %v241
                  %v243 = vld [vmem:[%s235 + $0x12] sm:$0x3]
                  %244 = vst [vmem:[%s236 + $0x6] sm:$0x3] %v243
                  %v245 = vld [vmem:[%s235 + $0x18] sm:$0x3]
                  %246 = vst [vmem:[%s236 + $0x8] sm:$0x3] %v245
                  %v247 = vld [vmem:[%s235 + $0x1e] sm:$0x3]
                  %248 = vst [vmem:[%s236 + $0xa] sm:$0x3] %v247
                  %v249 = vld [vmem:[%s235 + $0x24] sm:$0x3]
                  %250 = vst [vmem:[%s236 + $0xc] sm:$0x3] %v249
                  %v251 = vld [vmem:[%s235 + $0x2a] sm:$0x3]
                  %252 = vst [vmem:[%s236 + $0xe] sm:$0x3] %v251
                $region55: #{bert_forward.14} parent=42 // loop_footer
                  %s234 = sadd.s32 1, %s230
                $region56: #{bert_forward.14} parent=42 // loop_footer_branch
                  %229 = sbr.rel target = $region52
                $region57: #{bert_forward.14} parent=42 // loop_exit
                  _
              $region43: #{bert_forward.14} parent=27 // pred_fallthru
                _
            $region28: #{bert_forward.14} parent=23 // pred_fallthru
              _
            // Predicated region
            $region29: #{bert_forward.14} parent=23 // pred_check
              _
            $region30: #{bert_forward.14} parent=23 // pred_check_branch
              %192 = sbr.rel (0) target = $region32
            $region31: #{bert_forward.14} parent=23 // pred_region
              loop: start=0, step=1, limit=1
              $region33: #{bert_forward.14} parent=31 // loop_pre_header
                _
              $region34: #{bert_forward.14} parent=31 // loop_header
                %s195 = sphi 0, %s199
                %p196 = scmp.ge.s32.totalorder %s195, 1
                %s200 = sphi %s186, %s186
                %s201 = sphi %s183, %s183
              $region35: #{bert_forward.14} parent=31 // loop_header_branch
                %198 = sbr.rel (%p196) target = $region39
              $region36: #{bert_forward.14} parent=31 // loop_body
                %v202 = vld [vmem:[%s200] sm:$0x3]
                %203 = vst [vmem:[%s201] sm:$0x3] %v202
                %v204 = vld [vmem:[%s200 + $0x6] sm:$0x3]
                %205 = vst [vmem:[%s201 + $0x2] sm:$0x3] %v204
                %v206 = vld [vmem:[%s200 + $0xc] sm:$0x3]
                %207 = vst [vmem:[%s201 + $0x4] sm:$0x3] %v206
                %v208 = vld [vmem:[%s200 + $0x12] sm:$0x3]
                %209 = vst [vmem:[%s201 + $0x6] sm:$0x3] %v208
                %v210 = vld [vmem:[%s200 + $0x18] sm:$0x3]
                %211 = vst [vmem:[%s201 + $0x8] sm:$0x3] %v210
                %v212 = vld [vmem:[%s200 + $0x1e] sm:$0x3]
                %213 = vst [vmem:[%s201 + $0xa] sm:$0x3] %v212
                %v214 = vld [vmem:[%s200 + $0x24] sm:$0x3]
                %215 = vst [vmem:[%s201 + $0xc] sm:$0x3] %v214
                %v216 = vld [vmem:[%s200 + $0x2a] sm:$0x3]
                %217 = vst [vmem:[%s201 + $0xe] sm:$0x3] %v216
              $region37: #{bert_forward.14} parent=31 // loop_footer
                %s199 = sadd.s32 1, %s195
              $region38: #{bert_forward.14} parent=31 // loop_footer_branch
                %194 = sbr.rel target = $region34
              $region39: #{bert_forward.14} parent=31 // loop_exit
                _
            $region32: #{bert_forward.14} parent=23 // pred_fallthru
              _
          $region24: #{bert_forward.14} parent=19 // pred_fallthru
            _
          %253 = vnop
        $region20: #{bert_forward.14} parent=15 // pred_fallthru
          _
        // Predicated region
        $region58: #{bert_forward.14} parent=15 // pred_check
          %p254 = pneg %p70
        $region59: #{bert_forward.14} parent=15 // pred_check_branch
          %256 = sbr.rel (%p254) target = $region61
        $region60: #{bert_forward.14} parent=15 // pred_region
          %s257 = sand.u32 %s60, 1
          %s258 = sand.u32 %s60, 1
          %s259 = smul.addr %s258, 16
          %s260 = scalar_lea.vmem [#allocation6], %s259
          %s261 = smul.u32 8, %s18
          %s262 = smul.addr %s261, 3
          %s263 = sadd.s32 1, %s262
          %s264 = smul.addr %s17, 24
          %s265 = sadd.s32 %s263, %s264
          %s266 = smul.addr %s265, 2
          %s267 = scalar_lea.vmem %s1, %s266
          // Predicated region
          $region62: #{bert_forward.14} parent=60 // pred_check
            _
          $region63: #{bert_forward.14} parent=60 // pred_check_branch
            %269 = sbr.rel (0) target = $region65
          $region64: #{bert_forward.14} parent=60 // pred_region
            // Predicated region
            $region66: #{bert_forward.14} parent=64 // pred_check
              _
            $region67: #{bert_forward.14} parent=64 // pred_check_branch
              %271 = sbr.rel target = $region69
            $region68: #{bert_forward.14} parent=64 // pred_region
              // Predicated region
              $region81: #{bert_forward.14} parent=68 // pred_check
                _
              $region82: #{bert_forward.14} parent=68 // pred_check_branch
                %300 = sbr.rel (0) target = $region84
              $region83: #{bert_forward.14} parent=68 // pred_region
                loop: start=0, step=1, limit=1
                $region85: #{bert_forward.14} parent=83 // loop_pre_header
                  _
                $region86: #{bert_forward.14} parent=83 // loop_header
                  %s302 = sphi 0, %s306
                  %p303 = scmp.ge.s32.totalorder %s302, 1
                  %s307 = sphi %s267, %s267
                  %s308 = sphi %s260, %s260
                $region87: #{bert_forward.14} parent=83 // loop_header_branch
                  %305 = sbr.rel (%p303) target = $region91
                $region88: #{bert_forward.14} parent=83 // loop_body
                  _
                $region89: #{bert_forward.14} parent=83 // loop_footer
                  %s306 = sadd.s32 1, %s302
                $region90: #{bert_forward.14} parent=83 // loop_footer_branch
                  %301 = sbr.rel target = $region86
                $region91: #{bert_forward.14} parent=83 // loop_exit
                  _
                loop: start=0, step=1, limit=1
                $region92: #{bert_forward.14} parent=83 // loop_pre_header
                  _
                $region93: #{bert_forward.14} parent=83 // loop_header
                  %s311 = sphi 0, %s315
                  %p312 = scmp.ge.s32.totalorder %s311, 1
                  %s316 = sphi %s267, %s267
                  %s317 = sphi %s260, %s260
                $region94: #{bert_forward.14} parent=83 // loop_header_branch
                  %314 = sbr.rel (%p312) target = $region98
                $region95: #{bert_forward.14} parent=83 // loop_body
                  %v318 = vld [vmem:[%s316] sm:$0x3]
                  %319 = vst [vmem:[%s317] sm:$0x3] %v318
                  %v320 = vld [vmem:[%s316 + $0x6] sm:$0x3]
                  %321 = vst [vmem:[%s317 + $0x2] sm:$0x3] %v320
                  %v322 = vld [vmem:[%s316 + $0xc] sm:$0x3]
                  %323 = vst [vmem:[%s317 + $0x4] sm:$0x3] %v322
                  %v324 = vld [vmem:[%s316 + $0x12] sm:$0x3]
                  %325 = vst [vmem:[%s317 + $0x6] sm:$0x3] %v324
                  %v326 = vld [vmem:[%s316 + $0x18] sm:$0x3]
                  %327 = vst [vmem:[%s317 + $0x8] sm:$0x3] %v326
                  %v328 = vld [vmem:[%s316 + $0x1e] sm:$0x3]
                  %329 = vst [vmem:[%s317 + $0xa] sm:$0x3] %v328
                  %v330 = vld [vmem:[%s316 + $0x24] sm:$0x3]
                  %331 = vst [vmem:[%s317 + $0xc] sm:$0x3] %v330
                  %v332 = vld [vmem:[%s316 + $0x2a] sm:$0x3]
                  %333 = vst [vmem:[%s317 + $0xe] sm:$0x3] %v332
                $region96: #{bert_forward.14} parent=83 // loop_footer
                  %s315 = sadd.s32 1, %s311
                $region97: #{bert_forward.14} parent=83 // loop_footer_branch
                  %310 = sbr.rel target = $region93
                $region98: #{bert_forward.14} parent=83 // loop_exit
                  _
              $region84: #{bert_forward.14} parent=68 // pred_fallthru
                _
            $region69: #{bert_forward.14} parent=64 // pred_fallthru
              _
            // Predicated region
            $region70: #{bert_forward.14} parent=64 // pred_check
              _
            $region71: #{bert_forward.14} parent=64 // pred_check_branch
              %273 = sbr.rel (0) target = $region73
            $region72: #{bert_forward.14} parent=64 // pred_region
              loop: start=0, step=1, limit=1
              $region74: #{bert_forward.14} parent=72 // loop_pre_header
                _
              $region75: #{bert_forward.14} parent=72 // loop_header
                %s276 = sphi 0, %s280
                %p277 = scmp.ge.s32.totalorder %s276, 1
                %s281 = sphi %s267, %s267
                %s282 = sphi %s260, %s260
              $region76: #{bert_forward.14} parent=72 // loop_header_branch
                %279 = sbr.rel (%p277) target = $region80
              $region77: #{bert_forward.14} parent=72 // loop_body
                %v283 = vld [vmem:[%s281] sm:$0x3]
                %284 = vst [vmem:[%s282] sm:$0x3] %v283
                %v285 = vld [vmem:[%s281 + $0x6] sm:$0x3]
                %286 = vst [vmem:[%s282 + $0x2] sm:$0x3] %v285
                %v287 = vld [vmem:[%s281 + $0xc] sm:$0x3]
                %288 = vst [vmem:[%s282 + $0x4] sm:$0x3] %v287
                %v289 = vld [vmem:[%s281 + $0x12] sm:$0x3]
                %290 = vst [vmem:[%s282 + $0x6] sm:$0x3] %v289
                %v291 = vld [vmem:[%s281 + $0x18] sm:$0x3]
                %292 = vst [vmem:[%s282 + $0x8] sm:$0x3] %v291
                %v293 = vld [vmem:[%s281 + $0x1e] sm:$0x3]
                %294 = vst [vmem:[%s282 + $0xa] sm:$0x3] %v293
                %v295 = vld [vmem:[%s281 + $0x24] sm:$0x3]
                %296 = vst [vmem:[%s282 + $0xc] sm:$0x3] %v295
                %v297 = vld [vmem:[%s281 + $0x2a] sm:$0x3]
                %298 = vst [vmem:[%s282 + $0xe] sm:$0x3] %v297
              $region78: #{bert_forward.14} parent=72 // loop_footer
                %s280 = sadd.s32 1, %s276
              $region79: #{bert_forward.14} parent=72 // loop_footer_branch
                %275 = sbr.rel target = $region75
              $region80: #{bert_forward.14} parent=72 // loop_exit
                _
            $region73: #{bert_forward.14} parent=64 // pred_fallthru
              _
          $region65: #{bert_forward.14} parent=60 // pred_fallthru
            _
          %334 = vnop
        $region61: #{bert_forward.14} parent=15 // pred_fallthru
          _
        // Predicated region
        $region99: #{bert_forward.14} parent=15 // pred_check
          %p335 = pneg %p98
        $region100: #{bert_forward.14} parent=15 // pred_check_branch
          %337 = sbr.rel (%p335) target = $region102
        $region101: #{bert_forward.14} parent=15 // pred_region
          %s338 = sand.u32 %s88, 1
          %s339 = sand.u32 %s88, 1
          %s340 = smul.addr %s339, 16
          %s341 = scalar_lea.vmem [#allocation7], %s340
          %s342 = smul.u32 8, %s18
          %s343 = smul.addr %s342, 3
          %s344 = sadd.s32 2, %s343
          %s345 = smul.addr %s17, 24
          %s346 = sadd.s32 %s344, %s345
          %s347 = smul.addr %s346, 2
          %s348 = scalar_lea.vmem %s2, %s347
          // Predicated region
          $region103: #{bert_forward.14} parent=101 // pred_check
            _
          $region104: #{bert_forward.14} parent=101 // pred_check_branch
            %350 = sbr.rel (0) target = $region106
          $region105: #{bert_forward.14} parent=101 // pred_region
            // Predicated region
            $region107: #{bert_forward.14} parent=105 // pred_check
              _
            $region108: #{bert_forward.14} parent=105 // pred_check_branch
              %352 = sbr.rel target = $region110
            $region109: #{bert_forward.14} parent=105 // pred_region
              // Predicated region
              $region122: #{bert_forward.14} parent=109 // pred_check
                _
              $region123: #{bert_forward.14} parent=109 // pred_check_branch
                %381 = sbr.rel (0) target = $region125
              $region124: #{bert_forward.14} parent=109 // pred_region
                loop: start=0, step=1, limit=1
                $region126: #{bert_forward.14} parent=124 // loop_pre_header
                  _
                $region127: #{bert_forward.14} parent=124 // loop_header
                  %s383 = sphi 0, %s387
                  %p384 = scmp.ge.s32.totalorder %s383, 1
                  %s388 = sphi %s348, %s348
                  %s389 = sphi %s341, %s341
                $region128: #{bert_forward.14} parent=124 // loop_header_branch
                  %386 = sbr.rel (%p384) target = $region132
                $region129: #{bert_forward.14} parent=124 // loop_body
                  _
                $region130: #{bert_forward.14} parent=124 // loop_footer
                  %s387 = sadd.s32 1, %s383
                $region131: #{bert_forward.14} parent=124 // loop_footer_branch
                  %382 = sbr.rel target = $region127
                $region132: #{bert_forward.14} parent=124 // loop_exit
                  _
                loop: start=0, step=1, limit=1
                $region133: #{bert_forward.14} parent=124 // loop_pre_header
                  _
                $region134: #{bert_forward.14} parent=124 // loop_header
                  %s392 = sphi 0, %s396
                  %p393 = scmp.ge.s32.totalorder %s392, 1
                  %s397 = sphi %s348, %s348
                  %s398 = sphi %s341, %s341
                $region135: #{bert_forward.14} parent=124 // loop_header_branch
                  %395 = sbr.rel (%p393) target = $region139
                $region136: #{bert_forward.14} parent=124 // loop_body
                  %v399 = vld [vmem:[%s397] sm:$0x3]
                  %400 = vst [vmem:[%s398] sm:$0x3] %v399
                  %v401 = vld [vmem:[%s397 + $0x6] sm:$0x3]
                  %402 = vst [vmem:[%s398 + $0x2] sm:$0x3] %v401
                  %v403 = vld [vmem:[%s397 + $0xc] sm:$0x3]
                  %404 = vst [vmem:[%s398 + $0x4] sm:$0x3] %v403
                  %v405 = vld [vmem:[%s397 + $0x12] sm:$0x3]
                  %406 = vst [vmem:[%s398 + $0x6] sm:$0x3] %v405
                  %v407 = vld [vmem:[%s397 + $0x18] sm:$0x3]
                  %408 = vst [vmem:[%s398 + $0x8] sm:$0x3] %v407
                  %v409 = vld [vmem:[%s397 + $0x1e] sm:$0x3]
                  %410 = vst [vmem:[%s398 + $0xa] sm:$0x3] %v409
                  %v411 = vld [vmem:[%s397 + $0x24] sm:$0x3]
                  %412 = vst [vmem:[%s398 + $0xc] sm:$0x3] %v411
                  %v413 = vld [vmem:[%s397 + $0x2a] sm:$0x3]
                  %414 = vst [vmem:[%s398 + $0xe] sm:$0x3] %v413
                $region137: #{bert_forward.14} parent=124 // loop_footer
                  %s396 = sadd.s32 1, %s392
                $region138: #{bert_forward.14} parent=124 // loop_footer_branch
                  %391 = sbr.rel target = $region134
                $region139: #{bert_forward.14} parent=124 // loop_exit
                  _
              $region125: #{bert_forward.14} parent=109 // pred_fallthru
                _
            $region110: #{bert_forward.14} parent=105 // pred_fallthru
              _
            // Predicated region
            $region111: #{bert_forward.14} parent=105 // pred_check
              _
            $region112: #{bert_forward.14} parent=105 // pred_check_branch
              %354 = sbr.rel (0) target = $region114
            $region113: #{bert_forward.14} parent=105 // pred_region
              loop: start=0, step=1, limit=1
              $region115: #{bert_forward.14} parent=113 // loop_pre_header
                _
              $region116: #{bert_forward.14} parent=113 // loop_header
                %s357 = sphi 0, %s361
                %p358 = scmp.ge.s32.totalorder %s357, 1
                %s362 = sphi %s348, %s348
                %s363 = sphi %s341, %s341
              $region117: #{bert_forward.14} parent=113 // loop_header_branch
                %360 = sbr.rel (%p358) target = $region121
              $region118: #{bert_forward.14} parent=113 // loop_body
                %v364 = vld [vmem:[%s362] sm:$0x3]
                %365 = vst [vmem:[%s363] sm:$0x3] %v364
                %v366 = vld [vmem:[%s362 + $0x6] sm:$0x3]
                %367 = vst [vmem:[%s363 + $0x2] sm:$0x3] %v366
                %v368 = vld [vmem:[%s362 + $0xc] sm:$0x3]
                %369 = vst [vmem:[%s363 + $0x4] sm:$0x3] %v368
                %v370 = vld [vmem:[%s362 + $0x12] sm:$0x3]
                %371 = vst [vmem:[%s363 + $0x6] sm:$0x3] %v370
                %v372 = vld [vmem:[%s362 + $0x18] sm:$0x3]
                %373 = vst [vmem:[%s363 + $0x8] sm:$0x3] %v372
                %v374 = vld [vmem:[%s362 + $0x1e] sm:$0x3]
                %375 = vst [vmem:[%s363 + $0xa] sm:$0x3] %v374
                %v376 = vld [vmem:[%s362 + $0x24] sm:$0x3]
                %377 = vst [vmem:[%s363 + $0xc] sm:$0x3] %v376
                %v378 = vld [vmem:[%s362 + $0x2a] sm:$0x3]
                %379 = vst [vmem:[%s363 + $0xe] sm:$0x3] %v378
              $region119: #{bert_forward.14} parent=113 // loop_footer
                %s361 = sadd.s32 1, %s357
              $region120: #{bert_forward.14} parent=113 // loop_footer_branch
                %356 = sbr.rel target = $region116
              $region121: #{bert_forward.14} parent=113 // loop_exit
                _
            $region114: #{bert_forward.14} parent=105 // pred_fallthru
              _
          $region106: #{bert_forward.14} parent=101 // pred_fallthru
            _
          %415 = vnop
        $region102: #{bert_forward.14} parent=15 // pred_fallthru
          _
        // Predicated region
        $region140: #{bert_forward.14} parent=15 // pred_check
          %p416 = pneg %p126
        $region141: #{bert_forward.14} parent=15 // pred_check_branch
          %418 = sbr.rel (%p416) target = $region143
        $region142: #{bert_forward.14} parent=15 // pred_region
          %p419 = scmp.lt.s32.totalorder %s17, 1
          %s420 = scalar_select %p419, %s17, 1
          %p421 = scmp.lt.s32.totalorder %s18, 0
          %s422 = scalar_select %p421, %s18, 0
          %s423 = sadd.s32 %s422, %s420
          %s424 = scalar_lea.vmem %s3, %s423
        $region143: #{bert_forward.14} parent=15 // pred_fallthru
          _
      $region16: #{bert_forward.14} parent=5 // pred_fallthru
        _
      %p425 = scmp.le.s32.totalorder 1, %s10
      %p426 = scmp.lt.s32.totalorder %s10, 3
      %p427 = pnand %p425, %p426
      %p428 = pneg %p427
      // Predicated region
      $region144: #{bert_forward.14} parent=5 // pred_check
        _
      $region145: #{bert_forward.14} parent=5 // pred_check_branch
        %430 = sbr.rel (%p427) target = $region147
      $region146: #{bert_forward.14} parent=5 // pred_region
        %s431 = ssub.s32 %s10, 1
        %s432 = sand.u32 %s35, 1
        %s433 = sand.u32 %s35, 1
        %s434 = smul.addr %s433, 16
        %s435 = scalar_lea.vmem [#allocation5], %s434
        // Predicated region
        $region148: #{bert_forward.14} parent=146 // pred_check
          %p436 = pneg %p48
        $region149: #{bert_forward.14} parent=146 // pred_check_branch
          %438 = sbr.rel (%p436) target = $region151
        $region150: #{bert_forward.14} parent=146 // pred_region
          _
        $region151: #{bert_forward.14} parent=146 // pred_fallthru
          _
        %s439 = sand.u32 %s63, 1
        %s440 = sand.u32 %s63, 1
        %s441 = smul.addr %s440, 16
        %s442 = scalar_lea.vmem [#allocation6], %s441
        // Predicated region
        $region152: #{bert_forward.14} parent=146 // pred_check
          %p443 = pneg %p76
        $region153: #{bert_forward.14} parent=146 // pred_check_branch
          %445 = sbr.rel (%p443) target = $region155
        $region154: #{bert_forward.14} parent=146 // pred_region
          _
        $region155: #{bert_forward.14} parent=146 // pred_fallthru
          _
        %s446 = sand.u32 %s91, 1
        %s447 = sand.u32 %s91, 1
        %s448 = smul.addr %s447, 16
        %s449 = scalar_lea.vmem [#allocation7], %s448
        // Predicated region
        $region156: #{bert_forward.14} parent=146 // pred_check
          %p450 = pneg %p104
        $region157: #{bert_forward.14} parent=146 // pred_check_branch
          %452 = sbr.rel (%p450) target = $region159
        $region158: #{bert_forward.14} parent=146 // pred_region
          _
        $region159: #{bert_forward.14} parent=146 // pred_fallthru
          _
        %s453 = sand.u32 %s35, 1
        %s454 = sand.u32 %s35, 1
        %s455 = smul.addr %s454, 16
        %s456 = scalar_lea.vmem [#allocation5], %s455
        %p457 = pneg %p48
        %p458 = pneg %p45
        %s459 = sand.u32 %s63, 1
        %s460 = sand.u32 %s63, 1
        %s461 = smul.addr %s460, 16
        %s462 = scalar_lea.vmem [#allocation6], %s461
        %p463 = pneg %p76
        %p464 = pneg %p73
        %s465 = sand.u32 %s91, 1
        %s466 = sand.u32 %s91, 1
        %s467 = smul.addr %s466, 16
        %s468 = scalar_lea.vmem [#allocation7], %s467
        %p469 = pneg %p104
        %p470 = pneg %p101
        %p471 = scmp.lt.s32.totalorder %s19, 1
        %s472 = scalar_select %p471, %s19, 1
        %p473 = scmp.lt.s32.totalorder %s20, 0
        %s474 = scalar_select %p473, %s20, 0
        %s475 = sadd.s32 %s474, %s472
        %s476 = scalar_lea.vmem %s3, %s475
        %p477 = pneg %p132
        %p478 = pneg %p129
        %p479 = pneg %p158
        %p480 = pneg %p155
        %p481 = scmp.lt.s32.totalorder %s19, 1
        %s482 = scalar_select %p481, %s19, 1
        %s483 = smul.addr %s482, 4
        %s484 = scalar_lea.vmem %s4, %s483
        %s485 = smul.u32 8, %s20
        %s486 = smul.u32 8, %s20
        %p487 = scmp.lt.s32.totalorder %s19, 1
        %s488 = scalar_select %p487, %s19, 1
        %p489 = scmp.lt.s32.totalorder %s20, 0
        %s490 = scalar_select %p489, %s20, 0
        %s491 = sadd.s32 %s490, %s488
        %s492 = scalar_lea.vmem %s3, %s491
        %p493 = scmp.lt.s32.totalorder %s19, 1
        %s494 = scalar_select %p493, %s19, 1
        %s495 = smul.addr %s494, 4
        %s496 = scalar_lea.vmem %s4, %s495
        %p498 = scmp.eq.s32.totalorder %s20, 0
        // Predicated region
        $region160: #{bert_forward.14} parent=146 // pred_check
          %p499 = pneg %p498
        $region161: #{bert_forward.14} parent=146 // pred_check_branch
          %501 = sbr.rel (%p499) target = $region163
        $region162: #{bert_forward.14} parent=146 // pred_region
          %vm502 = vcmask 7168
          %503 = vst.msk [vmem:[#allocation2] sm:$0xff] %vm502, -1e+30
          %504 = vst.msk [vmem:[#allocation2 + $0x8] sm:$0xff] %vm502, -1e+30
          %505 = vst.msk [vmem:[#allocation2 + $0x10] sm:$0xff] %vm502, -1e+30
          %506 = vst.msk [vmem:[#allocation2 + $0x18] sm:$0xff] %vm502, -1e+30
          %507 = vst.msk [vmem:[#allocation3] sm:$0xff] %vm502, 0.0
          %508 = vst.msk [vmem:[#allocation3 + $0x8] sm:$0xff] %vm502, 0.0
          %509 = vst.msk [vmem:[#allocation3 + $0x10] sm:$0xff] %vm502, 0.0
          %510 = vst.msk [vmem:[#allocation3 + $0x18] sm:$0xff] %vm502, 0.0
          %vm511 = vcmask 64512
          %512 = vst.msk [vmem:[#allocation4] sm:$0xff] %vm511, 0.0
          %513 = vst.msk [vmem:[#allocation4 + $0x8] sm:$0xff] %vm511, 0.0
          %514 = vst.msk [vmem:[#allocation4 + $0x10] sm:$0xff] %vm511, 0.0
          %515 = vst.msk [vmem:[#allocation4 + $0x18] sm:$0xff] %vm511, 0.0
        $region163: #{bert_forward.14} parent=146 // pred_fallthru
          _
        %v516 = vld [vmem:[%s492] sm:$0x1]
        %v517 = vsub.f32 1.0, %v516
        %v518 = vmul.f32 %v517, -1e+09
        %v519 = vld [vmem:[%s435] sm:$0x1]
        %v520 = vld [vmem:[%s435 + $0x2] sm:$0x1]
        %v521 = vld [vmem:[%s435 + $0x4] sm:$0x1]
        %v522 = vld [vmem:[%s435 + $0x6] sm:$0x1]
        %v523 = vld [vmem:[%s435 + $0x8] sm:$0x1]
        %v524 = vld [vmem:[%s435 + $0xa] sm:$0x1]
        %v525 = vld [vmem:[%s435 + $0xc] sm:$0x1]
        %v526 = vld [vmem:[%s435 + $0xe] sm:$0x1]
        %v527 = vld [vmem:[%s442] sm:$0x1]
        %v528 = vld [vmem:[%s442 + $0x2] sm:$0x1]
        %v529 = vld [vmem:[%s442 + $0x4] sm:$0x1]
        %v530 = vld [vmem:[%s442 + $0x6] sm:$0x1]
        %v531 = vld [vmem:[%s442 + $0x8] sm:$0x1]
        %v532 = vld [vmem:[%s442 + $0xa] sm:$0x1]
        %v533 = vld [vmem:[%s442 + $0xc] sm:$0x1]
        %v534 = vld [vmem:[%s442 + $0xe] sm:$0x1]
        %v535 = vld [vmem:[%s449] sm:$0x1]
        %v536 = vld [vmem:[%s449 + $0x2] sm:$0x1]
        %v537 = vld [vmem:[%s449 + $0x4] sm:$0x1]
        %v538 = vld [vmem:[%s449 + $0x6] sm:$0x1]
        %v539 = vld [vmem:[%s449 + $0x8] sm:$0x1]
        %v540 = vld [vmem:[%s449 + $0xa] sm:$0x1]
        %v541 = vld [vmem:[%s449 + $0xc] sm:$0x1]
        %v542 = vld [vmem:[%s449 + $0xe] sm:$0x1]
        %v552 = vunpack.c.l.s4 1983009808
        %v553 = vunpack.c.0.s8 %v552
        %v554 = vlaneseq
        %v555 = vshrl.u32 %v554, 7
        %v556 = vsub.s32 %v553, %v555
        %v557 = vrot.slane %v519, %v556
        %v559 = vunpack.c.l.s4 1983009808
        %v560 = vunpack.c.0.s8 %v559
        %v561 = vlaneseq
        %v562 = vshrl.u32 %v561, 7
        %v563 = vsub.s32 %v560, %v562
        %v564 = vrot.slane %v520, %v563
        %v566 = vunpack.c.l.s4 1983009808
        %v567 = vunpack.c.0.s8 %v566
        %v568 = vlaneseq
        %v569 = vshrl.u32 %v568, 7
        %v570 = vsub.s32 %v567, %v569
        %v571 = vrot.slane %v521, %v570
        %v573 = vunpack.c.l.s4 1983009808
        %v574 = vunpack.c.0.s8 %v573
        %v575 = vlaneseq
        %v576 = vshrl.u32 %v575, 7
        %v577 = vsub.s32 %v574, %v576
        %v578 = vrot.slane %v522, %v577
        %v580 = vunpack.c.l.s4 1983009808
        %v581 = vunpack.c.0.s8 %v580
        %v582 = vlaneseq
        %v583 = vshrl.u32 %v582, 7
        %v584 = vsub.s32 %v581, %v583
        %v585 = vrot.slane %v523, %v584
        %v587 = vunpack.c.l.s4 1983009808
        %v588 = vunpack.c.0.s8 %v587
        %v589 = vlaneseq
        %v590 = vshrl.u32 %v589, 7
        %v591 = vsub.s32 %v588, %v590
        %v592 = vrot.slane %v524, %v591
        %v594 = vunpack.c.l.s4 1983009808
        %v595 = vunpack.c.0.s8 %v594
        %v596 = vlaneseq
        %v597 = vshrl.u32 %v596, 7
        %v598 = vsub.s32 %v595, %v597
        %v599 = vrot.slane %v525, %v598
        %v601 = vunpack.c.l.s4 1983009808
        %v602 = vunpack.c.0.s8 %v601
        %v603 = vlaneseq
        %v604 = vshrl.u32 %v603, 7
        %v605 = vsub.s32 %v602, %v604
        %v606 = vrot.slane %v526, %v605
        %v607 = vunpack.c.l.b16 %v557
        %v608 = vunpack.c.l.b16 %v564
        %v609 = vunpack.c.l.b16 %v571
        %v610 = vunpack.c.l.b16 %v578
        %v611 = vunpack.c.l.b16 %v585
        %v612 = vunpack.c.l.b16 %v592
        %v613 = vunpack.c.l.b16 %v599
        %v614 = vunpack.c.l.b16 %v606
        %v615 = vrot.slane %v608, 7
        %vm616 = vcmask 1041409
        %v617 = vsel %vm616, %v615, %v607
        %v618 = vrot.slane %v609, 6
        %vm619 = vcmask 1042434
        %v620 = vsel %vm619, %v618, %v617
        %v621 = vrot.slane %v610, 5
        %vm622 = vcmask 1043459
        %v623 = vsel %vm622, %v621, %v620
        %v624 = vrot.slane %v611, 4
        %vm625 = vcmask 1044484
        %v626 = vsel %vm625, %v624, %v623
        %v627 = vrot.slane %v612, 3
        %vm628 = vcmask 1045509
        %v629 = vsel %vm628, %v627, %v626
        %v630 = vrot.slane %v613, 2
        %vm631 = vcmask 1046534
        %v632 = vsel %vm631, %v630, %v629
        %v633 = vrot.slane %v614, 1
        %vm634 = vcmask 1047559
        %v635 = vsel %vm634, %v633, %v632
        %v636 = vpack.c.b16 %v635, %v635
        %v646 = vunpack.c.l.s4 1983009808
        %v647 = vunpack.c.0.s8 %v646
        %v648 = vlaneseq
        %v649 = vshrl.u32 %v648, 7
        %v650 = vsub.s32 %v647, %v649
        %v651 = vrot.slane %v527, %v650
        %v653 = vunpack.c.l.s4 1983009808
        %v654 = vunpack.c.0.s8 %v653
        %v655 = vlaneseq
        %v656 = vshrl.u32 %v655, 7
        %v657 = vsub.s32 %v654, %v656
        %v658 = vrot.slane %v528, %v657
        %v660 = vunpack.c.l.s4 1983009808
        %v661 = vunpack.c.0.s8 %v660
        %v662 = vlaneseq
        %v663 = vshrl.u32 %v662, 7
        %v664 = vsub.s32 %v661, %v663
        %v665 = vrot.slane %v529, %v664
        %v667 = vunpack.c.l.s4 1983009808
        %v668 = vunpack.c.0.s8 %v667
        %v669 = vlaneseq
        %v670 = vshrl.u32 %v669, 7
        %v671 = vsub.s32 %v668, %v670
        %v672 = vrot.slane %v530, %v671
        %v674 = vunpack.c.l.s4 1983009808
        %v675 = vunpack.c.0.s8 %v674
        %v676 = vlaneseq
        %v677 = vshrl.u32 %v676, 7
        %v678 = vsub.s32 %v675, %v677
        %v679 = vrot.slane %v531, %v678
        %v681 = vunpack.c.l.s4 1983009808
        %v682 = vunpack.c.0.s8 %v681
        %v683 = vlaneseq
        %v684 = vshrl.u32 %v683, 7
        %v685 = vsub.s32 %v682, %v684
        %v686 = vrot.slane %v532, %v685
        %v688 = vunpack.c.l.s4 1983009808
        %v689 = vunpack.c.0.s8 %v688
        %v690 = vlaneseq
        %v691 = vshrl.u32 %v690, 7
        %v692 = vsub.s32 %v689, %v691
        %v693 = vrot.slane %v533, %v692
        %v695 = vunpack.c.l.s4 1983009808
        %v696 = vunpack.c.0.s8 %v695
        %v697 = vlaneseq
        %v698 = vshrl.u32 %v697, 7
        %v699 = vsub.s32 %v696, %v698
        %v700 = vrot.slane %v534, %v699
        %v701 = vunpack.c.l.b16 %v651
        %v702 = vunpack.c.l.b16 %v658
        %v703 = vunpack.c.l.b16 %v665
        %v704 = vunpack.c.l.b16 %v672
        %v705 = vunpack.c.l.b16 %v679
        %v706 = vunpack.c.l.b16 %v686
        %v707 = vunpack.c.l.b16 %v693
        %v708 = vunpack.c.l.b16 %v700
        %v709 = vrot.slane %v702, 7
        %v710 = vsel %vm616, %v709, %v701
        %v711 = vrot.slane %v703, 6
        %v712 = vsel %vm619, %v711, %v710
        %v713 = vrot.slane %v704, 5
        %v714 = vsel %vm622, %v713, %v712
        %v715 = vrot.slane %v705, 4
        %v716 = vsel %vm625, %v715, %v714
        %v717 = vrot.slane %v706, 3
        %v718 = vsel %vm628, %v717, %v716
        %v719 = vrot.slane %v707, 2
        %v720 = vsel %vm631, %v719, %v718
        %v721 = vrot.slane %v708, 1
        %v722 = vsel %vm634, %v721, %v720
        %v723 = vpack.c.b16 %v722, %v722
        %vm724 = vcmask 64512
        %v726 = vsel %vm724, %v636, 0
        %v729 = vsel %vm724, %v723, 0
        %731 = vmatprep.subr.bf16.mxu0 0
        %732 = vmatpush1.bf16.xpose.msra.mxu0 %v729
        %733 = vmatprep.subr.bf16.mxu0 0
        %734 = vmatpush1.bf16.xpose.msra.mxu0 0
        %735 = vmatprep.subr.bf16.mxu0 0
        %736 = vmatpush1.bf16.xpose.msra.mxu0 0
        %737 = vmatprep.subr.bf16.mxu0 0
        %738 = vmatpush1.bf16.xpose.msra.mxu0 0
        %739 = vmatprep.subr.bf16.mxu0 0
        %740 = vmatpush1.bf16.xpose.msra.mxu0 0
        %741 = vmatprep.subr.bf16.mxu0 0
        %742 = vmatpush1.bf16.xpose.msra.mxu0 0
        %743 = vmatprep.subr.bf16.mxu0 0
        %744 = vmatpush1.bf16.xpose.msra.mxu0 0
        %745 = vmatprep.subr.bf16.mxu0 0
        %746 = vmatpush1.bf16.xpose.msra.mxu0 0
        %747 = vmatprep.subr.bf16.mxu0 0
        %748 = vmatpush1.bf16.xpose.msra.mxu0 0
        %749 = vmatprep.subr.bf16.mxu0 0
        %750 = vmatpush1.bf16.xpose.msra.mxu0 0
        %751 = vmatprep.subr.bf16.mxu0 0
        %752 = vmatpush1.bf16.xpose.msra.mxu0 0
        %753 = vmatprep.subr.bf16.mxu0 0
        %754 = vmatpush1.bf16.xpose.msra.mxu0 0
        %755 = vmatprep.subr.bf16.mxu0 0
        %756 = vmatpush1.bf16.xpose.msra.mxu0 0
        %757 = vmatprep.subr.bf16.mxu0 0
        %758 = vmatpush1.bf16.xpose.msra.mxu0 0
        %759 = vmatprep.subr.bf16.mxu0 0
        %760 = vmatpush1.bf16.xpose.msra.mxu0 0
        %761 = vmatprep.subr.bf16.mxu0 0
        %762 = vmatpush1.bf16.xpose.msra.mxu0 0
        %763 = vmatprep.mubr.bf16.mxu0 0
        %764 = vmatmul.mubr.bf16.gmra.mrb[0].mxu0 %v726
        %v765 = vpop.f32.mrb[0].mxu0
        %v766 = vadd.f32 0.0, %v765
        %v767 = vpop.f32.mrb[0].mxu0
        %v768 = vpop.f32.mrb[0].mxu0
        %v769 = vpop.f32.mrb[0].mxu0
        %770 = vdwg.mxu0
        %v771 = vmul.f32 %v766, 0.35355338
        %v773 = vlaneseq
        %v774 = vshrl.u32 %v773, 7
        %v775 = vsub.s32 0, %v774
        %v776 = vrot.slane %v518, %v775
        %v778 = vadd.f32 %v771, %v776
        %v779 = vld [vmem:[#allocation2] sm:$0xff]
        %v780 = vsel %vm724, %v778, -inf
        %781 = vmax.xlane.f32.xlu0 %v780
        %v782 = vpop.xlane.xlu0 %781
        %v783 = vmax.f32 %v779, %v782
        %v784 = vsub.f32 %v779, %v783
        %v785 = vmul.f32 %v784, 1.442695
        %v786 = vpow.pop %v785
        %788 = vset.pattern.permute.xlu0 0
        %789 = vperm.xlu0 %788, %v783
        %v790 = vpop.permute.xlu0 %789
        %v792 = vsub.f32 %v778, %v790
        %v793 = vmul.f32 %v792, 1.442695
        %v794 = vpow.pop %v793
        %v795 = vld [vmem:[#allocation3] sm:$0xff]
        %v796 = vmul.f32 %v786, %v795
        %v797 = vsel %vm724, %v794, 0.0
        %798 = vadd.xlane.f32.xlu0 %v797
        %v799 = vpop.xlane.xlu0 %798
        %v800 = vadd.f32 %v796, %v799
        %vm801 = vcmask 7168
        %802 = vst.msk [vmem:[#allocation3] sm:$0xff] %vm801, %v800
        %v803 = vld [vmem:[#allocation4] sm:$0xff]
        %805 = vset.pattern.permute.xlu0 0
        %806 = vperm.xlu0 %805, %v786
        %v807 = vpop.permute.xlu0 %806
        %v809 = vmul.f32 %v807, %v803
        %v810 = vpack.c.bf16 %v794, %v794
        %v820 = vunpack.c.l.s4 1983009808
        %v821 = vunpack.c.0.s8 %v820
        %v822 = vlaneseq
        %v823 = vshrl.u32 %v822, 7
        %v824 = vsub.s32 %v821, %v823
        %v825 = vrot.slane %v535, %v824
        %v827 = vunpack.c.l.s4 1983009808
        %v828 = vunpack.c.0.s8 %v827
        %v829 = vlaneseq
        %v830 = vshrl.u32 %v829, 7
        %v831 = vsub.s32 %v828, %v830
        %v832 = vrot.slane %v536, %v831
        %v834 = vunpack.c.l.s4 1983009808
        %v835 = vunpack.c.0.s8 %v834
        %v836 = vlaneseq
        %v837 = vshrl.u32 %v836, 7
        %v838 = vsub.s32 %v835, %v837
        %v839 = vrot.slane %v537, %v838
        %v841 = vunpack.c.l.s4 1983009808
        %v842 = vunpack.c.0.s8 %v841
        %v843 = vlaneseq
        %v844 = vshrl.u32 %v843, 7
        %v845 = vsub.s32 %v842, %v844
        %v846 = vrot.slane %v538, %v845
        %v848 = vunpack.c.l.s4 1983009808
        %v849 = vunpack.c.0.s8 %v848
        %v850 = vlaneseq
        %v851 = vshrl.u32 %v850, 7
        %v852 = vsub.s32 %v849, %v851
        %v853 = vrot.slane %v539, %v852
        %v855 = vunpack.c.l.s4 1983009808
        %v856 = vunpack.c.0.s8 %v855
        %v857 = vlaneseq
        %v858 = vshrl.u32 %v857, 7
        %v859 = vsub.s32 %v856, %v858
        %v860 = vrot.slane %v540, %v859
        %v862 = vunpack.c.l.s4 1983009808
        %v863 = vunpack.c.0.s8 %v862
        %v864 = vlaneseq
        %v865 = vshrl.u32 %v864, 7
        %v866 = vsub.s32 %v863, %v865
        %v867 = vrot.slane %v541, %v866
        %v869 = vunpack.c.l.s4 1983009808
        %v870 = vunpack.c.0.s8 %v869
        %v871 = vlaneseq
        %v872 = vshrl.u32 %v871, 7
        %v873 = vsub.s32 %v870, %v872
        %v874 = vrot.slane %v542, %v873
        %v875 = vunpack.c.l.b16 %v825
        %v876 = vunpack.c.l.b16 %v832
        %v877 = vunpack.c.l.b16 %v839
        %v878 = vunpack.c.l.b16 %v846
        %v879 = vunpack.c.l.b16 %v853
        %v880 = vunpack.c.l.b16 %v860
        %v881 = vunpack.c.l.b16 %v867
        %v882 = vunpack.c.l.b16 %v874
        %v883 = vrot.slane %v876, 7
        %v884 = vsel %vm616, %v883, %v875
        %v885 = vrot.slane %v877, 6
        %v886 = vsel %vm619, %v885, %v884
        %v887 = vrot.slane %v878, 5
        %v888 = vsel %vm622, %v887, %v886
        %v889 = vrot.slane %v879, 4
        %v890 = vsel %vm625, %v889, %v888
        %v891 = vrot.slane %v880, 3
        %v892 = vsel %vm628, %v891, %v890
        %v893 = vrot.slane %v881, 2
        %v894 = vsel %vm631, %v893, %v892
        %v895 = vrot.slane %v882, 1
        %v896 = vsel %vm634, %v895, %v894
        %v897 = vpack.c.b16 %v896, %v896
        %v899 = vsel %vm724, %v810, 0
        %vm901 = vcmask 1043456
        %v903 = vsel %vm901, %v897, 0
        %905 = vmatprep.subr.bf16.mxu0 0
        %906 = vmatpush1.bf16.msra.mxu0 %v903
        %907 = vmatprep.subr.bf16.mxu0 0
        %908 = vmatpush1.bf16.msra.mxu0 0
        %909 = vmatprep.subr.bf16.mxu0 0
        %910 = vmatpush1.bf16.msra.mxu0 0
        %911 = vmatprep.subr.bf16.mxu0 0
        %912 = vmatpush1.bf16.msra.mxu0 0
        %913 = vmatprep.subr.bf16.mxu0 0
        %914 = vmatpush1.bf16.msra.mxu0 0
        %915 = vmatprep.subr.bf16.mxu0 0
        %916 = vmatpush1.bf16.msra.mxu0 0
        %917 = vmatprep.subr.bf16.mxu0 0
        %918 = vmatpush1.bf16.msra.mxu0 0
        %919 = vmatprep.subr.bf16.mxu0 0
        %920 = vmatpush1.bf16.msra.mxu0 0
        %921 = vmatprep.subr.bf16.mxu0 0
        %922 = vmatpush1.bf16.msra.mxu0 0
        %923 = vmatprep.subr.bf16.mxu0 0
        %924 = vmatpush1.bf16.msra.mxu0 0
        %925 = vmatprep.subr.bf16.mxu0 0
        %926 = vmatpush1.bf16.msra.mxu0 0
        %927 = vmatprep.subr.bf16.mxu0 0
        %928 = vmatpush1.bf16.msra.mxu0 0
        %929 = vmatprep.subr.bf16.mxu0 0
        %930 = vmatpush1.bf16.msra.mxu0 0
        %931 = vmatprep.subr.bf16.mxu0 0
        %932 = vmatpush1.bf16.msra.mxu0 0
        %933 = vmatprep.subr.bf16.mxu0 0
        %934 = vmatpush1.bf16.msra.mxu0 0
        %935 = vmatprep.subr.bf16.mxu0 0
        %936 = vmatpush1.bf16.msra.mxu0 0
        %937 = vmatprep.mubr.bf16.mxu0 0
        %938 = vmatmul.mubr.bf16.gmra.mrb[0].mxu0 %v899
        %v939 = vpop.f32.mrb[0].mxu0
        %v940 = vadd.f32 0.0, %v939
        %v941 = vpop.f32.mrb[0].mxu0
        %v942 = vpop.f32.mrb[0].mxu0
        %v943 = vpop.f32.mrb[0].mxu0
        %944 = vdwg.mxu0
        %v945 = vadd.f32 %v809, %v940
        %946 = vst.msk [vmem:[#allocation4] sm:$0xff] %vm724, %v945
        %947 = vst.msk [vmem:[#allocation2] sm:$0xff] %vm801, %v783
        %v948 = vld [vmem:[%s435] sm:$0x1]
        %v949 = vld [vmem:[%s435 + $0x2] sm:$0x1]
        %v950 = vld [vmem:[%s435 + $0x4] sm:$0x1]
        %v951 = vld [vmem:[%s435 + $0x6] sm:$0x1]
        %v952 = vld [vmem:[%s435 + $0x8] sm:$0x1]
        %v953 = vld [vmem:[%s435 + $0xa] sm:$0x1]
        %v954 = vld [vmem:[%s435 + $0xc] sm:$0x1]
        %v955 = vld [vmem:[%s435 + $0xe] sm:$0x1]
        %v956 = vld [vmem:[%s442] sm:$0x1]
        %v957 = vld [vmem:[%s442 + $0x2] sm:$0x1]
        %v958 = vld [vmem:[%s442 + $0x4] sm:$0x1]
        %v959 = vld [vmem:[%s442 + $0x6] sm:$0x1]
        %v960 = vld [vmem:[%s442 + $0x8] sm:$0x1]
        %v961 = vld [vmem:[%s442 + $0xa] sm:$0x1]
        %v962 = vld [vmem:[%s442 + $0xc] sm:$0x1]
        %v963 = vld [vmem:[%s442 + $0xe] sm:$0x1]
        %v964 = vld [vmem:[%s449] sm:$0x1]
        %v965 = vld [vmem:[%s449 + $0x2] sm:$0x1]
        %v966 = vld [vmem:[%s449 + $0x4] sm:$0x1]
        %v967 = vld [vmem:[%s449 + $0x6] sm:$0x1]
        %v968 = vld [vmem:[%s449 + $0x8] sm:$0x1]
        %v969 = vld [vmem:[%s449 + $0xa] sm:$0x1]
        %v970 = vld [vmem:[%s449 + $0xc] sm:$0x1]
        %v971 = vld [vmem:[%s449 + $0xe] sm:$0x1]
        %v981 = vunpack.c.l.s4 1983009808
        %v982 = vunpack.c.0.s8 %v981
        %v983 = vlaneseq
        %v984 = vshrl.u32 %v983, 7
        %v985 = vsub.s32 %v982, %v984
        %v986 = vrot.slane %v948, %v985
        %v988 = vunpack.c.l.s4 1983009808
        %v989 = vunpack.c.0.s8 %v988
        %v990 = vlaneseq
        %v991 = vshrl.u32 %v990, 7
        %v992 = vsub.s32 %v989, %v991
        %v993 = vrot.slane %v949, %v992
        %v995 = vunpack.c.l.s4 1983009808
        %v996 = vunpack.c.0.s8 %v995
        %v997 = vlaneseq
        %v998 = vshrl.u32 %v997, 7
        %v999 = vsub.s32 %v996, %v998
        %v1000 = vrot.slane %v950, %v999
        %v1002 = vunpack.c.l.s4 1983009808
        %v1003 = vunpack.c.0.s8 %v1002
        %v1004 = vlaneseq
        %v1005 = vshrl.u32 %v1004, 7
        %v1006 = vsub.s32 %v1003, %v1005
        %v1007 = vrot.slane %v951, %v1006
        %v1009 = vunpack.c.l.s4 1983009808
        %v1010 = vunpack.c.0.s8 %v1009
        %v1011 = vlaneseq
        %v1012 = vshrl.u32 %v1011, 7
        %v1013 = vsub.s32 %v1010, %v1012
        %v1014 = vrot.slane %v952, %v1013
        %v1016 = vunpack.c.l.s4 1983009808
        %v1017 = vunpack.c.0.s8 %v1016
        %v1018 = vlaneseq
        %v1019 = vshrl.u32 %v1018, 7
        %v1020 = vsub.s32 %v1017, %v1019
        %v1021 = vrot.slane %v953, %v1020
        %v1023 = vunpack.c.l.s4 1983009808
        %v1024 = vunpack.c.0.s8 %v1023
        %v1025 = vlaneseq
        %v1026 = vshrl.u32 %v1025, 7
        %v1027 = vsub.s32 %v1024, %v1026
        %v1028 = vrot.slane %v954, %v1027
        %v1030 = vunpack.c.l.s4 1983009808
        %v1031 = vunpack.c.0.s8 %v1030
        %v1032 = vlaneseq
        %v1033 = vshrl.u32 %v1032, 7
        %v1034 = vsub.s32 %v1031, %v1033
        %v1035 = vrot.slane %v955, %v1034
        %v1036 = vunpack.c.l.b16 %v986
        %v1037 = vunpack.c.l.b16 %v993
        %v1038 = vunpack.c.l.b16 %v1000
        %v1039 = vunpack.c.l.b16 %v1007
        %v1040 = vunpack.c.l.b16 %v1014
        %v1041 = vunpack.c.l.b16 %v1021
        %v1042 = vunpack.c.l.b16 %v1028
        %v1043 = vunpack.c.l.b16 %v1035
        %v1044 = vrot.slane %v1036, 1
        %v1045 = vsel %vm616, %v1037, %v1044
        %v1046 = vrot.slane %v1038, 7
        %v1047 = vsel %vm619, %v1046, %v1045
        %v1048 = vrot.slane %v1039, 6
        %v1049 = vsel %vm622, %v1048, %v1047
        %v1050 = vrot.slane %v1040, 5
        %v1051 = vsel %vm625, %v1050, %v1049
        %v1052 = vrot.slane %v1041, 4
        %v1053 = vsel %vm628, %v1052, %v1051
        %v1054 = vrot.slane %v1042, 3
        %v1055 = vsel %vm631, %v1054, %v1053
        %v1056 = vrot.slane %v1043, 2
        %v1057 = vsel %vm634, %v1056, %v1055
        %v1058 = vpack.c.b16 %v1057, %v1057
        %v1068 = vunpack.c.l.s4 1983009808
        %v1069 = vunpack.c.0.s8 %v1068
        %v1070 = vlaneseq
        %v1071 = vshrl.u32 %v1070, 7
        %v1072 = vsub.s32 %v1069, %v1071
        %v1073 = vrot.slane %v956, %v1072
        %v1075 = vunpack.c.l.s4 1983009808
        %v1076 = vunpack.c.0.s8 %v1075
        %v1077 = vlaneseq
        %v1078 = vshrl.u32 %v1077, 7
        %v1079 = vsub.s32 %v1076, %v1078
        %v1080 = vrot.slane %v957, %v1079
        %v1082 = vunpack.c.l.s4 1983009808
        %v1083 = vunpack.c.0.s8 %v1082
        %v1084 = vlaneseq
        %v1085 = vshrl.u32 %v1084, 7
        %v1086 = vsub.s32 %v1083, %v1085
        %v1087 = vrot.slane %v958, %v1086
        %v1089 = vunpack.c.l.s4 1983009808
        %v1090 = vunpack.c.0.s8 %v1089
        %v1091 = vlaneseq
        %v1092 = vshrl.u32 %v1091, 7
        %v1093 = vsub.s32 %v1090, %v1092
        %v1094 = vrot.slane %v959, %v1093
        %v1096 = vunpack.c.l.s4 1983009808
        %v1097 = vunpack.c.0.s8 %v1096
        %v1098 = vlaneseq
        %v1099 = vshrl.u32 %v1098, 7
        %v1100 = vsub.s32 %v1097, %v1099
        %v1101 = vrot.slane %v960, %v1100
        %v1103 = vunpack.c.l.s4 1983009808
        %v1104 = vunpack.c.0.s8 %v1103
        %v1105 = vlaneseq
        %v1106 = vshrl.u32 %v1105, 7
        %v1107 = vsub.s32 %v1104, %v1106
        %v1108 = vrot.slane %v961, %v1107
        %v1110 = vunpack.c.l.s4 1983009808
        %v1111 = vunpack.c.0.s8 %v1110
        %v1112 = vlaneseq
        %v1113 = vshrl.u32 %v1112, 7
        %v1114 = vsub.s32 %v1111, %v1113
        %v1115 = vrot.slane %v962, %v1114
        %v1117 = vunpack.c.l.s4 1983009808
        %v1118 = vunpack.c.0.s8 %v1117
        %v1119 = vlaneseq
        %v1120 = vshrl.u32 %v1119, 7
        %v1121 = vsub.s32 %v1118, %v1120
        %v1122 = vrot.slane %v963, %v1121
        %v1123 = vunpack.c.l.b16 %v1073
        %v1124 = vunpack.c.l.b16 %v1080
        %v1125 = vunpack.c.l.b16 %v1087
        %v1126 = vunpack.c.l.b16 %v1094
        %v1127 = vunpack.c.l.b16 %v1101
        %v1128 = vunpack.c.l.b16 %v1108
        %v1129 = vunpack.c.l.b16 %v1115
        %v1130 = vunpack.c.l.b16 %v1122
        %v1131 = vrot.slane %v1123, 1
        %v1132 = vsel %vm616, %v1124, %v1131
        %v1133 = vrot.slane %v1125, 7
        %v1134 = vsel %vm619, %v1133, %v1132
        %v1135 = vrot.slane %v1126, 6
        %v1136 = vsel %vm622, %v1135, %v1134
        %v1137 = vrot.slane %v1127, 5
        %v1138 = vsel %vm625, %v1137, %v1136
        %v1139 = vrot.slane %v1128, 4
        %v1140 = vsel %vm628, %v1139, %v1138
        %v1141 = vrot.slane %v1129, 3
        %v1142 = vsel %vm631, %v1141, %v1140
        %v1143 = vrot.slane %v1130, 2
        %v1144 = vsel %vm634, %v1143, %v1142
        %v1145 = vpack.c.b16 %v1144, %v1144
        %v1147 = vsel %vm724, %v1058, 0
        %v1150 = vsel %vm724, %v1145, 0
        %1152 = vmatprep.subr.bf16.mxu0 0
        %1153 = vmatpush1.bf16.xpose.msra.mxu0 %v1150
        %1154 = vmatprep.subr.bf16.mxu0 0
        %1155 = vmatpush1.bf16.xpose.msra.mxu0 0
        %1156 = vmatprep.subr.bf16.mxu0 0
        %1157 = vmatpush1.bf16.xpose.msra.mxu0 0
        %1158 = vmatprep.subr.bf16.mxu0 0
        %1159 = vmatpush1.bf16.xpose.msra.mxu0 0
        %1160 = vmatprep.subr.bf16.mxu0 0
        %1161 = vmatpush1.bf16.xpose.msra.mxu0 0
        %1162 = vmatprep.subr.bf16.mxu0 0
        %1163 = vmatpush1.bf16.xpose.msra.mxu0 0
        %1164 = vmatprep.subr.bf16.mxu0 0
        %1165 = vmatpush1.bf16.xpose.msra.mxu0 0
        %1166 = vmatprep.subr.bf16.mxu0 0
        %1167 = vmatpush1.bf16.xpose.msra.mxu0 0
        %1168 = vmatprep.subr.bf16.mxu0 0
        %1169 = vmatpush1.bf16.xpose.msra.mxu0 0
        %1170 = vmatprep.subr.bf16.mxu0 0
        %1171 = vmatpush1.bf16.xpose.msra.mxu0 0
        %1172 = vmatprep.subr.bf16.mxu0 0
        %1173 = vmatpush1.bf16.xpose.msra.mxu0 0
        %1174 = vmatprep.subr.bf16.mxu0 0
        %1175 = vmatpush1.bf16.xpose.msra.mxu0 0
        %1176 = vmatprep.subr.bf16.mxu0 0
        %1177 = vmatpush1.bf16.xpose.msra.mxu0 0
        %1178 = vmatprep.subr.bf16.mxu0 0
        %1179 = vmatpush1.bf16.xpose.msra.mxu0 0
        %1180 = vmatprep.subr.bf16.mxu0 0
        %1181 = vmatpush1.bf16.xpose.msra.mxu0 0
        %1182 = vmatprep.subr.bf16.mxu0 0
        %1183 = vmatpush1.bf16.xpose.msra.mxu0 0
        %1184 = vmatprep.mubr.bf16.mxu0 0
        %1185 = vmatmul.mubr.bf16.gmra.mrb[0].mxu0 %v1147
        %v1186 = vpop.f32.mrb[0].mxu0
        %v1187 = vadd.f32 0.0, %v1186
        %v1188 = vpop.f32.mrb[0].mxu0
        %v1189 = vpop.f32.mrb[0].mxu0
        %v1190 = vpop.f32.mrb[0].mxu0
        %1191 = vdwg.mxu0
        %v1192 = vmul.f32 %v1187, 0.35355338
        %v1193 = vadd.f32 %v1192, %v776
        %s1194 = scalar_lea.vmem [#allocation2], 8
        %v1195 = vld [vmem:[%s1194] sm:$0xff]
        %v1196 = vsel %vm724, %v1193, -inf
        %1197 = vmax.xlane.f32.xlu0 %v1196
        %v1198 = vpop.xlane.xlu0 %1197
        %v1199 = vmax.f32 %v1195, %v1198
        %v1200 = vsub.f32 %v1195, %v1199
        %v1201 = vmul.f32 %v1200, 1.442695
        %v1202 = vpow.pop %v1201
        %1204 = vset.pattern.permute.xlu0 0
        %1205 = vperm.xlu0 %1204, %v1199
        %v1206 = vpop.permute.xlu0 %1205
        %v1208 = vsub.f32 %v1193, %v1206
        %v1209 = vmul.f32 %v1208, 1.442695
        %v1210 = vpow.pop %v1209
        %s1211 = scalar_lea.vmem [#allocation3], 8
        %v1212 = vld [vmem:[%s1211] sm:$0xff]
        %v1213 = vmul.f32 %v1202, %v1212
        %v1214 = vsel %vm724, %v1210, 0.0
        %1215 = vadd.xlane.f32.xlu0 %v1214
        %v1216 = vpop.xlane.xlu0 %1215
        %v1217 = vadd.f32 %v1213, %v1216
        %1218 = vst.msk [vmem:[%s1211] sm:$0xff] %vm801, %v1217
        %s1219 = scalar_lea.vmem [#allocation4], 8
        %v1220 = vld [vmem:[%s1219] sm:$0xff]
        %1222 = vset.pattern.permute.xlu0 0
        %1223 = vperm.xlu0 %1222, %v1202
        %v1224 = vpop.permute.xlu0 %1223
        %v1226 = vmul.f32 %v1224, %v1220
        %v1227 = vpack.c.bf16 %v1210, %v1210
        %v1237 = vunpack.c.l.s4 1983009808
        %v1238 = vunpack.c.0.s8 %v1237
        %v1239 = vlaneseq
        %v1240 = vshrl.u32 %v1239, 7
        %v1241 = vsub.s32 %v1238, %v1240
        %v1242 = vrot.slane %v964, %v1241
        %v1244 = vunpack.c.l.s4 1983009808
        %v1245 = vunpack.c.0.s8 %v1244
        %v1246 = vlaneseq
        %v1247 = vshrl.u32 %v1246, 7
        %v1248 = vsub.s32 %v1245, %v1247
        %v1249 = vrot.slane %v965, %v1248
        %v1251 = vunpack.c.l.s4 1983009808
        %v1252 = vunpack.c.0.s8 %v1251
        %v1253 = vlaneseq
        %v1254 = vshrl.u32 %v1253, 7
        %v1255 = vsub.s32 %v1252, %v1254
        %v1256 = vrot.slane %v966, %v1255
        %v1258 = vunpack.c.l.s4 1983009808
        %v1259 = vunpack.c.0.s8 %v1258
        %v1260 = vlaneseq
        %v1261 = vshrl.u32 %v1260, 7
        %v1262 = vsub.s32 %v1259, %v1261
        %v1263 = vrot.slane %v967, %v1262
        %v1265 = vunpack.c.l.s4 1983009808
        %v1266 = vunpack.c.0.s8 %v1265
        %v1267 = vlaneseq
        %v1268 = vshrl.u32 %v1267, 7
        %v1269 = vsub.s32 %v1266, %v1268
        %v1270 = vrot.slane %v968, %v1269
        %v1272 = vunpack.c.l.s4 1983009808
        %v1273 = vunpack.c.0.s8 %v1272
        %v1274 = vlaneseq
        %v1275 = vshrl.u32 %v1274, 7
        %v1276 = vsub.s32 %v1273, %v1275
        %v1277 = vrot.slane %v969, %v1276
        %v1279 = vunpack.c.l.s4 1983009808
        %v1280 = vunpack.c.0.s8 %v1279
        %v1281 = vlaneseq
        %v1282 = vshrl.u32 %v1281, 7
        %v1283 = vsub.s32 %v1280, %v1282
        %v1284 = vrot.slane %v970, %v1283
        %v1286 = vunpack.c.l.s4 1983009808
        %v1287 = vunpack.c.0.s8 %v1286
        %v1288 = vlaneseq
        %v1289 = vshrl.u32 %v1288, 7
        %v1290 = vsub.s32 %v1287, %v1289
        %v1291 = vrot.slane %v971, %v1290
        %v1292 = vunpack.c.l.b16 %v1242
        %v1293 = vunpack.c.l.b16 %v1249
        %v1294 = vunpack.c.l.b16 %v1256
        %v1295 = vunpack.c.l.b16 %v1263
        %v1296 = vunpack.c.l.b16 %v1270
        %v1297 = vunpack.c.l.b16 %v1277
        %v1298 = vunpack.c.l.b16 %v1284
        %v1299 = vunpack.c.l.b16 %v1291
        %v1300 = vrot.slane %v1292, 1
        %v1301 = vsel %vm616, %v1293, %v1300
        %v1302 = vrot.slane %v1294, 7
        %v1303 = vsel %vm619, %v1302, %v1301
        %v1304 = vrot.slane %v1295, 6
        %v1305 = vsel %vm622, %v1304, %v1303
        %v1306 = vrot.slane %v1296, 5
        %v1307 = vsel %vm625, %v1306, %v1305
        %v1308 = vrot.slane %v1297, 4
        %v1309 = vsel %vm628, %v1308, %v1307
        %v1310 = vrot.slane %v1298, 3
        %v1311 = vsel %vm631, %v1310, %v1309
        %v1312 = vrot.slane %v1299, 2
        %v1313 = vsel %vm634, %v1312, %v1311
        %v1314 = vpack.c.b16 %v1313, %v1313
        %v1316 = vsel %vm724, %v1227, 0
        %v1319 = vsel %vm901, %v1314, 0
        %1321 = vmatprep.subr.bf16.mxu0 0
        %1322 = vmatpush1.bf16.msra.mxu0 %v1319
        %1323 = vmatprep.subr.bf16.mxu0 0
        %1324 = vmatpush1.bf16.msra.mxu0 0
        %1325 = vmatprep.subr.bf16.mxu0 0
        %1326 = vmatpush1.bf16.msra.mxu0 0
        %1327 = vmatprep.subr.bf16.mxu0 0
        %1328 = vmatpush1.bf16.msra.mxu0 0
        %1329 = vmatprep.subr.bf16.mxu0 0
        %1330 = vmatpush1.bf16.msra.mxu0 0
        %1331 = vmatprep.subr.bf16.mxu0 0
        %1332 = vmatpush1.bf16.msra.mxu0 0
        %1333 = vmatprep.subr.bf16.mxu0 0
        %1334 = vmatpush1.bf16.msra.mxu0 0
        %1335 = vmatprep.subr.bf16.mxu0 0
        %1336 = vmatpush1.bf16.msra.mxu0 0
        %1337 = vmatprep.subr.bf16.mxu0 0
        %1338 = vmatpush1.bf16.msra.mxu0 0
        %1339 = vmatprep.subr.bf16.mxu0 0
        %1340 = vmatpush1.bf16.msra.mxu0 0
        %1341 = vmatprep.subr.bf16.mxu0 0
        %1342 = vmatpush1.bf16.msra.mxu0 0
        %1343 = vmatprep.subr.bf16.mxu0 0
        %1344 = vmatpush1.bf16.msra.mxu0 0
        %1345 = vmatprep.subr.bf16.mxu0 0
        %1346 = vmatpush1.bf16.msra.mxu0 0
        %1347 = vmatprep.subr.bf16.mxu0 0
        %1348 = vmatpush1.bf16.msra.mxu0 0
        %1349 = vmatprep.subr.bf16.mxu0 0
        %1350 = vmatpush1.bf16.msra.mxu0 0
        %1351 = vmatprep.subr.bf16.mxu0 0
        %1352 = vmatpush1.bf16.msra.mxu0 0
        %1353 = vmatprep.mubr.bf16.mxu0 0
        %1354 = vmatmul.mubr.bf16.gmra.mrb[0].mxu0 %v1316
        %v1355 = vpop.f32.mrb[0].mxu0
        %v1356 = vadd.f32 0.0, %v1355
        %v1357 = vpop.f32.mrb[0].mxu0
        %v1358 = vpop.f32.mrb[0].mxu0
        %v1359 = vpop.f32.mrb[0].mxu0
        %1360 = vdwg.mxu0
        %v1361 = vadd.f32 %v1226, %v1356
        %1362 = vst.msk [vmem:[%s1219] sm:$0xff] %vm724, %v1361
        %1363 = vst.msk [vmem:[%s1194] sm:$0xff] %vm801, %v1199
        %v1364 = vld [vmem:[%s435] sm:$0x2]
        %v1365 = vld [vmem:[%s435 + $0x2] sm:$0x2]
        %v1366 = vld [vmem:[%s435 + $0x4] sm:$0x2]
        %v1367 = vld [vmem:[%s435 + $0x6] sm:$0x2]
        %v1368 = vld [vmem:[%s435 + $0x8] sm:$0x2]
        %v1369 = vld [vmem:[%s435 + $0xa] sm:$0x2]
        %v1370 = vld [vmem:[%s435 + $0xc] sm:$0x2]
        %v1371 = vld [vmem:[%s435 + $0xe] sm:$0x2]
        %v1372 = vld [vmem:[%s442] sm:$0x2]
        %v1373 = vld [vmem:[%s442 + $0x2] sm:$0x2]
        %v1374 = vld [vmem:[%s442 + $0x4] sm:$0x2]
        %v1375 = vld [vmem:[%s442 + $0x6] sm:$0x2]
        %v1376 = vld [vmem:[%s442 + $0x8] sm:$0x2]
        %v1377 = vld [vmem:[%s442 + $0xa] sm:$0x2]
        %v1378 = vld [vmem:[%s442 + $0xc] sm:$0x2]
        %v1379 = vld [vmem:[%s442 + $0xe] sm:$0x2]
        %v1380 = vld [vmem:[%s449] sm:$0x2]
        %v1381 = vld [vmem:[%s449 + $0x2] sm:$0x2]
        %v1382 = vld [vmem:[%s449 + $0x4] sm:$0x2]
        %v1383 = vld [vmem:[%s449 + $0x6] sm:$0x2]
        %v1384 = vld [vmem:[%s449 + $0x8] sm:$0x2]
        %v1385 = vld [vmem:[%s449 + $0xa] sm:$0x2]
        %v1386 = vld [vmem:[%s449 + $0xc] sm:$0x2]
        %v1387 = vld [vmem:[%s449 + $0xe] sm:$0x2]
        %v1397 = vunpack.c.l.s4 1983009808
        %v1398 = vunpack.c.0.s8 %v1397
        %v1399 = vlaneseq
        %v1400 = vshrl.u32 %v1399, 7
        %v1401 = vsub.s32 %v1398, %v1400
        %v1402 = vrot.slane %v1364, %v1401
        %v1404 = vunpack.c.l.s4 1983009808
        %v1405 = vunpack.c.0.s8 %v1404
        %v1406 = vlaneseq
        %v1407 = vshrl.u32 %v1406, 7
        %v1408 = vsub.s32 %v1405, %v1407
        %v1409 = vrot.slane %v1365, %v1408
        %v1411 = vunpack.c.l.s4 1983009808
        %v1412 = vunpack.c.0.s8 %v1411
        %v1413 = vlaneseq
        %v1414 = vshrl.u32 %v1413, 7
        %v1415 = vsub.s32 %v1412, %v1414
        %v1416 = vrot.slane %v1366, %v1415
        %v1418 = vunpack.c.l.s4 1983009808
        %v1419 = vunpack.c.0.s8 %v1418
        %v1420 = vlaneseq
        %v1421 = vshrl.u32 %v1420, 7
        %v1422 = vsub.s32 %v1419, %v1421
        %v1423 = vrot.slane %v1367, %v1422
        %v1425 = vunpack.c.l.s4 1983009808
        %v1426 = vunpack.c.0.s8 %v1425
        %v1427 = vlaneseq
        %v1428 = vshrl.u32 %v1427, 7
        %v1429 = vsub.s32 %v1426, %v1428
        %v1430 = vrot.slane %v1368, %v1429
        %v1432 = vunpack.c.l.s4 1983009808
        %v1433 = vunpack.c.0.s8 %v1432
        %v1434 = vlaneseq
        %v1435 = vshrl.u32 %v1434, 7
        %v1436 = vsub.s32 %v1433, %v1435
        %v1437 = vrot.slane %v1369, %v1436
        %v1439 = vunpack.c.l.s4 1983009808
        %v1440 = vunpack.c.0.s8 %v1439
        %v1441 = vlaneseq
        %v1442 = vshrl.u32 %v1441, 7
        %v1443 = vsub.s32 %v1440, %v1442
        %v1444 = vrot.slane %v1370, %v1443
        %v1446 = vunpack.c.l.s4 1983009808
        %v1447 = vunpack.c.0.s8 %v1446
        %v1448 = vlaneseq
        %v1449 = vshrl.u32 %v1448, 7
        %v1450 = vsub.s32 %v1447, %v1449
        %v1451 = vrot.slane %v1371, %v1450
        %v1452 = vunpack.c.l.b16 %v1402
        %v1453 = vunpack.c.l.b16 %v1409
        %v1454 = vunpack.c.l.b16 %v1416
        %v1455 = vunpack.c.l.b16 %v1423
        %v1456 = vunpack.c.l.b16 %v1430
        %v1457 = vunpack.c.l.b16 %v1437
        %v1458 = vunpack.c.l.b16 %v1444
        %v1459 = vunpack.c.l.b16 %v1451
        %v1460 = vrot.slane %v1452, 2
        %v1461 = vrot.slane %v1453, 1
        %v1462 = vsel %vm616, %v1461, %v1460
        %v1463 = vsel %vm619, %v1454, %v1462
        %v1464 = vrot.slane %v1455, 7
        %v1465 = vsel %vm622, %v1464, %v1463
        %v1466 = vrot.slane %v1456, 6
        %v1467 = vsel %vm625, %v1466, %v1465
        %v1468 = vrot.slane %v1457, 5
        %v1469 = vsel %vm628, %v1468, %v1467
        %v1470 = vrot.slane %v1458, 4
        %v1471 = vsel %vm631, %v1470, %v1469
        %v1472 = vrot.slane %v1459, 3
        %v1473 = vsel %vm634, %v1472, %v1471
        %v1474 = vpack.c.b16 %v1473, %v1473
        %v1484 = vunpack.c.l.s4 1983009808
        %v1485 = vunpack.c.0.s8 %v1484
        %v1486 = vlaneseq
        %v1487 = vshrl.u32 %v1486, 7
        %v1488 = vsub.s32 %v1485, %v1487
        %v1489 = vrot.slane %v1372, %v1488
        %v1491 = vunpack.c.l.s4 1983009808
        %v1492 = vunpack.c.0.s8 %v1491
        %v1493 = vlaneseq
        %v1494 = vshrl.u32 %v1493, 7
        %v1495 = vsub.s32 %v1492, %v1494
        %v1496 = vrot.slane %v1373, %v1495
        %v1498 = vunpack.c.l.s4 1983009808
        %v1499 = vunpack.c.0.s8 %v1498
        %v1500 = vlaneseq
        %v1501 = vshrl.u32 %v1500, 7
        %v1502 = vsub.s32 %v1499, %v1501
        %v1503 = vrot.slane %v1374, %v1502
        %v1505 = vunpack.c.l.s4 1983009808
        %v1506 = vunpack.c.0.s8 %v1505
        %v1507 = vlaneseq
        %v1508 = vshrl.u32 %v1507, 7
        %v1509 = vsub.s32 %v1506, %v1508
        %v1510 = vrot.slane %v1375, %v1509
        %v1512 = vunpack.c.l.s4 1983009808
        %v1513 = vunpack.c.0.s8 %v1512
        %v1514 = vlaneseq
        %v1515 = vshrl.u32 %v1514, 7
        %v1516 = vsub.s32 %v1513, %v1515
        %v1517 = vrot.slane %v1376, %v1516
        %v1519 = vunpack.c.l.s4 1983009808
        %v1520 = vunpack.c.0.s8 %v1519
        %v1521 = vlaneseq
        %v1522 = vshrl.u32 %v1521, 7
        %v1523 = vsub.s32 %v1520, %v1522
        %v1524 = vrot.slane %v1377, %v1523
        %v1526 = vunpack.c.l.s4 1983009808
        %v1527 = vunpack.c.0.s8 %v1526
        %v1528 = vlaneseq
        %v1529 = vshrl.u32 %v1528, 7
        %v1530 = vsub.s32 %v1527, %v1529
        %v1531 = vrot.slane %v1378, %v1530
        %v1533 = vunpack.c.l.s4 1983009808
        %v1534 = vunpack.c.0.s8 %v1533
        %v1535 = vlaneseq
        %v1536 = vshrl.u32 %v1535, 7
        %v1537 = vsub.s32 %v1534, %v1536
        %v1538 = vrot.slane %v1379, %v1537
        %v1539 = vunpack.c.l.b16 %v1489
        %v1540 = vunpack.c.l.b16 %v1496
        %v1541 = vunpack.c.l.b16 %v1503
        %v1542 = vunpack.c.l.b16 %v1510
        %v1543 = vunpack.c.l.b16 %v1517
        %v1544 = vunpack.c.l.b16 %v1524
        %v1545 = vunpack.c.l.b16 %v1531
        %v1546 = vunpack.c.l.b16 %v1538
        %v1547 = vrot.slane %v1539, 2
        %v1548 = vrot.slane %v1540, 1
        %v1549 = vsel %vm616, %v1548, %v1547
        %v1550 = vsel %vm619, %v1541, %v1549
        %v1551 = vrot.slane %v1542, 7
        %v1552 = vsel %vm622, %v1551, %v1550
        %v1553 = vrot.slane %v1543, 6
        %v1554 = vsel %vm625, %v1553, %v1552
        %v1555 = vrot.slane %v1544, 5
        %v1556 = vsel %vm628, %v1555, %v1554
        %v1557 = vrot.slane %v1545, 4
        %v1558 = vsel %vm631, %v1557, %v1556
        %v1559 = vrot.slane %v1546, 3
        %v1560 = vsel %vm634, %v1559, %v1558
        %v1561 = vpack.c.b16 %v1560, %v1560
        %v1563 = vsel %vm724, %v1474, 0
        %v1566 = vsel %vm724, %v1561, 0
        %1568 = vmatprep.subr.bf16.mxu0 0
        %1569 = vmatpush1.bf16.xpose.msra.mxu0 %v1566
        %1570 = vmatprep.subr.bf16.mxu0 0
        %1571 = vmatpush1.bf16.xpose.msra.mxu0 0
        %1572 = vmatprep.subr.bf16.mxu0 0
        %1573 = vmatpush1.bf16.xpose.msra.mxu0 0
        %1574 = vmatprep.subr.bf16.mxu0 0
        %1575 = vmatpush1.bf16.xpose.msra.mxu0 0
        %1576 = vmatprep.subr.bf16.mxu0 0
        %1577 = vmatpush1.bf16.xpose.msra.mxu0 0
        %1578 = vmatprep.subr.bf16.mxu0 0
        %1579 = vmatpush1.bf16.xpose.msra.mxu0 0
        %1580 = vmatprep.subr.bf16.mxu0 0
        %1581 = vmatpush1.bf16.xpose.msra.mxu0 0
        %1582 = vmatprep.subr.bf16.mxu0 0
        %1583 = vmatpush1.bf16.xpose.msra.mxu0 0
        %1584 = vmatprep.subr.bf16.mxu0 0
        %1585 = vmatpush1.bf16.xpose.msra.mxu0 0
        %1586 = vmatprep.subr.bf16.mxu0 0
        %1587 = vmatpush1.bf16.xpose.msra.mxu0 0
        %1588 = vmatprep.subr.bf16.mxu0 0
        %1589 = vmatpush1.bf16.xpose.msra.mxu0 0
        %1590 = vmatprep.subr.bf16.mxu0 0
        %1591 = vmatpush1.bf16.xpose.msra.mxu0 0
        %1592 = vmatprep.subr.bf16.mxu0 0
        %1593 = vmatpush1.bf16.xpose.msra.mxu0 0
        %1594 = vmatprep.subr.bf16.mxu0 0
        %1595 = vmatpush1.bf16.xpose.msra.mxu0 0
        %1596 = vmatprep.subr.bf16.mxu0 0
        %1597 = vmatpush1.bf16.xpose.msra.mxu0 0
        %1598 = vmatprep.subr.bf16.mxu0 0
        %1599 = vmatpush1.bf16.xpose.msra.mxu0 0
        %1600 = vmatprep.mubr.bf16.mxu0 0
        %1601 = vmatmul.mubr.bf16.gmra.mrb[0].mxu0 %v1563
        %v1602 = vpop.f32.mrb[0].mxu0
        %v1603 = vadd.f32 0.0, %v1602
        %v1604 = vpop.f32.mrb[0].mxu0
        %v1605 = vpop.f32.mrb[0].mxu0
        %v1606 = vpop.f32.mrb[0].mxu0
        %1607 = vdwg.mxu0
        %v1608 = vmul.f32 %v1603, 0.35355338
        %v1609 = vadd.f32 %v1608, %v776
        %s1610 = scalar_lea.vmem [#allocation2], 16
        %v1611 = vld [vmem:[%s1610] sm:$0xff]
        %v1612 = vsel %vm724, %v1609, -inf
        %1613 = vmax.xlane.f32.xlu0 %v1612
        %v1614 = vpop.xlane.xlu0 %1613
        %v1615 = vmax.f32 %v1611, %v1614
        %v1616 = vsub.f32 %v1611, %v1615
        %v1617 = vmul.f32 %v1616, 1.442695
        %v1618 = vpow.pop %v1617
        %1620 = vset.pattern.permute.xlu0 0
        %1621 = vperm.xlu0 %1620, %v1615
        %v1622 = vpop.permute.xlu0 %1621
        %v1624 = vsub.f32 %v1609, %v1622
        %v1625 = vmul.f32 %v1624, 1.442695
        %v1626 = vpow.pop %v1625
        %s1627 = scalar_lea.vmem [#allocation3], 16
        %v1628 = vld [vmem:[%s1627] sm:$0xff]
        %v1629 = vmul.f32 %v1618, %v1628
        %v1630 = vsel %vm724, %v1626, 0.0
        %1631 = vadd.xlane.f32.xlu0 %v1630
        %v1632 = vpop.xlane.xlu0 %1631
        %v1633 = vadd.f32 %v1629, %v1632
        %1634 = vst.msk [vmem:[%s1627] sm:$0xff] %vm801, %v1633
        %s1635 = scalar_lea.vmem [#allocation4], 16
        %v1636 = vld [vmem:[%s1635] sm:$0xff]
        %1638 = vset.pattern.permute.xlu0 0
        %1639 = vperm.xlu0 %1638, %v1618
        %v1640 = vpop.permute.xlu0 %1639
        %v1642 = vmul.f32 %v1640, %v1636
        %v1643 = vpack.c.bf16 %v1626, %v1626
        %v1653 = vunpack.c.l.s4 1983009808
        %v1654 = vunpack.c.0.s8 %v1653
        %v1655 = vlaneseq
        %v1656 = vshrl.u32 %v1655, 7
        %v1657 = vsub.s32 %v1654, %v1656
        %v1658 = vrot.slane %v1380, %v1657
        %v1660 = vunpack.c.l.s4 1983009808
        %v1661 = vunpack.c.0.s8 %v1660
        %v1662 = vlaneseq
        %v1663 = vshrl.u32 %v1662, 7
        %v1664 = vsub.s32 %v1661, %v1663
        %v1665 = vrot.slane %v1381, %v1664
        %v1667 = vunpack.c.l.s4 1983009808
        %v1668 = vunpack.c.0.s8 %v1667
        %v1669 = vlaneseq
        %v1670 = vshrl.u32 %v1669, 7
        %v1671 = vsub.s32 %v1668, %v1670
        %v1672 = vrot.slane %v1382, %v1671
        %v1674 = vunpack.c.l.s4 1983009808
        %v1675 = vunpack.c.0.s8 %v1674
        %v1676 = vlaneseq
        %v1677 = vshrl.u32 %v1676, 7
        %v1678 = vsub.s32 %v1675, %v1677
        %v1679 = vrot.slane %v1383, %v1678
        %v1681 = vunpack.c.l.s4 1983009808
        %v1682 = vunpack.c.0.s8 %v1681
        %v1683 = vlaneseq
        %v1684 = vshrl.u32 %v1683, 7
        %v1685 = vsub.s32 %v1682, %v1684
        %v1686 = vrot.slane %v1384, %v1685
        %v1688 = vunpack.c.l.s4 1983009808
        %v1689 = vunpack.c.0.s8 %v1688
        %v1690 = vlaneseq
        %v1691 = vshrl.u32 %v1690, 7
        %v1692 = vsub.s32 %v1689, %v1691
        %v1693 = vrot.slane %v1385, %v1692
        %v1695 = vunpack.c.l.s4 1983009808
        %v1696 = vunpack.c.0.s8 %v1695
        %v1697 = vlaneseq
        %v1698 = vshrl.u32 %v1697, 7
        %v1699 = vsub.s32 %v1696, %v1698
        %v1700 = vrot.slane %v1386, %v1699
        %v1702 = vunpack.c.l.s4 1983009808
        %v1703 = vunpack.c.0.s8 %v1702
        %v1704 = vlaneseq
        %v1705 = vshrl.u32 %v1704, 7
        %v1706 = vsub.s32 %v1703, %v1705
        %v1707 = vrot.slane %v1387, %v1706
        %v1708 = vunpack.c.l.b16 %v1658
        %v1709 = vunpack.c.l.b16 %v1665
        %v1710 = vunpack.c.l.b16 %v1672
        %v1711 = vunpack.c.l.b16 %v1679
        %v1712 = vunpack.c.l.b16 %v1686
        %v1713 = vunpack.c.l.b16 %v1693
        %v1714 = vunpack.c.l.b16 %v1700
        %v1715 = vunpack.c.l.b16 %v1707
        %v1716 = vrot.slane %v1708, 2
        %v1717 = vrot.slane %v1709, 1
        %v1718 = vsel %vm616, %v1717, %v1716
        %v1719 = vsel %vm619, %v1710, %v1718
        %v1720 = vrot.slane %v1711, 7
        %v1721 = vsel %vm622, %v1720, %v1719
        %v1722 = vrot.slane %v1712, 6
        %v1723 = vsel %vm625, %v1722, %v1721
        %v1724 = vrot.slane %v1713, 5
        %v1725 = vsel %vm628, %v1724, %v1723
        %v1726 = vrot.slane %v1714, 4
        %v1727 = vsel %vm631, %v1726, %v1725
        %v1728 = vrot.slane %v1715, 3
        %v1729 = vsel %vm634, %v1728, %v1727
        %v1730 = vpack.c.b16 %v1729, %v1729
        %v1732 = vsel %vm724, %v1643, 0
        %v1735 = vsel %vm901, %v1730, 0
        %1737 = vmatprep.subr.bf16.mxu0 0
        %1738 = vmatpush1.bf16.msra.mxu0 %v1735
        %1739 = vmatprep.subr.bf16.mxu0 0
        %1740 = vmatpush1.bf16.msra.mxu0 0
        %1741 = vmatprep.subr.bf16.mxu0 0
        %1742 = vmatpush1.bf16.msra.mxu0 0
        %1743 = vmatprep.subr.bf16.mxu0 0
        %1744 = vmatpush1.bf16.msra.mxu0 0
        %1745 = vmatprep.subr.bf16.mxu0 0
        %1746 = vmatpush1.bf16.msra.mxu0 0
        %1747 = vmatprep.subr.bf16.mxu0 0
        %1748 = vmatpush1.bf16.msra.mxu0 0
        %1749 = vmatprep.subr.bf16.mxu0 0
        %1750 = vmatpush1.bf16.msra.mxu0 0
        %1751 = vmatprep.subr.bf16.mxu0 0
        %1752 = vmatpush1.bf16.msra.mxu0 0
        %1753 = vmatprep.subr.bf16.mxu0 0
        %1754 = vmatpush1.bf16.msra.mxu0 0
        %1755 = vmatprep.subr.bf16.mxu0 0
        %1756 = vmatpush1.bf16.msra.mxu0 0
        %1757 = vmatprep.subr.bf16.mxu0 0
        %1758 = vmatpush1.bf16.msra.mxu0 0
        %1759 = vmatprep.subr.bf16.mxu0 0
        %1760 = vmatpush1.bf16.msra.mxu0 0
        %1761 = vmatprep.subr.bf16.mxu0 0
        %1762 = vmatpush1.bf16.msra.mxu0 0
        %1763 = vmatprep.subr.bf16.mxu0 0
        %1764 = vmatpush1.bf16.msra.mxu0 0
        %1765 = vmatprep.subr.bf16.mxu0 0
        %1766 = vmatpush1.bf16.msra.mxu0 0
        %1767 = vmatprep.subr.bf16.mxu0 0
        %1768 = vmatpush1.bf16.msra.mxu0 0
        %1769 = vmatprep.mubr.bf16.mxu0 0
        %1770 = vmatmul.mubr.bf16.gmra.mrb[0].mxu0 %v1732
        %v1771 = vpop.f32.mrb[0].mxu0
        %v1772 = vadd.f32 0.0, %v1771
        %v1773 = vpop.f32.mrb[0].mxu0
        %v1774 = vpop.f32.mrb[0].mxu0
        %v1775 = vpop.f32.mrb[0].mxu0
        %1776 = vdwg.mxu0
        %v1777 = vadd.f32 %v1642, %v1772
        %1778 = vst.msk [vmem:[%s1635] sm:$0xff] %vm724, %v1777
        %1779 = vst.msk [vmem:[%s1610] sm:$0xff] %vm801, %v1615
        %v1780 = vld [vmem:[%s435] sm:$0x2]
        %v1781 = vld [vmem:[%s435 + $0x2] sm:$0x2]
        %v1782 = vld [vmem:[%s435 + $0x4] sm:$0x2]
        %v1783 = vld [vmem:[%s435 + $0x6] sm:$0x2]
        %v1784 = vld [vmem:[%s435 + $0x8] sm:$0x2]
        %v1785 = vld [vmem:[%s435 + $0xa] sm:$0x2]
        %v1786 = vld [vmem:[%s435 + $0xc] sm:$0x2]
        %v1787 = vld [vmem:[%s435 + $0xe] sm:$0x2]
        %v1788 = vld [vmem:[%s442] sm:$0x2]
        %v1789 = vld [vmem:[%s442 + $0x2] sm:$0x2]
        %v1790 = vld [vmem:[%s442 + $0x4] sm:$0x2]
        %v1791 = vld [vmem:[%s442 + $0x6] sm:$0x2]
        %v1792 = vld [vmem:[%s442 + $0x8] sm:$0x2]
        %v1793 = vld [vmem:[%s442 + $0xa] sm:$0x2]
        %v1794 = vld [vmem:[%s442 + $0xc] sm:$0x2]
        %v1795 = vld [vmem:[%s442 + $0xe] sm:$0x2]
        %v1796 = vld [vmem:[%s449] sm:$0x2]
        %v1797 = vld [vmem:[%s449 + $0x2] sm:$0x2]
        %v1798 = vld [vmem:[%s449 + $0x4] sm:$0x2]
        %v1799 = vld [vmem:[%s449 + $0x6] sm:$0x2]
        %v1800 = vld [vmem:[%s449 + $0x8] sm:$0x2]
        %v1801 = vld [vmem:[%s449 + $0xa] sm:$0x2]
        %v1802 = vld [vmem:[%s449 + $0xc] sm:$0x2]
        %v1803 = vld [vmem:[%s449 + $0xe] sm:$0x2]
        %v1813 = vunpack.c.l.s4 1983009808
        %v1814 = vunpack.c.0.s8 %v1813
        %v1815 = vlaneseq
        %v1816 = vshrl.u32 %v1815, 7
        %v1817 = vsub.s32 %v1814, %v1816
        %v1818 = vrot.slane %v1780, %v1817
        %v1820 = vunpack.c.l.s4 1983009808
        %v1821 = vunpack.c.0.s8 %v1820
        %v1822 = vlaneseq
        %v1823 = vshrl.u32 %v1822, 7
        %v1824 = vsub.s32 %v1821, %v1823
        %v1825 = vrot.slane %v1781, %v1824
        %v1827 = vunpack.c.l.s4 1983009808
        %v1828 = vunpack.c.0.s8 %v1827
        %v1829 = vlaneseq
        %v1830 = vshrl.u32 %v1829, 7
        %v1831 = vsub.s32 %v1828, %v1830
        %v1832 = vrot.slane %v1782, %v1831
        %v1834 = vunpack.c.l.s4 1983009808
        %v1835 = vunpack.c.0.s8 %v1834
        %v1836 = vlaneseq
        %v1837 = vshrl.u32 %v1836, 7
        %v1838 = vsub.s32 %v1835, %v1837
        %v1839 = vrot.slane %v1783, %v1838
        %v1841 = vunpack.c.l.s4 1983009808
        %v1842 = vunpack.c.0.s8 %v1841
        %v1843 = vlaneseq
        %v1844 = vshrl.u32 %v1843, 7
        %v1845 = vsub.s32 %v1842, %v1844
        %v1846 = vrot.slane %v1784, %v1845
        %v1848 = vunpack.c.l.s4 1983009808
        %v1849 = vunpack.c.0.s8 %v1848
        %v1850 = vlaneseq
        %v1851 = vshrl.u32 %v1850, 7
        %v1852 = vsub.s32 %v1849, %v1851
        %v1853 = vrot.slane %v1785, %v1852
        %v1855 = vunpack.c.l.s4 1983009808
        %v1856 = vunpack.c.0.s8 %v1855
        %v1857 = vlaneseq
        %v1858 = vshrl.u32 %v1857, 7
        %v1859 = vsub.s32 %v1856, %v1858
        %v1860 = vrot.slane %v1786, %v1859
        %v1862 = vunpack.c.l.s4 1983009808
        %v1863 = vunpack.c.0.s8 %v1862
        %v1864 = vlaneseq
        %v1865 = vshrl.u32 %v1864, 7
        %v1866 = vsub.s32 %v1863, %v1865
        %v1867 = vrot.slane %v1787, %v1866
        %v1868 = vunpack.c.l.b16 %v1818
        %v1869 = vunpack.c.l.b16 %v1825
        %v1870 = vunpack.c.l.b16 %v1832
        %v1871 = vunpack.c.l.b16 %v1839
        %v1872 = vunpack.c.l.b16 %v1846
        %v1873 = vunpack.c.l.b16 %v1853
        %v1874 = vunpack.c.l.b16 %v1860
        %v1875 = vunpack.c.l.b16 %v1867
        %v1876 = vrot.slane %v1868, 3
        %v1877 = vrot.slane %v1869, 2
        %v1878 = vsel %vm616, %v1877, %v1876
        %v1879 = vrot.slane %v1870, 1
        %v1880 = vsel %vm619, %v1879, %v1878
        %v1881 = vsel %vm622, %v1871, %v1880
        %v1882 = vrot.slane %v1872, 7
        %v1883 = vsel %vm625, %v1882, %v1881
        %v1884 = vrot.slane %v1873, 6
        %v1885 = vsel %vm628, %v1884, %v1883
        %v1886 = vrot.slane %v1874, 5
        %v1887 = vsel %vm631, %v1886, %v1885
        %v1888 = vrot.slane %v1875, 4
        %v1889 = vsel %vm634, %v1888, %v1887
        %v1890 = vpack.c.b16 %v1889, %v1889
        %v1900 = vunpack.c.l.s4 1983009808
        %v1901 = vunpack.c.0.s8 %v1900
        %v1902 = vlaneseq
        %v1903 = vshrl.u32 %v1902, 7
        %v1904 = vsub.s32 %v1901, %v1903
        %v1905 = vrot.slane %v1788, %v1904
        %v1907 = vunpack.c.l.s4 1983009808
        %v1908 = vunpack.c.0.s8 %v1907
        %v1909 = vlaneseq
        %v1910 = vshrl.u32 %v1909, 7
        %v1911 = vsub.s32 %v1908, %v1910
        %v1912 = vrot.slane %v1789, %v1911
        %v1914 = vunpack.c.l.s4 1983009808
        %v1915 = vunpack.c.0.s8 %v1914
        %v1916 = vlaneseq
        %v1917 = vshrl.u32 %v1916, 7
        %v1918 = vsub.s32 %v1915, %v1917
        %v1919 = vrot.slane %v1790, %v1918
        %v1921 = vunpack.c.l.s4 1983009808
        %v1922 = vunpack.c.0.s8 %v1921
        %v1923 = vlaneseq
        %v1924 = vshrl.u32 %v1923, 7
        %v1925 = vsub.s32 %v1922, %v1924
        %v1926 = vrot.slane %v1791, %v1925
        %v1928 = vunpack.c.l.s4 1983009808
        %v1929 = vunpack.c.0.s8 %v1928
        %v1930 = vlaneseq
        %v1931 = vshrl.u32 %v1930, 7
        %v1932 = vsub.s32 %v1929, %v1931
        %v1933 = vrot.slane %v1792, %v1932
        %v1935 = vunpack.c.l.s4 1983009808
        %v1936 = vunpack.c.0.s8 %v1935
        %v1937 = vlaneseq
        %v1938 = vshrl.u32 %v1937, 7
        %v1939 = vsub.s32 %v1936, %v1938
        %v1940 = vrot.slane %v1793, %v1939
        %v1942 = vunpack.c.l.s4 1983009808
        %v1943 = vunpack.c.0.s8 %v1942
        %v1944 = vlaneseq
        %v1945 = vshrl.u32 %v1944, 7
        %v1946 = vsub.s32 %v1943, %v1945
        %v1947 = vrot.slane %v1794, %v1946
        %v1949 = vunpack.c.l.s4 1983009808
        %v1950 = vunpack.c.0.s8 %v1949
        %v1951 = vlaneseq
        %v1952 = vshrl.u32 %v1951, 7
        %v1953 = vsub.s32 %v1950, %v1952
        %v1954 = vrot.slane %v1795, %v1953
        %v1955 = vunpack.c.l.b16 %v1905
        %v1956 = vunpack.c.l.b16 %v1912
        %v1957 = vunpack.c.l.b16 %v1919
        %v1958 = vunpack.c.l.b16 %v1926
        %v1959 = vunpack.c.l.b16 %v1933
        %v1960 = vunpack.c.l.b16 %v1940
        %v1961 = vunpack.c.l.b16 %v1947
        %v1962 = vunpack.c.l.b16 %v1954
        %v1963 = vrot.slane %v1955, 3
        %v1964 = vrot.slane %v1956, 2
        %v1965 = vsel %vm616, %v1964, %v1963
        %v1966 = vrot.slane %v1957, 1
        %v1967 = vsel %vm619, %v1966, %v1965
        %v1968 = vsel %vm622, %v1958, %v1967
        %v1969 = vrot.slane %v1959, 7
        %v1970 = vsel %vm625, %v1969, %v1968
        %v1971 = vrot.slane %v1960, 6
        %v1972 = vsel %vm628, %v1971, %v1970
        %v1973 = vrot.slane %v1961, 5
        %v1974 = vsel %vm631, %v1973, %v1972
        %v1975 = vrot.slane %v1962, 4
        %v1976 = vsel %vm634, %v1975, %v1974
        %v1977 = vpack.c.b16 %v1976, %v1976
        %v1979 = vsel %vm724, %v1890, 0
        %v1982 = vsel %vm724, %v1977, 0
        %1984 = vmatprep.subr.bf16.mxu0 0
        %1985 = vmatpush1.bf16.xpose.msra.mxu0 %v1982
        %1986 = vmatprep.subr.bf16.mxu0 0
        %1987 = vmatpush1.bf16.xpose.msra.mxu0 0
        %1988 = vmatprep.subr.bf16.mxu0 0
        %1989 = vmatpush1.bf16.xpose.msra.mxu0 0
        %1990 = vmatprep.subr.bf16.mxu0 0
        %1991 = vmatpush1.bf16.xpose.msra.mxu0 0
        %1992 = vmatprep.subr.bf16.mxu0 0
        %1993 = vmatpush1.bf16.xpose.msra.mxu0 0
        %1994 = vmatprep.subr.bf16.mxu0 0
        %1995 = vmatpush1.bf16.xpose.msra.mxu0 0
        %1996 = vmatprep.subr.bf16.mxu0 0
        %1997 = vmatpush1.bf16.xpose.msra.mxu0 0
        %1998 = vmatprep.subr.bf16.mxu0 0
        %1999 = vmatpush1.bf16.xpose.msra.mxu0 0
        %2000 = vmatprep.subr.bf16.mxu0 0
        %2001 = vmatpush1.bf16.xpose.msra.mxu0 0
        %2002 = vmatprep.subr.bf16.mxu0 0
        %2003 = vmatpush1.bf16.xpose.msra.mxu0 0
        %2004 = vmatprep.subr.bf16.mxu0 0
        %2005 = vmatpush1.bf16.xpose.msra.mxu0 0
        %2006 = vmatprep.subr.bf16.mxu0 0
        %2007 = vmatpush1.bf16.xpose.msra.mxu0 0
        %2008 = vmatprep.subr.bf16.mxu0 0
        %2009 = vmatpush1.bf16.xpose.msra.mxu0 0
        %2010 = vmatprep.subr.bf16.mxu0 0
        %2011 = vmatpush1.bf16.xpose.msra.mxu0 0
        %2012 = vmatprep.subr.bf16.mxu0 0
        %2013 = vmatpush1.bf16.xpose.msra.mxu0 0
        %2014 = vmatprep.subr.bf16.mxu0 0
        %2015 = vmatpush1.bf16.xpose.msra.mxu0 0
        %2016 = vmatprep.mubr.bf16.mxu0 0
        %2017 = vmatmul.mubr.bf16.gmra.mrb[0].mxu0 %v1979
        %v2018 = vpop.f32.mrb[0].mxu0
        %v2019 = vadd.f32 0.0, %v2018
        %v2020 = vpop.f32.mrb[0].mxu0
        %v2021 = vpop.f32.mrb[0].mxu0
        %v2022 = vpop.f32.mrb[0].mxu0
        %2023 = vdwg.mxu0
        %v2024 = vmul.f32 %v2019, 0.35355338
        %v2025 = vadd.f32 %v2024, %v776
        %s2026 = scalar_lea.vmem [#allocation2], 24
        %v2027 = vld [vmem:[%s2026] sm:$0xff]
        %v2028 = vsel %vm724, %v2025, -inf
        %2029 = vmax.xlane.f32.xlu0 %v2028
        %v2030 = vpop.xlane.xlu0 %2029
        %v2031 = vmax.f32 %v2027, %v2030
        %v2032 = vsub.f32 %v2027, %v2031
        %v2033 = vmul.f32 %v2032, 1.442695
        %v2034 = vpow.pop %v2033
        %2036 = vset.pattern.permute.xlu0 0
        %2037 = vperm.xlu0 %2036, %v2031
        %v2038 = vpop.permute.xlu0 %2037
        %v2040 = vsub.f32 %v2025, %v2038
        %v2041 = vmul.f32 %v2040, 1.442695
        %v2042 = vpow.pop %v2041
        %s2043 = scalar_lea.vmem [#allocation3], 24
        %v2044 = vld [vmem:[%s2043] sm:$0xff]
        %v2045 = vmul.f32 %v2034, %v2044
        %v2046 = vsel %vm724, %v2042, 0.0
        %2047 = vadd.xlane.f32.xlu0 %v2046
        %v2048 = vpop.xlane.xlu0 %2047
        %v2049 = vadd.f32 %v2045, %v2048
        %2050 = vst.msk [vmem:[%s2043] sm:$0xff] %vm801, %v2049
        %s2051 = scalar_lea.vmem [#allocation4], 24
        %v2052 = vld [vmem:[%s2051] sm:$0xff]
        %2054 = vset.pattern.permute.xlu0 0
        %2055 = vperm.xlu0 %2054, %v2034
        %v2056 = vpop.permute.xlu0 %2055
        %v2058 = vmul.f32 %v2056, %v2052
        %v2059 = vpack.c.bf16 %v2042, %v2042
        %v2069 = vunpack.c.l.s4 1983009808
        %v2070 = vunpack.c.0.s8 %v2069
        %v2071 = vlaneseq
        %v2072 = vshrl.u32 %v2071, 7
        %v2073 = vsub.s32 %v2070, %v2072
        %v2074 = vrot.slane %v1796, %v2073
        %v2076 = vunpack.c.l.s4 1983009808
        %v2077 = vunpack.c.0.s8 %v2076
        %v2078 = vlaneseq
        %v2079 = vshrl.u32 %v2078, 7
        %v2080 = vsub.s32 %v2077, %v2079
        %v2081 = vrot.slane %v1797, %v2080
        %v2083 = vunpack.c.l.s4 1983009808
        %v2084 = vunpack.c.0.s8 %v2083
        %v2085 = vlaneseq
        %v2086 = vshrl.u32 %v2085, 7
        %v2087 = vsub.s32 %v2084, %v2086
        %v2088 = vrot.slane %v1798, %v2087
        %v2090 = vunpack.c.l.s4 1983009808
        %v2091 = vunpack.c.0.s8 %v2090
        %v2092 = vlaneseq
        %v2093 = vshrl.u32 %v2092, 7
        %v2094 = vsub.s32 %v2091, %v2093
        %v2095 = vrot.slane %v1799, %v2094
        %v2097 = vunpack.c.l.s4 1983009808
        %v2098 = vunpack.c.0.s8 %v2097
        %v2099 = vlaneseq
        %v2100 = vshrl.u32 %v2099, 7
        %v2101 = vsub.s32 %v2098, %v2100
        %v2102 = vrot.slane %v1800, %v2101
        %v2104 = vunpack.c.l.s4 1983009808
        %v2105 = vunpack.c.0.s8 %v2104
        %v2106 = vlaneseq
        %v2107 = vshrl.u32 %v2106, 7
        %v2108 = vsub.s32 %v2105, %v2107
        %v2109 = vrot.slane %v1801, %v2108
        %v2111 = vunpack.c.l.s4 1983009808
        %v2112 = vunpack.c.0.s8 %v2111
        %v2113 = vlaneseq
        %v2114 = vshrl.u32 %v2113, 7
        %v2115 = vsub.s32 %v2112, %v2114
        %v2116 = vrot.slane %v1802, %v2115
        %v2118 = vunpack.c.l.s4 1983009808
        %v2119 = vunpack.c.0.s8 %v2118
        %v2120 = vlaneseq
        %v2121 = vshrl.u32 %v2120, 7
        %v2122 = vsub.s32 %v2119, %v2121
        %v2123 = vrot.slane %v1803, %v2122
        %v2124 = vunpack.c.l.b16 %v2074
        %v2125 = vunpack.c.l.b16 %v2081
        %v2126 = vunpack.c.l.b16 %v2088
        %v2127 = vunpack.c.l.b16 %v2095
        %v2128 = vunpack.c.l.b16 %v2102
        %v2129 = vunpack.c.l.b16 %v2109
        %v2130 = vunpack.c.l.b16 %v2116
        %v2131 = vunpack.c.l.b16 %v2123
        %v2132 = vrot.slane %v2124, 3
        %v2133 = vrot.slane %v2125, 2
        %v2134 = vsel %vm616, %v2133, %v2132
        %v2135 = vrot.slane %v2126, 1
        %v2136 = vsel %vm619, %v2135, %v2134
        %v2137 = vsel %vm622, %v2127, %v2136
        %v2138 = vrot.slane %v2128, 7
        %v2139 = vsel %vm625, %v2138, %v2137
        %v2140 = vrot.slane %v2129, 6
        %v2141 = vsel %vm628, %v2140, %v2139
        %v2142 = vrot.slane %v2130, 5
        %v2143 = vsel %vm631, %v2142, %v2141
        %v2144 = vrot.slane %v2131, 4
        %v2145 = vsel %vm634, %v2144, %v2143
        %v2146 = vpack.c.b16 %v2145, %v2145
        %v2148 = vsel %vm724, %v2059, 0
        %v2151 = vsel %vm901, %v2146, 0
        %2153 = vmatprep.subr.bf16.mxu0 0
        %2154 = vmatpush1.bf16.msra.mxu0 %v2151
        %2155 = vmatprep.subr.bf16.mxu0 0
        %2156 = vmatpush1.bf16.msra.mxu0 0
        %2157 = vmatprep.subr.bf16.mxu0 0
        %2158 = vmatpush1.bf16.msra.mxu0 0
        %2159 = vmatprep.subr.bf16.mxu0 0
        %2160 = vmatpush1.bf16.msra.mxu0 0
        %2161 = vmatprep.subr.bf16.mxu0 0
        %2162 = vmatpush1.bf16.msra.mxu0 0
        %2163 = vmatprep.subr.bf16.mxu0 0
        %2164 = vmatpush1.bf16.msra.mxu0 0
        %2165 = vmatprep.subr.bf16.mxu0 0
        %2166 = vmatpush1.bf16.msra.mxu0 0
        %2167 = vmatprep.subr.bf16.mxu0 0
        %2168 = vmatpush1.bf16.msra.mxu0 0
        %2169 = vmatprep.subr.bf16.mxu0 0
        %2170 = vmatpush1.bf16.msra.mxu0 0
        %2171 = vmatprep.subr.bf16.mxu0 0
        %2172 = vmatpush1.bf16.msra.mxu0 0
        %2173 = vmatprep.subr.bf16.mxu0 0
        %2174 = vmatpush1.bf16.msra.mxu0 0
        %2175 = vmatprep.subr.bf16.mxu0 0
        %2176 = vmatpush1.bf16.msra.mxu0 0
        %2177 = vmatprep.subr.bf16.mxu0 0
        %2178 = vmatpush1.bf16.msra.mxu0 0
        %2179 = vmatprep.subr.bf16.mxu0 0
        %2180 = vmatpush1.bf16.msra.mxu0 0
        %2181 = vmatprep.subr.bf16.mxu0 0
        %2182 = vmatpush1.bf16.msra.mxu0 0
        %2183 = vmatprep.subr.bf16.mxu0 0
        %2184 = vmatpush1.bf16.msra.mxu0 0
        %2185 = vmatprep.mubr.bf16.mxu0 0
        %2186 = vmatmul.mubr.bf16.gmra.mrb[0].mxu0 %v2148
        %v2187 = vpop.f32.mrb[0].mxu0
        %v2188 = vadd.f32 0.0, %v2187
        %v2189 = vpop.f32.mrb[0].mxu0
        %v2190 = vpop.f32.mrb[0].mxu0
        %v2191 = vpop.f32.mrb[0].mxu0
        %2192 = vdwg.mxu0
        %v2193 = vadd.f32 %v2058, %v2188
        %2194 = vst.msk [vmem:[%s2051] sm:$0xff] %vm724, %v2193
        %2195 = vst.msk [vmem:[%s2026] sm:$0xff] %vm801, %v2031
        // Predicated region
        $region164: #{bert_forward.14} parent=146 // pred_check
          %p2196 = pneg %p498
        $region165: #{bert_forward.14} parent=146 // pred_check_branch
          %2198 = sbr.rel (%p2196) target = $region167
        $region166: #{bert_forward.14} parent=146 // pred_region
          %v2199 = vld [vmem:[#allocation4] sm:$0xff]
          %v2200 = vld [vmem:[#allocation3] sm:$0xff]
          %v2201 = vrcp.pop %v2200
          %2203 = vset.pattern.permute.xlu0 0
          %2204 = vperm.xlu0 %2203, %v2201
          %v2205 = vpop.permute.xlu0 %2204
          %v2207 = vmul.f32 %v2199, %v2205
          %v2208 = vpack.c.bf16 %v2207, %v2207
          %vm2209 = vcmask 60416
          %2210 = vst.msk [vmem:[%s496] sm:$0xf] %vm2209, %v2208
          %v2211 = vld [vmem:[%s1219] sm:$0xff]
          %v2212 = vld [vmem:[%s1211] sm:$0xff]
          %v2213 = vrcp.pop %v2212
          %2215 = vset.pattern.permute.xlu0 0
          %2216 = vperm.xlu0 %2215, %v2213
          %v2217 = vpop.permute.xlu0 %2216
          %v2219 = vmul.f32 %v2211, %v2217
          %v2220 = vpack.c.bf16 %v2219, %v2219
          %v2222 = vunpack.c.l.b16 %v2220
          %v2223 = vpack.c.b16 %v2222, %v2222
          %2224 = vrot.lane.b32.xlu0 %v2223, 8
          %v2225 = vpop.permute.xlu0 %2224
          %vm2227 = vcmask 126016
          %2228 = vst.msk [vmem:[%s496] sm:$0xf] %vm2227, %v2225
          %v2229 = vld [vmem:[%s1635] sm:$0xff]
          %v2230 = vld [vmem:[%s1627] sm:$0xff]
          %v2231 = vrcp.pop %v2230
          %2233 = vset.pattern.permute.xlu0 0
          %2234 = vperm.xlu0 %2233, %v2231
          %v2235 = vpop.permute.xlu0 %2234
          %v2237 = vmul.f32 %v2229, %v2235
          %v2238 = vpack.c.bf16 %v2237, %v2237
          %v2240 = vunpack.c.l.b16 %v2238
          %v2241 = vpack.c.b16 %v2240, %v2240
          %2242 = vrot.lane.b32.xlu0 %v2241, 16
          %v2243 = vpop.permute.xlu0 %2242
          %vm2245 = vcmask 191616
          %2246 = vst.msk [vmem:[%s496] sm:$0xf] %vm2245, %v2243
          %v2247 = vld [vmem:[%s2051] sm:$0xff]
          %v2248 = vld [vmem:[%s2043] sm:$0xff]
          %v2249 = vrcp.pop %v2248
          %2251 = vset.pattern.permute.xlu0 0
          %2252 = vperm.xlu0 %2251, %v2249
          %v2253 = vpop.permute.xlu0 %2252
          %v2255 = vmul.f32 %v2247, %v2253
          %v2256 = vpack.c.bf16 %v2255, %v2255
          %v2258 = vunpack.c.l.b16 %v2256
          %v2259 = vpack.c.b16 %v2258, %v2258
          %2260 = vrot.lane.b32.xlu0 %v2259, 24
          %v2261 = vpop.permute.xlu0 %2260
          %vm2263 = vcmask 257216
          %2264 = vst.msk [vmem:[%s496] sm:$0xf] %vm2263, %v2261
        $region167: #{bert_forward.14} parent=146 // pred_fallthru
          _
        %p2265 = scmp.lt.s32.totalorder %s19, 1
        %s2266 = scalar_select %p2265, %s19, 1
        %s2267 = smul.addr %s2266, 4
        %s2268 = scalar_lea.vmem %s4, %s2267
        // Predicated region
        $region168: #{bert_forward.14} parent=146 // pred_check
          %p2269 = pneg %p155
        $region169: #{bert_forward.14} parent=146 // pred_check_branch
          %2271 = sbr.rel (%p2269) target = $region171
        $region170: #{bert_forward.14} parent=146 // pred_region
          _
        $region171: #{bert_forward.14} parent=146 // pred_fallthru
          _
      $region147: #{bert_forward.14} parent=5 // pred_fallthru
        _
      %p2272 = scmp.le.s32.totalorder 2, %s10
      // Predicated region
      $region172: #{bert_forward.14} parent=5 // pred_check
        %p2273 = pneg %p2272
      $region173: #{bert_forward.14} parent=5 // pred_check_branch
        %2275 = sbr.rel (%p2273) target = $region175
      $region174: #{bert_forward.14} parent=5 // pred_region
        %s2276 = ssub.s32 %s10, 2
        // Predicated region
        $region176: #{bert_forward.14} parent=174 // pred_check
          %p2277 = pneg %p161
        $region177: #{bert_forward.14} parent=174 // pred_check_branch
          %2279 = sbr.rel (%p2277) target = $region179
        $region178: #{bert_forward.14} parent=174 // pred_region
          %p2280 = scmp.lt.s32.totalorder %s21, 1
          %s2281 = scalar_select %p2280, %s21, 1
          %s2282 = smul.addr %s2281, 4
          %s2283 = scalar_lea.vmem %s4, %s2282
        $region179: #{bert_forward.14} parent=174 // pred_fallthru
          _
      $region175: #{bert_forward.14} parent=5 // pred_fallthru
        _
    $region6: #{bert_forward.14} parent=1 // loop_footer
      %s14 = sadd.s32 1, %s10
    $region7: #{bert_forward.14} parent=1 // loop_footer_branch
      %9 = sbr.rel target = $region3
    $region8: #{bert_forward.14} parent=1 // loop_exit
      _

</llo_original>
